<compile_context>
chip_gen: v7x
topology: tpu7x:2x2x1
jax: 0.10.0
libtpu: 0.0.40
codegen_flags: <defaults>
</compile_context>

<pallas_src>
from functools import partial

import jax
import jax.numpy as jnp
from jax.experimental import pallas as pl
from jax.experimental.pallas import tpu as pltpu


def _round_up(v, m):
    return ((v + m - 1) // m) * m


def _recip(den, precision):
    """Reciprocal of `den` at the requested precision.

    "div"    : exact f32 division (multi-op VALU/EUP sequence, slowest)
    "newton" : EUP approximate reciprocal + one Newton-Raphson step (~1e-6 rel err)
    "approx" : raw EUP approximate reciprocal (fastest, loosest)
    """
    if precision == "div":
        return 1.0 / den
    r = pl.reciprocal(den, approx=True)
    if precision == "newton":
        r = r * (2.0 - den * r)          # one NR refinement: err -> err^2
    return r


def _self_term(x, b, k, c):
    return b + x * (1.0 - x * (1.0 / k)) * (x * (1.0 / c) - 1.0)


def _mutual_kernel_3d(xi_ref, xjT_ref, a_ref, f_ref, acc_ref, deni_ref,
                      *, b, k, c, d, e, h, precision):
    """D >= 8 path: (TI outer, D sublane, TJ lane) layout, no per-step relayouts."""
    j = pl.program_id(1)

    @pl.when(j == 0)
    def _():
        acc_ref[...] = jnp.zeros_like(acc_ref)
        deni_ref[...] = d + e * xi_ref[...]            # j-invariant, hoisted (TI, D, 1)

    x_jT = xjT_ref[...]                                # (D, TJ)  partner features, lane-dense
    A = a_ref[...].astype(jnp.float32)                 # (TI, 1, TJ) adjacency block

    den = deni_ref[...] + (h * x_jT)[None, :, :]       # (TI, D, TJ) via lane/sublane broadcasts
    r = _recip(den, precision)                         # EUP reciprocal (+ optional Newton)
    t = x_jT[None, :, :] * r                           # x_i factored out of the reduction
    w = A * t                                          # sublane broadcast of A over D
    acc_ref[...] += jnp.sum(w, axis=-1, keepdims=True)  # lane reduce -> (TI, D, 1)

    @pl.when(j == pl.num_programs(1) - 1)
    def _():
        x_i = xi_ref[...]                              # (TI, D, 1)
        f_ref[...] = (_self_term(x_i, b, k, c) + x_i * acc_ref[...]).astype(f_ref.dtype)


def _mutual_kernel_small_d(xi_ref, xjT_ref, a_ref, f_ref, acc_ref, deni_ref,
                           *, b, k, c, d, e, h, precision, D):
    """D < 8 path: 2-D (TI sublane, TJ lane) tiles, short unrolled loop over features."""
    j = pl.program_id(1)

    @pl.when(j == 0)
    def _():
        acc_ref[...] = jnp.zeros_like(acc_ref)
        deni_ref[...] = d + e * xi_ref[...]            # (TI, D), j-invariant

    A = a_ref[...].astype(jnp.float32)                 # (TI, TJ) native layout, no relayout
    x_jT = xjT_ref[...]                                # (D, TJ)
    den_i = deni_ref[...]                              # (TI, D)

    for dd in range(D):                                # static unroll, D < 8
        xj = x_jT[dd:dd + 1, :]                        # (1, TJ)  -> sublane broadcast
        den = den_i[:, dd:dd + 1] + h * xj             # (TI, 1)+(1, TJ) -> (TI, TJ)
        t = xj * _recip(den, precision)                # x_i factored out
        red = jnp.sum(A * t, axis=-1, keepdims=True)   # (TI, 1)
        acc_ref[:, dd:dd + 1] += red

    @pl.when(j == pl.num_programs(1) - 1)
    def _():
        x_i = xi_ref[...]                              # (TI, D)
        f_ref[...] = (_self_term(x_i, b, k, c) + x_i * acc_ref[...]).astype(f_ref.dtype)


def mutual_dynamics(A, x, b=0.1, k=5.0, c=1.0, d=1.0, e=0.9, h=0.1, *,
                    tile_i=None, tile_j=None, precision="newton", t=None):
    """dx/dt of the mutualistic dynamics model.  A: (N, N) dense adjacency, x: (N, D) -> (N, D).

    `t` is accepted for API parity with the PyTorch module but unused (autonomous system).
    Like the reference module, self-interaction is governed solely by diag(A) (normally zero);
    the kernel does not mask the diagonal itself.  Passing A as bfloat16 is lossless only for
    0/1 adjacency (weighted adjacency should be passed in f32).
    """
    del t
    N, D = x.shape
    assert A.shape == (N, N), "A must be a dense (N, N) adjacency matrix"
    assert precision in ("newton", "approx", "div")

    out_dtype = x.dtype
    x = x.astype(jnp.float32)

    # ------------------------- tile selection -------------------------
    if tile_i is None:
        n8 = _round_up(N, 8)
        if n8 <= 64:
            tile_i = n8
        else:
            blocks_128 = _round_up(N, 128) // 128
            # Keep the "parallel" i axis balanced across 2 TensorCores for modest N.
            tile_i = 128 if (blocks_128 >= 8 or blocks_128 % 2 == 0) else 64
    else:
        tile_i = max(8, _round_up(int(tile_i), 8))
    tile_i = min(tile_i, _round_up(N, 8))

    if tile_j is None:
        # D-aware: ~6 live (tile_i, D, tile_j)-sized f32 buffers (pairwise temporaries plus
        # the double-buffered A block) must fit well under the scoped VMEM limit.
        budget = 24 * 1024 * 1024
        tj = budget // (tile_i * max(D, 8) * 4 * 6)
        tile_j = max(128, min(2048, (tj // 128) * 128))
    else:
        tile_j = max(128, _round_up(int(tile_j), 128))
    tile_j = min(tile_j, _round_up(N, 128))

    n_i = _round_up(N, tile_i)
    n_j = _round_up(N, tile_j)

    # ------------------------- padding -------------------------
    # A padded with zeros (padded partners contribute nothing); x padded with ones so the
    # padded denominators stay well away from zero.
    x_rows = jnp.pad(x, ((0, n_i - N), (0, 0)), constant_values=1.0)
    x_colsT = jnp.pad(x.T, ((0, 0), (0, n_j - N)), constant_values=1.0)
    a_pad = jnp.pad(A, ((0, n_i - N), (0, n_j - N)))

    grid = (n_i // tile_i, n_j // tile_j)
    params = dict(b=float(b), k=float(k), c=float(c), d=float(d), e=float(e), h=float(h),
                  precision=precision)

    if D < 8:
        # Small-D specialization: 2-D tiles, unrolled feature loop, A in native layout.
        kern = partial(_mutual_kernel_small_d, D=D, **params)
        in_specs = [
            pl.BlockSpec((tile_i, D), lambda i, j: (i, 0)),          # x rows
            pl.BlockSpec((D, tile_j), lambda i, j: (0, j)),          # x^T partner columns
            pl.BlockSpec((tile_i, tile_j), lambda i, j: (i, j)),     # A block
        ]
        out_specs = pl.BlockSpec((tile_i, D), lambda i, j: (i, 0))
        out_shape = jax.ShapeDtypeStruct((n_i, D), jnp.float32)
        scratch = [pltpu.VMEM((tile_i, D), jnp.float32),             # interaction accumulator
                   pltpu.VMEM((tile_i, D), jnp.float32)]             # hoisted d + e*x_i
        operands = (x_rows, x_colsT, a_pad)
    else:
        # Lane-dense 3-D path: inputs pre-shaped so all broadcasts are cheap (no relayouts).
        kern = partial(_mutual_kernel_3d, **params)
        in_specs = [
            pl.BlockSpec((tile_i, D, 1), lambda i, j: (i, 0, 0)),        # x rows (lane bcast)
            pl.BlockSpec((D, tile_j), lambda i, j: (0, j)),              # x^T partner columns
            pl.BlockSpec((tile_i, 1, tile_j), lambda i, j: (i, 0, j)),   # A block (sublane bcast)
        ]
        out_specs = pl.BlockSpec((tile_i, D, 1), lambda i, j: (i, 0, 0))
        out_shape = jax.ShapeDtypeStruct((n_i, D, 1), jnp.float32)
        scratch = [pltpu.VMEM((tile_i, D, 1), jnp.float32),
                   pltpu.VMEM((tile_i, D, 1), jnp.float32)]
        operands = (x_rows.reshape(n_i, D, 1), x_colsT, a_pad.reshape(n_i, 1, n_j))

    a_bytes = int(a_pad.size) * a_pad.dtype.itemsize
    cost = pl.CostEstimate(
        flops=int(7 * n_i * n_j * D + 10 * n_i * D),
        transcendentals=0 if precision == "div" else int(n_i * n_j * D),
        bytes_accessed=int(a_bytes + 4 * (x_rows.size + x_colsT.size + n_i * D)),
    )

    out = pl.pallas_call(
        kern,
        out_shape=out_shape,
        grid_spec=pltpu.PrefetchScalarGridSpec(
            num_scalar_prefetch=0,
            grid=grid,                                   # i: parallel, j: reduction (last)
            in_specs=in_specs,
            out_specs=out_specs,
            scratch_shapes=scratch,
        ),
        compiler_params=pltpu.CompilerParams(
            dimension_semantics=("parallel", "arbitrary"),
            vmem_limit_bytes=48 * 1024 * 1024,           # safe under v7x's 64 MiB physical
        ),
        cost_estimate=cost,
    )(*operands)

    return out.reshape(n_i, D)[:N].astype(out_dtype)


def _reference(A, x, b=0.1, k=5.0, c=1.0, d=1.0, e=0.9, h=0.1):
    A = A.astype(jnp.float32)
    x = x.astype(jnp.float32)
    f = b + x * (1.0 - x / k) * (x / c - 1.0)
    xi = x[:, None, :]
    xj = x[None, :, :]
    inter = jnp.sum(A[:, :, None] * (xi * xj) / (d + e * xi + h * xj), axis=1)
    return f + inter


if __name__ == "__main__":
    key = jax.random.PRNGKey(0)
    k1, k2, k3 = jax.random.split(key, 3)

    # small but non-trivial: N not a multiple of the tiles (exercises padding)
    N = 300
    # deterministic binary adjacency with zero diagonal (the module's constructor arg A)
    A = (jax.random.uniform(k2, (N, N)) > 0.5).astype(jnp.float32)
    A = A * (1.0 - jnp.eye(N, dtype=jnp.float32))
    A_bf16 = A.astype(jnp.bfloat16)   # 0/1 entries -> lossless, halves adjacency HBM traffic

    # ---- D = 8: lane-dense 3-D path --------------------------------------------------
    D = 8
    x8 = jax.random.uniform(k1, (N, D), dtype=jnp.float32, minval=0.1, maxval=2.0)
    ref8 = _reference(A, x8)

    out = jax.block_until_ready(mutual_dynamics(A_bf16, x8))                 # default: newton
    assert out.shape == (N, D)
    assert jnp.allclose(out, ref8, atol=1e-3, rtol=1e-3), "newton path mismatch (D=8)"

    out = jax.block_until_ready(mutual_dynamics(A_bf16, x8, precision="div"))
    assert jnp.allclose(out, ref8, atol=1e-4, rtol=1e-4), "exact-divide path mismatch (D=8)"

    out = jax.block_until_ready(mutual_dynamics(A_bf16, x8, precision="approx"))
    assert jnp.allclose(out, ref8, atol=1e-2, rtol=1e-2), "approx path mismatch (D=8)"

    # ---- D = 1: canonical MutualDynamics config, small-D specialization ---------------
    x1 = jax.random.uniform(k3, (N, 1), dtype=jnp.float32, minval=0.1, maxval=2.0)
    ref1 = _reference(A, x1)
    out = jax.block_until_ready(mutual_dynamics(A, x1))
    assert out.shape == (N, 1)
    assert jnp.allclose(out, ref1, atol=1e-3, rtol=1e-3), "newton path mismatch (D=1)"

    # ---- D = 3: odd small D, exercises the unrolled feature loop + padding ------------
    x3 = jax.random.uniform(k1, (N, 3), dtype=jnp.float32, minval=0.1, maxval=2.0)
    ref3 = _reference(A, x3)
    out = jax.block_until_ready(mutual_dynamics(A, x3))
    assert out.shape == (N, 3)
    assert jnp.allclose(out, ref3, atol=1e-3, rtol=1e-3), "newton path mismatch (D=3)"

    print("KERNEL_OK")
</pallas_src>

<mosaic_0001>
module attributes {stable_mosaic.version = 11 : i64} {
  func.func @_mutual_kernel_3d(%arg0: i32, %arg1: i32, %arg2: memref<64x8x1xf32, #tpu.memory_space<vmem>>, %arg3: memref<8x384xf32, #tpu.memory_space<vmem>>, %arg4: memref<64x1x384xbf16, #tpu.memory_space<vmem>>, %arg5: memref<64x8x1xf32, #tpu.memory_space<vmem>>, %arg6: memref<64x8x1xf32, #tpu.memory_space<vmem>>, %arg7: memref<64x8x1xf32, #tpu.memory_space<vmem>>) attributes {dimension_semantics = [#tpu.dimension_semantics<parallel>, #tpu.dimension_semantics<arbitrary>], iteration_bounds = array<i64: 5, 1>, scalar_prefetch = 0 : i64, scratch_operands = 2 : i64, tpu.core_type = #tpu.core_type<tc>, window_params = [{transform_indices = @transform_0, window_bounds = array<i64: 64, 8, 1>}, {transform_indices = @transform_1, window_bounds = array<i64: 8, 384>}, {transform_indices = @transform_2, window_bounds = array<i64: 64, 1, 384>}, {transform_indices = @transform_3, window_bounds = array<i64: 64, 8, 1>}]} {
    %c0_i32 = arith.constant 0 : i32
    %0 = arith.cmpi eq, %arg1, %c0_i32 : i32
    %1 = arith.extui %0 : i1 to i32
    %c0_i32_0 = arith.constant 0 : i32
    %2 = arith.cmpi ne, %1, %c0_i32_0 : i32
    scf.if %2 {
      %cst_18 = arith.constant 0.000000e+00 : f32
      %31 = vector.broadcast %cst_18 : f32 to vector<64x8x1xf32>
      %c0_19 = arith.constant 0 : index
      %c0_20 = arith.constant 0 : index
      %c0_21 = arith.constant 0 : index
      %32 = vector.load %arg6[%c0_19, %c0_20, %c0_21] : memref<64x8x1xf32, #tpu.memory_space<vmem>>, vector<64x8x1xf32>
      tpu.vector_store %arg6[%c0_19, %c0_20, %c0_21], %31 {strides = array<i32>} : memref<64x8x1xf32, #tpu.memory_space<vmem>>, vector<64x8x1xf32>,
      %c0_22 = arith.constant 0 : index
      %c0_23 = arith.constant 0 : index
      %c0_24 = arith.constant 0 : index
      %33 = vector.load %arg2[%c0_22, %c0_23, %c0_24] : memref<64x8x1xf32, #tpu.memory_space<vmem>>, vector<64x8x1xf32>
      %cst_25 = arith.constant 0.899999976 : f32
      %34 = vector.broadcast %cst_25 : f32 to vector<64x8x1xf32>
      %35 = arith.mulf %34, %33 : vector<64x8x1xf32>
      %cst_26 = arith.constant 1.000000e+00 : f32
      %36 = vector.broadcast %cst_26 : f32 to vector<64x8x1xf32>
      %37 = arith.addf %36, %35 : vector<64x8x1xf32>
      %c0_27 = arith.constant 0 : index
      %c0_28 = arith.constant 0 : index
      %c0_29 = arith.constant 0 : index
      %38 = vector.load %arg7[%c0_27, %c0_28, %c0_29] : memref<64x8x1xf32, #tpu.memory_space<vmem>>, vector<64x8x1xf32>
      tpu.vector_store %arg7[%c0_27, %c0_28, %c0_29], %37 {strides = array<i32>} : memref<64x8x1xf32, #tpu.memory_space<vmem>>, vector<64x8x1xf32>,
    } else {
    }
    %c0 = arith.constant 0 : index
    %c0_1 = arith.constant 0 : index
    %3 = vector.load %arg3[%c0, %c0_1] : memref<8x384xf32, #tpu.memory_space<vmem>>, vector<8x384xf32>
    %c0_2 = arith.constant 0 : index
    %c0_3 = arith.constant 0 : index
    %c0_4 = arith.constant 0 : index
    %4 = vector.load %arg4[%c0_2, %c0_3, %c0_4] : memref<64x1x384xbf16, #tpu.memory_space<vmem>>, vector<64x1x384xbf16>
    %5 = arith.extf %4 : vector<64x1x384xbf16> to vector<64x1x384xf32>
    %c0_5 = arith.constant 0 : index
    %c0_6 = arith.constant 0 : index
    %c0_7 = arith.constant 0 : index
    %6 = vector.load %arg7[%c0_5, %c0_6, %c0_7] : memref<64x8x1xf32, #tpu.memory_space<vmem>>, vector<64x8x1xf32>
    %cst = arith.constant 1.000000e-01 : f32
    %7 = vector.broadcast %cst : f32 to vector<8x384xf32>
    %8 = arith.mulf %7, %3 : vector<8x384xf32>
    %9 = vector.shape_cast %8 : vector<8x384xf32> to vector<1x8x384xf32>
    %10 = vector.broadcast %6 : vector<64x8x1xf32> to vector<64x8x384xf32>
    %11 = vector.broadcast %9 : vector<1x8x384xf32> to vector<64x8x384xf32>
    %12 = arith.addf %10, %11 : vector<64x8x384xf32>
    %13 = tpu.reciprocal %12 {approx = true} : vector<64x8x384xf32> -> vector<64x8x384xf32>
    %14 = arith.mulf %12, %13 : vector<64x8x384xf32>
    %cst_8 = arith.constant 2.000000e+00 : f32
    %15 = vector.broadcast %cst_8 : f32 to vector<64x8x384xf32>
    %16 = arith.subf %15, %14 : vector<64x8x384xf32>
    %17 = arith.mulf %13, %16 : vector<64x8x384xf32>
    %18 = vector.shape_cast %3 : vector<8x384xf32> to vector<1x8x384xf32>
    %19 = vector.broadcast %18 : vector<1x8x384xf32> to vector<64x8x384xf32>
    %20 = arith.mulf %19, %17 : vector<64x8x384xf32>
    %21 = vector.broadcast %5 : vector<64x1x384xf32> to vector<64x8x384xf32>
    %22 = arith.mulf %21, %20 : vector<64x8x384xf32>
    %c0_9 = arith.constant 0 : index
    %c0_10 = arith.constant 0 : index
    %c0_11 = arith.constant 0 : index
    %23 = vector.load %arg6[%c0_9, %c0_10, %c0_11] : memref<64x8x1xf32, #tpu.memory_space<vmem>>, vector<64x8x1xf32>
    %cst_12 = arith.constant dense<0.000000e+00> : vector<64x8xf32>
    %24 = vector.multi_reduction <add>, %22, %cst_12 [2] : vector<64x8x384xf32> to vector<64x8xf32>
    %25 = vector.shape_cast %24 : vector<64x8xf32> to vector<64x8x1xf32>
    %26 = arith.addf %23, %25 : vector<64x8x1xf32>
    %c0_13 = arith.constant 0 : index
    %c0_14 = arith.constant 0 : index
    %c0_15 = arith.constant 0 : index
    %27 = vector.load %arg6[%c0_13, %c0_14, %c0_15] : memref<64x8x1xf32, #tpu.memory_space<vmem>>, vector<64x8x1xf32>
    tpu.vector_store %arg6[%c0_13, %c0_14, %c0_15], %26 {strides = array<i32>} : memref<64x8x1xf32, #tpu.memory_space<vmem>>, vector<64x8x1xf32>,
    %c0_i32_16 = arith.constant 0 : i32
    %28 = arith.cmpi eq, %arg1, %c0_i32_16 : i32
    %29 = arith.extui %28 : i1 to i32
    %c0_i32_17 = arith.constant 0 : i32
    %30 = arith.cmpi ne, %29, %c0_i32_17 : i32
    scf.if %30 {
      %c0_18 = arith.constant 0 : index
      %c0_19 = arith.constant 0 : index
      %c0_20 = arith.constant 0 : index
      %31 = vector.load %arg2[%c0_18, %c0_19, %c0_20] : memref<64x8x1xf32, #tpu.memory_space<vmem>>, vector<64x8x1xf32>
      %cst_21 = arith.constant 2.000000e-01 : f32
      %32 = vector.broadcast %cst_21 : f32 to vector<64x8x1xf32>
      %33 = arith.mulf %31, %32 : vector<64x8x1xf32>
      %cst_22 = arith.constant 1.000000e+00 : f32
      %34 = vector.broadcast %cst_22 : f32 to vector<64x8x1xf32>
      %35 = arith.subf %34, %33 : vector<64x8x1xf32>
      %36 = arith.mulf %31, %35 : vector<64x8x1xf32>
      %cst_23 = arith.constant 1.000000e+00 : f32
      %37 = vector.broadcast %cst_23 : f32 to vector<64x8x1xf32>
      %38 = arith.mulf %31, %37 : vector<64x8x1xf32>
      %cst_24 = arith.constant 1.000000e+00 : f32
      %39 = vector.broadcast %cst_24 : f32 to vector<64x8x1xf32>
      %40 = arith.subf %38, %39 : vector<64x8x1xf32>
      %41 = arith.mulf %36, %40 : vector<64x8x1xf32>
      %cst_25 = arith.constant 1.000000e-01 : f32
      %42 = vector.broadcast %cst_25 : f32 to vector<64x8x1xf32>
      %43 = arith.addf %42, %41 : vector<64x8x1xf32>
      %c0_26 = arith.constant 0 : index
      %c0_27 = arith.constant 0 : index
      %c0_28 = arith.constant 0 : index
      %44 = vector.load %arg6[%c0_26, %c0_27, %c0_28] : memref<64x8x1xf32, #tpu.memory_space<vmem>>, vector<64x8x1xf32>
      %45 = arith.mulf %31, %44 : vector<64x8x1xf32>
      %46 = arith.addf %43, %45 : vector<64x8x1xf32>
      %c0_29 = arith.constant 0 : index
      %c0_30 = arith.constant 0 : index
      %c0_31 = arith.constant 0 : index
      %47 = vector.load %arg5[%c0_29, %c0_30, %c0_31] : memref<64x8x1xf32, #tpu.memory_space<vmem>>, vector<64x8x1xf32>
      tpu.vector_store %arg5[%c0_29, %c0_30, %c0_31], %46 {strides = array<i32>} : memref<64x8x1xf32, #tpu.memory_space<vmem>>, vector<64x8x1xf32>,
    } else {
    }
    return
  }
  func.func @transform_0(%arg0: i32, %arg1: i32) -> (i32, i32, i32) {
    %c0_i32 = arith.constant 0 : i32
    %c0_i32_0 = arith.constant 0 : i32
    %c0_i32_1 = arith.constant 0 : i32
    return %arg0, %c0_i32, %c0_i32_0 : i32, i32, i32
  }
  func.func @transform_1(%arg0: i32, %arg1: i32) -> (i32, i32) {
    %c0_i32 = arith.constant 0 : i32
    %c0_i32_0 = arith.constant 0 : i32
    return %c0_i32, %arg1 : i32, i32
  }
  func.func @transform_2(%arg0: i32, %arg1: i32) -> (i32, i32, i32) {
    %c0_i32 = arith.constant 0 : i32
    %c0_i32_0 = arith.constant 0 : i32
    return %arg0, %c0_i32, %arg1 : i32, i32, i32
  }
  func.func @transform_3(%arg0: i32, %arg1: i32) -> (i32, i32, i32) {
    %c0_i32 = arith.constant 0 : i32
    %c0_i32_0 = arith.constant 0 : i32
    %c0_i32_1 = arith.constant 0 : i32
    return %arg0, %c0_i32, %c0_i32_0 : i32, i32, i32
  }
}

</mosaic_0001>

<llo_original>
// kernel: tpu_custom_call.1
$region0: #{tpu_custom_call.1}
  #allocation0 [shape = 'u32[]', space=smem, size = 0x4, offset = 0x4, fixed_abs, tag = 'smem constant byte address 0x4 - core index']
  #allocation1 [shape = 'u32[144,128]{1,0:T(1,128)}', space=vmem, size = 0x12000, scoped, tag = 'internal scratch']
  #allocation2 [shape = 'f32[64,8,1]{2,1,0:T(8,128)}', space=vmem, size = 0x40000, scoped, tag = 'scratch operand']
  #allocation3 [shape = 'f32[64,8,1]{2,1,0:T(8,128)}', space=vmem, size = 0x40000, scoped, tag = 'scratch operand']
  %s0 = inlined_call_operand.vmem [shape: f32[320,8,1], index: 0, kind: input, shape index: {}]
  %s1 = inlined_call_operand.vmem [shape: f32[8,384], index: 1, kind: input, shape index: {}]
  %s2 = inlined_call_operand.vmem [shape: bf16[320,1,384], index: 2, kind: input, shape index: {}]
  %s3 = inlined_call_operand.vmem [shape: f32[320,8,1], index: 3, kind: output, shape index: {}]
  %s4 = sld [smem:[#allocation0]]
  $region53: #{tpu_custom_call.1} parent=0
    _
  %s6 = ssub.s32 1, %s4
  %s7 = scalar_select 0, %s6, %s4
  loop: start=0, step=1, limit=7
  $region2: #{tpu_custom_call.1} parent=0 // loop_pre_header
    _
  $region3: #{tpu_custom_call.1} parent=0 // loop_header
    %s9 = sphi 0, %s13
    %p10 = scmp.ge.s32.totalorder %s9, 7
    %s16 = sphi 0, %s28
    %s17 = sphi 0, %s24
    %s18 = sphi 0, %s16
    %s19 = sphi 0, %s17
    %s20 = sphi 0, %s18
    %s21 = sphi 0, %s19
    %s31 = sphi 0, %s33
    %s34 = sphi 0, %s31
    %s35 = sphi 0, %s34
    %s51 = sphi 0, %s35
    %s57 = sphi 0, %s59
    %s60 = sphi 0, %s57
    %s61 = sphi 0, %s60
    %s77 = sphi 0, %s61
    %s85 = sphi 0, %s87
    %s88 = sphi 0, %s85
    %s89 = sphi 0, %s88
    %s105 = sphi 0, %s89
    %s111 = sphi 0, %s113
    %s114 = sphi 0, %s111
    %s115 = sphi 0, %s114
    %s131 = sphi 0, %s115
  $region4: #{tpu_custom_call.1} parent=0 // loop_header_branch
    %12 = sbr.rel (%p10) target = $region8
  $region5: #{tpu_custom_call.1} parent=0 // loop_body
    %s14 = ssub.s32 %s9, 1
    %s15 = ssub.s32 %s9, 2
    %s22 = sadd.s32 1, %s17
    %p23 = scmp.ge.s32.totalorder %s22, 1
    %s24 = scalar_select %p23, 0, %s22
    %s25 = sadd.s32 1, %s16
    %s26 = scalar_select %p23, %s25, %s16
    %p27 = scmp.ge.s32.totalorder %s26, 5
    %s28 = scalar_select %p27, 0, %s26
    %s29 = ssub.s32 %s16, %s28
    %p30 = scmp.eq.s32.totalorder %s29, 0
    %s32 = sadd.s32 %s31, 1
    %s33 = scalar_select %p30, %s31, %s32
    %p36 = pneg %p30
    %p37 = scmp.eq.s32.totalorder %s9, 4
    %p38 = por %p36, %p37
    %p39 = scmp.ne.s32.totalorder %s31, %s34
    %p40 = scmp.eq.s32.totalorder %s9, 0
    %p41 = por %p39, %p40
    %p42 = scmp.ne.s32.totalorder %s31, %s34
    %p43 = scmp.eq.s32.totalorder %s14, 4
    %p44 = por %p42, %p43
    %p45 = scmp.ne.s32.totalorder %s34, %s35
    %p46 = scmp.eq.s32.totalorder %s14, 0
    %p47 = por %p45, %p46
    %p48 = scmp.ne.s32.totalorder %s34, %s35
    %p49 = scmp.eq.s32.totalorder %s15, 4
    %p50 = por %p48, %p49
    %p52 = scmp.ne.s32.totalorder %s35, %s51
    %p53 = scmp.eq.s32.totalorder %s15, 0
    %p54 = por %p52, %p53
    %s55 = ssub.s32 %s17, %s24
    %p56 = scmp.eq.s32.totalorder %s55, 0
    %s58 = sadd.s32 %s57, 1
    %s59 = scalar_select %p56, %s57, %s58
    %p62 = pneg %p56
    %p63 = scmp.eq.s32.totalorder %s9, 4
    %p64 = por %p62, %p63
    %p65 = scmp.ne.s32.totalorder %s57, %s60
    %p66 = scmp.eq.s32.totalorder %s9, 0
    %p67 = por %p65, %p66
    %p68 = scmp.ne.s32.totalorder %s57, %s60
    %p69 = scmp.eq.s32.totalorder %s14, 4
    %p70 = por %p68, %p69
    %p71 = scmp.ne.s32.totalorder %s60, %s61
    %p72 = scmp.eq.s32.totalorder %s14, 0
    %p73 = por %p71, %p72
    %p74 = scmp.ne.s32.totalorder %s60, %s61
    %p75 = scmp.eq.s32.totalorder %s15, 4
    %p76 = por %p74, %p75
    %p78 = scmp.ne.s32.totalorder %s61, %s77
    %p79 = scmp.eq.s32.totalorder %s15, 0
    %p80 = por %p78, %p79
    %s81 = ssub.s32 %s16, %s28
    %s82 = ssub.s32 %s17, %s24
    %s83 = sor.u32 %s81, %s82
    %p84 = scmp.eq.s32.totalorder %s83, 0
    %s86 = sadd.s32 %s85, 1
    %s87 = scalar_select %p84, %s85, %s86
    %p90 = pneg %p84
    %p91 = scmp.eq.s32.totalorder %s9, 4
    %p92 = por %p90, %p91
    %p93 = scmp.ne.s32.totalorder %s85, %s88
    %p94 = scmp.eq.s32.totalorder %s9, 0
    %p95 = por %p93, %p94
    %p96 = scmp.ne.s32.totalorder %s85, %s88
    %p97 = scmp.eq.s32.totalorder %s14, 4
    %p98 = por %p96, %p97
    %p99 = scmp.ne.s32.totalorder %s88, %s89
    %p100 = scmp.eq.s32.totalorder %s14, 0
    %p101 = por %p99, %p100
    %p102 = scmp.ne.s32.totalorder %s88, %s89
    %p103 = scmp.eq.s32.totalorder %s15, 4
    %p104 = por %p102, %p103
    %p106 = scmp.ne.s32.totalorder %s89, %s105
    %p107 = scmp.eq.s32.totalorder %s15, 0
    %p108 = por %p106, %p107
    %s109 = ssub.s32 %s16, %s28
    %p110 = scmp.eq.s32.totalorder %s109, 0
    %s112 = sadd.s32 %s111, 1
    %s113 = scalar_select %p110, %s111, %s112
    %p116 = pneg %p110
    %p117 = scmp.eq.s32.totalorder %s9, 4
    %p118 = por %p116, %p117
    %p119 = scmp.ne.s32.totalorder %s111, %s114
    %p120 = scmp.eq.s32.totalorder %s9, 0
    %p121 = por %p119, %p120
    %p122 = scmp.ne.s32.totalorder %s111, %s114
    %p123 = scmp.eq.s32.totalorder %s14, 4
    %p124 = por %p122, %p123
    %p125 = scmp.ne.s32.totalorder %s114, %s115
    %p126 = scmp.eq.s32.totalorder %s14, 0
    %p127 = por %p125, %p126
    %p128 = scmp.ne.s32.totalorder %s114, %s115
    %p129 = scmp.eq.s32.totalorder %s15, 4
    %p130 = por %p128, %p129
    %p132 = scmp.ne.s32.totalorder %s115, %s131
    %p133 = scmp.eq.s32.totalorder %s15, 0
    %p134 = por %p132, %p133
    %p135 = scmp.le.s32.totalorder 1, %s9
    %p136 = scmp.lt.s32.totalorder %s9, 6
    %p137 = pnand %p135, %p136
    %p138 = pneg %p137
    // Predicated region
    $region9: #{tpu_custom_call.1} parent=5 // pred_check
      _
    $region10: #{tpu_custom_call.1} parent=5 // pred_check_branch
      %140 = sbr.rel (%p137) target = $region12
    $region11: #{tpu_custom_call.1} parent=5 // pred_region
      %s141 = ssub.s32 %s9, 1
      // Predicated region
      $region13: #{tpu_custom_call.1} parent=11 // pred_check
        %p142 = pneg %p73
      $region14: #{tpu_custom_call.1} parent=11 // pred_check_branch
        %144 = sbr.rel (%p142) target = $region16
      $region15: #{tpu_custom_call.1} parent=11 // pred_region
        %s145 = smul.u32 3, %s19
        %p146 = scmp.lt.s32.totalorder %s145, 2
        %s147 = scalar_select %p146, %s145, 2
        %s148 = smul.addr %s147, 8
        %s149 = scalar_lea.vmem %s1, %s148
        %s150 = smul.u32 3, %s19
      $region16: #{tpu_custom_call.1} parent=11 // pred_fallthru
        _
    $region12: #{tpu_custom_call.1} parent=5 // pred_fallthru
      _
    %p151 = scmp.lt.s32.totalorder %s9, 5
    // Predicated region
    $region17: #{tpu_custom_call.1} parent=5 // pred_check
      %p152 = pneg %p151
    $region18: #{tpu_custom_call.1} parent=5 // pred_check_branch
      %154 = sbr.rel (%p152) target = $region20
    $region19: #{tpu_custom_call.1} parent=5 // pred_region
      // Predicated region
      $region21: #{tpu_custom_call.1} parent=19 // pred_check
        %p155 = pneg %p41
      $region22: #{tpu_custom_call.1} parent=19 // pred_check_branch
        %157 = sbr.rel (%p155) target = $region24
      $region23: #{tpu_custom_call.1} parent=19 // pred_region
        %s158 = smul.u32 64, %s16
        %p159 = scmp.lt.s32.totalorder %s158, 319
        %s160 = scalar_select %p159, %s158, 319
        %s161 = smul.addr %s160, 8
        %s162 = scalar_lea.vmem %s0, %s161
        %s163 = smul.u32 64, %s16
      $region24: #{tpu_custom_call.1} parent=19 // pred_fallthru
        _
      // Predicated region
      $region25: #{tpu_custom_call.1} parent=19 // pred_check
        %p164 = pneg %p95
      $region26: #{tpu_custom_call.1} parent=19 // pred_check_branch
        %166 = sbr.rel (%p164) target = $region28
      $region27: #{tpu_custom_call.1} parent=19 // pred_region
        %s167 = smul.u32 64, %s16
        %s168 = smul.u32 3, %s17
        %p169 = scmp.lt.s32.totalorder %s167, 319
        %s170 = scalar_select %p169, %s167, 319
        %p171 = scmp.lt.s32.totalorder %s168, 2
        %s172 = scalar_select %p171, %s168, 2
        %s173 = smul.addr %s170, 3
        %s174 = sadd.s32 %s172, %s173
        %s175 = scalar_lea.vmem %s2, %s174
        %s176 = smul.u32 64, %s16
        %s177 = smul.u32 3, %s17
      $region28: #{tpu_custom_call.1} parent=19 // pred_fallthru
        _
    $region20: #{tpu_custom_call.1} parent=5 // pred_fallthru
      _
    %p178 = scmp.le.s32.totalorder 1, %s9
    %p179 = scmp.lt.s32.totalorder %s9, 6
    %p180 = pnand %p178, %p179
    %p181 = pneg %p180
    // Predicated region
    $region29: #{tpu_custom_call.1} parent=5 // pred_check
      _
    $region30: #{tpu_custom_call.1} parent=5 // pred_check_branch
      %183 = sbr.rel (%p180) target = $region32
    $region31: #{tpu_custom_call.1} parent=5 // pred_region
      %s184 = ssub.s32 %s9, 1
      %s185 = smul.u32 64, %s18
      %p186 = scmp.lt.s32.totalorder %s185, 319
      %s187 = scalar_select %p186, %s185, 319
      %s188 = smul.addr %s187, 8
      %s189 = scalar_lea.vmem %s0, %s188
      %p190 = pneg %p47
      %p191 = pneg %p44
      %s192 = smul.u32 3, %s19
      %p193 = scmp.lt.s32.totalorder %s192, 2
      %s194 = scalar_select %p193, %s192, 2
      %s195 = smul.addr %s194, 8
      %s196 = scalar_lea.vmem %s1, %s195
      %p197 = pneg %p73
      %p198 = pneg %p70
      %s199 = smul.u32 64, %s18
      %s200 = smul.u32 3, %s19
      %p201 = scmp.lt.s32.totalorder %s199, 319
      %s202 = scalar_select %p201, %s199, 319
      %p203 = scmp.lt.s32.totalorder %s200, 2
      %s204 = scalar_select %p203, %s200, 2
      %s205 = smul.addr %s202, 3
      %s206 = sadd.s32 %s204, %s205
      %s207 = scalar_lea.vmem %s2, %s206
      %p208 = pneg %p101
      %p209 = pneg %p98
      %p210 = pneg %p127
      %p211 = pneg %p124
      %s212 = smul.u32 64, %s18
      %p213 = scmp.lt.s32.totalorder %s212, 319
      %s214 = scalar_select %p213, %s212, 319
      %s215 = smul.addr %s214, 8
      %s216 = scalar_lea.vmem %s3, %s215
      %s217 = smul.u32 64, %s18
      %p218 = scmp.lt.s32.totalorder %s217, 319
      %s219 = scalar_select %p218, %s217, 319
      %s220 = smul.addr %s219, 8
      %s221 = scalar_lea.vmem %s0, %s220
      %s222 = smul.u32 64, %s18
      %s223 = smul.u32 3, %s19
      %p224 = scmp.lt.s32.totalorder %s223, 2
      %s225 = scalar_select %p224, %s223, 2
      %s226 = smul.addr %s225, 8
      %s227 = scalar_lea.vmem %s1, %s226
      %s228 = smul.u32 3, %s19
      %s229 = smul.u32 64, %s18
      %s230 = smul.u32 3, %s19
      %p231 = scmp.lt.s32.totalorder %s229, 319
      %s232 = scalar_select %p231, %s229, 319
      %p233 = scmp.lt.s32.totalorder %s230, 2
      %s234 = scalar_select %p233, %s230, 2
      %s235 = smul.addr %s232, 3
      %s236 = sadd.s32 %s234, %s235
      %s237 = scalar_lea.vmem %s2, %s236
      %s238 = smul.u32 64, %s18
      %s239 = smul.u32 3, %s19
      %s240 = smul.u32 64, %s18
      %p241 = scmp.lt.s32.totalorder %s240, 319
      %s242 = scalar_select %p241, %s240, 319
      %s243 = smul.addr %s242, 8
      %s244 = scalar_lea.vmem %s3, %s243
      %s245 = smul.u32 64, %s18
      %p246 = scmp.eq.s32.totalorder %s19, 0
      // Predicated region
      $region33: #{tpu_custom_call.1} parent=31 // pred_check
        %p247 = pneg %p246
      $region34: #{tpu_custom_call.1} parent=31 // pred_check_branch
        %249 = sbr.rel (%p247) target = $region36
      $region35: #{tpu_custom_call.1} parent=31 // pred_region
        %vm250 = vcmask 7168
        %251 = vst.msk [vmem:[#allocation2] sm:$0xff] %vm250, 0.0
        %252 = vst.msk [vmem:[#allocation2 + $0x8] sm:$0xff] %vm250, 0.0
        %253 = vst.msk [vmem:[#allocation2 + $0x10] sm:$0xff] %vm250, 0.0
        %254 = vst.msk [vmem:[#allocation2 + $0x18] sm:$0xff] %vm250, 0.0
        %255 = vst.msk [vmem:[#allocation2 + $0x20] sm:$0xff] %vm250, 0.0
        %256 = vst.msk [vmem:[#allocation2 + $0x28] sm:$0xff] %vm250, 0.0
        %257 = vst.msk [vmem:[#allocation2 + $0x30] sm:$0xff] %vm250, 0.0
        %258 = vst.msk [vmem:[#allocation2 + $0x38] sm:$0xff] %vm250, 0.0
        %259 = vst.msk [vmem:[#allocation2 + $0x40] sm:$0xff] %vm250, 0.0
        %260 = vst.msk [vmem:[#allocation2 + $0x48] sm:$0xff] %vm250, 0.0
        %261 = vst.msk [vmem:[#allocation2 + $0x50] sm:$0xff] %vm250, 0.0
        %262 = vst.msk [vmem:[#allocation2 + $0x58] sm:$0xff] %vm250, 0.0
        %263 = vst.msk [vmem:[#allocation2 + $0x60] sm:$0xff] %vm250, 0.0
        %264 = vst.msk [vmem:[#allocation2 + $0x68] sm:$0xff] %vm250, 0.0
        %265 = vst.msk [vmem:[#allocation2 + $0x70] sm:$0xff] %vm250, 0.0
        %266 = vst.msk [vmem:[#allocation2 + $0x78] sm:$0xff] %vm250, 0.0
        %267 = vst.msk [vmem:[#allocation2 + $0x80] sm:$0xff] %vm250, 0.0
        %268 = vst.msk [vmem:[#allocation2 + $0x88] sm:$0xff] %vm250, 0.0
        %269 = vst.msk [vmem:[#allocation2 + $0x90] sm:$0xff] %vm250, 0.0
        %270 = vst.msk [vmem:[#allocation2 + $0x98] sm:$0xff] %vm250, 0.0
        %271 = vst.msk [vmem:[#allocation2 + $0xa0] sm:$0xff] %vm250, 0.0
        %272 = vst.msk [vmem:[#allocation2 + $0xa8] sm:$0xff] %vm250, 0.0
        %273 = vst.msk [vmem:[#allocation2 + $0xb0] sm:$0xff] %vm250, 0.0
        %274 = vst.msk [vmem:[#allocation2 + $0xb8] sm:$0xff] %vm250, 0.0
        %275 = vst.msk [vmem:[#allocation2 + $0xc0] sm:$0xff] %vm250, 0.0
        %276 = vst.msk [vmem:[#allocation2 + $0xc8] sm:$0xff] %vm250, 0.0
        %277 = vst.msk [vmem:[#allocation2 + $0xd0] sm:$0xff] %vm250, 0.0
        %278 = vst.msk [vmem:[#allocation2 + $0xd8] sm:$0xff] %vm250, 0.0
        %279 = vst.msk [vmem:[#allocation2 + $0xe0] sm:$0xff] %vm250, 0.0
        %280 = vst.msk [vmem:[#allocation2 + $0xe8] sm:$0xff] %vm250, 0.0
        %281 = vst.msk [vmem:[#allocation2 + $0xf0] sm:$0xff] %vm250, 0.0
        %282 = vst.msk [vmem:[#allocation2 + $0xf8] sm:$0xff] %vm250, 0.0
        %283 = vst.msk [vmem:[#allocation2 + $0x100] sm:$0xff] %vm250, 0.0
        %284 = vst.msk [vmem:[#allocation2 + $0x108] sm:$0xff] %vm250, 0.0
        %285 = vst.msk [vmem:[#allocation2 + $0x110] sm:$0xff] %vm250, 0.0
        %286 = vst.msk [vmem:[#allocation2 + $0x118] sm:$0xff] %vm250, 0.0
        %287 = vst.msk [vmem:[#allocation2 + $0x120] sm:$0xff] %vm250, 0.0
        %288 = vst.msk [vmem:[#allocation2 + $0x128] sm:$0xff] %vm250, 0.0
        %289 = vst.msk [vmem:[#allocation2 + $0x130] sm:$0xff] %vm250, 0.0
        %290 = vst.msk [vmem:[#allocation2 + $0x138] sm:$0xff] %vm250, 0.0
        %291 = vst.msk [vmem:[#allocation2 + $0x140] sm:$0xff] %vm250, 0.0
        %292 = vst.msk [vmem:[#allocation2 + $0x148] sm:$0xff] %vm250, 0.0
        %293 = vst.msk [vmem:[#allocation2 + $0x150] sm:$0xff] %vm250, 0.0
        %294 = vst.msk [vmem:[#allocation2 + $0x158] sm:$0xff] %vm250, 0.0
        %295 = vst.msk [vmem:[#allocation2 + $0x160] sm:$0xff] %vm250, 0.0
        %296 = vst.msk [vmem:[#allocation2 + $0x168] sm:$0xff] %vm250, 0.0
        %297 = vst.msk [vmem:[#allocation2 + $0x170] sm:$0xff] %vm250, 0.0
        %298 = vst.msk [vmem:[#allocation2 + $0x178] sm:$0xff] %vm250, 0.0
        %299 = vst.msk [vmem:[#allocation2 + $0x180] sm:$0xff] %vm250, 0.0
        %300 = vst.msk [vmem:[#allocation2 + $0x188] sm:$0xff] %vm250, 0.0
        %301 = vst.msk [vmem:[#allocation2 + $0x190] sm:$0xff] %vm250, 0.0
        %302 = vst.msk [vmem:[#allocation2 + $0x198] sm:$0xff] %vm250, 0.0
        %303 = vst.msk [vmem:[#allocation2 + $0x1a0] sm:$0xff] %vm250, 0.0
        %304 = vst.msk [vmem:[#allocation2 + $0x1a8] sm:$0xff] %vm250, 0.0
        %305 = vst.msk [vmem:[#allocation2 + $0x1b0] sm:$0xff] %vm250, 0.0
        %306 = vst.msk [vmem:[#allocation2 + $0x1b8] sm:$0xff] %vm250, 0.0
        %307 = vst.msk [vmem:[#allocation2 + $0x1c0] sm:$0xff] %vm250, 0.0
        %308 = vst.msk [vmem:[#allocation2 + $0x1c8] sm:$0xff] %vm250, 0.0
        %309 = vst.msk [vmem:[#allocation2 + $0x1d0] sm:$0xff] %vm250, 0.0
        %310 = vst.msk [vmem:[#allocation2 + $0x1d8] sm:$0xff] %vm250, 0.0
        %311 = vst.msk [vmem:[#allocation2 + $0x1e0] sm:$0xff] %vm250, 0.0
        %312 = vst.msk [vmem:[#allocation2 + $0x1e8] sm:$0xff] %vm250, 0.0
        %313 = vst.msk [vmem:[#allocation2 + $0x1f0] sm:$0xff] %vm250, 0.0
        %314 = vst.msk [vmem:[#allocation2 + $0x1f8] sm:$0xff] %vm250, 0.0
        %v315 = vld [vmem:[%s221] sm:$0xff]
        %v316 = vld [vmem:[%s221 + $0x8] sm:$0xff]
        %v317 = vld [vmem:[%s221 + $0x10] sm:$0xff]
        %v318 = vld [vmem:[%s221 + $0x18] sm:$0xff]
        %v319 = vld [vmem:[%s221 + $0x20] sm:$0xff]
        %v320 = vld [vmem:[%s221 + $0x28] sm:$0xff]
        %v321 = vld [vmem:[%s221 + $0x30] sm:$0xff]
        %v322 = vld [vmem:[%s221 + $0x38] sm:$0xff]
        %v323 = vld [vmem:[%s221 + $0x40] sm:$0xff]
        %v324 = vld [vmem:[%s221 + $0x48] sm:$0xff]
        %v325 = vld [vmem:[%s221 + $0x50] sm:$0xff]
        %v326 = vld [vmem:[%s221 + $0x58] sm:$0xff]
        %v327 = vld [vmem:[%s221 + $0x60] sm:$0xff]
        %v328 = vld [vmem:[%s221 + $0x68] sm:$0xff]
        %v329 = vld [vmem:[%s221 + $0x70] sm:$0xff]
        %v330 = vld [vmem:[%s221 + $0x78] sm:$0xff]
        %v331 = vld [vmem:[%s221 + $0x80] sm:$0xff]
        %v332 = vld [vmem:[%s221 + $0x88] sm:$0xff]
        %v333 = vld [vmem:[%s221 + $0x90] sm:$0xff]
        %v334 = vld [vmem:[%s221 + $0x98] sm:$0xff]
        %v335 = vld [vmem:[%s221 + $0xa0] sm:$0xff]
        %v336 = vld [vmem:[%s221 + $0xa8] sm:$0xff]
        %v337 = vld [vmem:[%s221 + $0xb0] sm:$0xff]
        %v338 = vld [vmem:[%s221 + $0xb8] sm:$0xff]
        %v339 = vld [vmem:[%s221 + $0xc0] sm:$0xff]
        %v340 = vld [vmem:[%s221 + $0xc8] sm:$0xff]
        %v341 = vld [vmem:[%s221 + $0xd0] sm:$0xff]
        %v342 = vld [vmem:[%s221 + $0xd8] sm:$0xff]
        %v343 = vld [vmem:[%s221 + $0xe0] sm:$0xff]
        %v344 = vld [vmem:[%s221 + $0xe8] sm:$0xff]
        %v345 = vld [vmem:[%s221 + $0xf0] sm:$0xff]
        %v346 = vld [vmem:[%s221 + $0xf8] sm:$0xff]
        %v347 = vld [vmem:[%s221 + $0x100] sm:$0xff]
        %v348 = vld [vmem:[%s221 + $0x108] sm:$0xff]
        %v349 = vld [vmem:[%s221 + $0x110] sm:$0xff]
        %v350 = vld [vmem:[%s221 + $0x118] sm:$0xff]
        %v351 = vld [vmem:[%s221 + $0x120] sm:$0xff]
        %v352 = vld [vmem:[%s221 + $0x128] sm:$0xff]
        %v353 = vld [vmem:[%s221 + $0x130] sm:$0xff]
        %v354 = vld [vmem:[%s221 + $0x138] sm:$0xff]
        %v355 = vld [vmem:[%s221 + $0x140] sm:$0xff]
        %v356 = vld [vmem:[%s221 + $0x148] sm:$0xff]
        %v357 = vld [vmem:[%s221 + $0x150] sm:$0xff]
        %v358 = vld [vmem:[%s221 + $0x158] sm:$0xff]
        %v359 = vld [vmem:[%s221 + $0x160] sm:$0xff]
        %v360 = vld [vmem:[%s221 + $0x168] sm:$0xff]
        %v361 = vld [vmem:[%s221 + $0x170] sm:$0xff]
        %v362 = vld [vmem:[%s221 + $0x178] sm:$0xff]
        %v363 = vld [vmem:[%s221 + $0x180] sm:$0xff]
        %v364 = vld [vmem:[%s221 + $0x188] sm:$0xff]
        %v365 = vld [vmem:[%s221 + $0x190] sm:$0xff]
        %v366 = vld [vmem:[%s221 + $0x198] sm:$0xff]
        %v367 = vld [vmem:[%s221 + $0x1a0] sm:$0xff]
        %v368 = vld [vmem:[%s221 + $0x1a8] sm:$0xff]
        %v369 = vld [vmem:[%s221 + $0x1b0] sm:$0xff]
        %v370 = vld [vmem:[%s221 + $0x1b8] sm:$0xff]
        %v371 = vld [vmem:[%s221 + $0x1c0] sm:$0xff]
        %v372 = vld [vmem:[%s221 + $0x1c8] sm:$0xff]
        %v373 = vld [vmem:[%s221 + $0x1d0] sm:$0xff]
        %v374 = vld [vmem:[%s221 + $0x1d8] sm:$0xff]
        %v375 = vld [vmem:[%s221 + $0x1e0] sm:$0xff]
        %v376 = vld [vmem:[%s221 + $0x1e8] sm:$0xff]
        %v377 = vld [vmem:[%s221 + $0x1f0] sm:$0xff]
        %v378 = vld [vmem:[%s221 + $0x1f8] sm:$0xff]
        %v379 = vmul.f32 %v315, 0.9
        %v380 = vmul.f32 %v316, 0.9
        %v381 = vmul.f32 %v317, 0.9
        %v382 = vmul.f32 %v318, 0.9
        %v383 = vmul.f32 %v319, 0.9
        %v384 = vmul.f32 %v320, 0.9
        %v385 = vmul.f32 %v321, 0.9
        %v386 = vmul.f32 %v322, 0.9
        %v387 = vmul.f32 %v323, 0.9
        %v388 = vmul.f32 %v324, 0.9
        %v389 = vmul.f32 %v325, 0.9
        %v390 = vmul.f32 %v326, 0.9
        %v391 = vmul.f32 %v327, 0.9
        %v392 = vmul.f32 %v328, 0.9
        %v393 = vmul.f32 %v329, 0.9
        %v394 = vmul.f32 %v330, 0.9
        %v395 = vmul.f32 %v331, 0.9
        %v396 = vmul.f32 %v332, 0.9
        %v397 = vmul.f32 %v333, 0.9
        %v398 = vmul.f32 %v334, 0.9
        %v399 = vmul.f32 %v335, 0.9
        %v400 = vmul.f32 %v336, 0.9
        %v401 = vmul.f32 %v337, 0.9
        %v402 = vmul.f32 %v338, 0.9
        %v403 = vmul.f32 %v339, 0.9
        %v404 = vmul.f32 %v340, 0.9
        %v405 = vmul.f32 %v341, 0.9
        %v406 = vmul.f32 %v342, 0.9
        %v407 = vmul.f32 %v343, 0.9
        %v408 = vmul.f32 %v344, 0.9
        %v409 = vmul.f32 %v345, 0.9
        %v410 = vmul.f32 %v346, 0.9
        %v411 = vmul.f32 %v347, 0.9
        %v412 = vmul.f32 %v348, 0.9
        %v413 = vmul.f32 %v349, 0.9
        %v414 = vmul.f32 %v350, 0.9
        %v415 = vmul.f32 %v351, 0.9
        %v416 = vmul.f32 %v352, 0.9
        %v417 = vmul.f32 %v353, 0.9
        %v418 = vmul.f32 %v354, 0.9
        %v419 = vmul.f32 %v355, 0.9
        %v420 = vmul.f32 %v356, 0.9
        %v421 = vmul.f32 %v357, 0.9
        %v422 = vmul.f32 %v358, 0.9
        %v423 = vmul.f32 %v359, 0.9
        %v424 = vmul.f32 %v360, 0.9
        %v425 = vmul.f32 %v361, 0.9
        %v426 = vmul.f32 %v362, 0.9
        %v427 = vmul.f32 %v363, 0.9
        %v428 = vmul.f32 %v364, 0.9
        %v429 = vmul.f32 %v365, 0.9
        %v430 = vmul.f32 %v366, 0.9
        %v431 = vmul.f32 %v367, 0.9
        %v432 = vmul.f32 %v368, 0.9
        %v433 = vmul.f32 %v369, 0.9
        %v434 = vmul.f32 %v370, 0.9
        %v435 = vmul.f32 %v371, 0.9
        %v436 = vmul.f32 %v372, 0.9
        %v437 = vmul.f32 %v373, 0.9
        %v438 = vmul.f32 %v374, 0.9
        %v439 = vmul.f32 %v375, 0.9
        %v440 = vmul.f32 %v376, 0.9
        %v441 = vmul.f32 %v377, 0.9
        %v442 = vmul.f32 %v378, 0.9
        %v443 = vadd.f32 %v379, 1.0
        %v444 = vadd.f32 %v380, 1.0
        %v445 = vadd.f32 %v381, 1.0
        %v446 = vadd.f32 %v382, 1.0
        %v447 = vadd.f32 %v383, 1.0
        %v448 = vadd.f32 %v384, 1.0
        %v449 = vadd.f32 %v385, 1.0
        %v450 = vadd.f32 %v386, 1.0
        %v451 = vadd.f32 %v387, 1.0
        %v452 = vadd.f32 %v388, 1.0
        %v453 = vadd.f32 %v389, 1.0
        %v454 = vadd.f32 %v390, 1.0
        %v455 = vadd.f32 %v391, 1.0
        %v456 = vadd.f32 %v392, 1.0
        %v457 = vadd.f32 %v393, 1.0
        %v458 = vadd.f32 %v394, 1.0
        %v459 = vadd.f32 %v395, 1.0
        %v460 = vadd.f32 %v396, 1.0
        %v461 = vadd.f32 %v397, 1.0
        %v462 = vadd.f32 %v398, 1.0
        %v463 = vadd.f32 %v399, 1.0
        %v464 = vadd.f32 %v400, 1.0
        %v465 = vadd.f32 %v401, 1.0
        %v466 = vadd.f32 %v402, 1.0
        %v467 = vadd.f32 %v403, 1.0
        %v468 = vadd.f32 %v404, 1.0
        %v469 = vadd.f32 %v405, 1.0
        %v470 = vadd.f32 %v406, 1.0
        %v471 = vadd.f32 %v407, 1.0
        %v472 = vadd.f32 %v408, 1.0
        %v473 = vadd.f32 %v409, 1.0
        %v474 = vadd.f32 %v410, 1.0
        %v475 = vadd.f32 %v411, 1.0
        %v476 = vadd.f32 %v412, 1.0
        %v477 = vadd.f32 %v413, 1.0
        %v478 = vadd.f32 %v414, 1.0
        %v479 = vadd.f32 %v415, 1.0
        %v480 = vadd.f32 %v416, 1.0
        %v481 = vadd.f32 %v417, 1.0
        %v482 = vadd.f32 %v418, 1.0
        %v483 = vadd.f32 %v419, 1.0
        %v484 = vadd.f32 %v420, 1.0
        %v485 = vadd.f32 %v421, 1.0
        %v486 = vadd.f32 %v422, 1.0
        %v487 = vadd.f32 %v423, 1.0
        %v488 = vadd.f32 %v424, 1.0
        %v489 = vadd.f32 %v425, 1.0
        %v490 = vadd.f32 %v426, 1.0
        %v491 = vadd.f32 %v427, 1.0
        %v492 = vadd.f32 %v428, 1.0
        %v493 = vadd.f32 %v429, 1.0
        %v494 = vadd.f32 %v430, 1.0
        %v495 = vadd.f32 %v431, 1.0
        %v496 = vadd.f32 %v432, 1.0
        %v497 = vadd.f32 %v433, 1.0
        %v498 = vadd.f32 %v434, 1.0
        %v499 = vadd.f32 %v435, 1.0
        %v500 = vadd.f32 %v436, 1.0
        %v501 = vadd.f32 %v437, 1.0
        %v502 = vadd.f32 %v438, 1.0
        %v503 = vadd.f32 %v439, 1.0
        %v504 = vadd.f32 %v440, 1.0
        %v505 = vadd.f32 %v441, 1.0
        %v506 = vadd.f32 %v442, 1.0
        %507 = vst.msk [vmem:[#allocation3] sm:$0xff] %vm250, %v443
        %508 = vst.msk [vmem:[#allocation3 + $0x8] sm:$0xff] %vm250, %v444
        %509 = vst.msk [vmem:[#allocation3 + $0x10] sm:$0xff] %vm250, %v445
        %510 = vst.msk [vmem:[#allocation3 + $0x18] sm:$0xff] %vm250, %v446
        %511 = vst.msk [vmem:[#allocation3 + $0x20] sm:$0xff] %vm250, %v447
        %512 = vst.msk [vmem:[#allocation3 + $0x28] sm:$0xff] %vm250, %v448
        %513 = vst.msk [vmem:[#allocation3 + $0x30] sm:$0xff] %vm250, %v449
        %514 = vst.msk [vmem:[#allocation3 + $0x38] sm:$0xff] %vm250, %v450
        %515 = vst.msk [vmem:[#allocation3 + $0x40] sm:$0xff] %vm250, %v451
        %516 = vst.msk [vmem:[#allocation3 + $0x48] sm:$0xff] %vm250, %v452
        %517 = vst.msk [vmem:[#allocation3 + $0x50] sm:$0xff] %vm250, %v453
        %518 = vst.msk [vmem:[#allocation3 + $0x58] sm:$0xff] %vm250, %v454
        %519 = vst.msk [vmem:[#allocation3 + $0x60] sm:$0xff] %vm250, %v455
        %520 = vst.msk [vmem:[#allocation3 + $0x68] sm:$0xff] %vm250, %v456
        %521 = vst.msk [vmem:[#allocation3 + $0x70] sm:$0xff] %vm250, %v457
        %522 = vst.msk [vmem:[#allocation3 + $0x78] sm:$0xff] %vm250, %v458
        %523 = vst.msk [vmem:[#allocation3 + $0x80] sm:$0xff] %vm250, %v459
        %524 = vst.msk [vmem:[#allocation3 + $0x88] sm:$0xff] %vm250, %v460
        %525 = vst.msk [vmem:[#allocation3 + $0x90] sm:$0xff] %vm250, %v461
        %526 = vst.msk [vmem:[#allocation3 + $0x98] sm:$0xff] %vm250, %v462
        %527 = vst.msk [vmem:[#allocation3 + $0xa0] sm:$0xff] %vm250, %v463
        %528 = vst.msk [vmem:[#allocation3 + $0xa8] sm:$0xff] %vm250, %v464
        %529 = vst.msk [vmem:[#allocation3 + $0xb0] sm:$0xff] %vm250, %v465
        %530 = vst.msk [vmem:[#allocation3 + $0xb8] sm:$0xff] %vm250, %v466
        %531 = vst.msk [vmem:[#allocation3 + $0xc0] sm:$0xff] %vm250, %v467
        %532 = vst.msk [vmem:[#allocation3 + $0xc8] sm:$0xff] %vm250, %v468
        %533 = vst.msk [vmem:[#allocation3 + $0xd0] sm:$0xff] %vm250, %v469
        %534 = vst.msk [vmem:[#allocation3 + $0xd8] sm:$0xff] %vm250, %v470
        %535 = vst.msk [vmem:[#allocation3 + $0xe0] sm:$0xff] %vm250, %v471
        %536 = vst.msk [vmem:[#allocation3 + $0xe8] sm:$0xff] %vm250, %v472
        %537 = vst.msk [vmem:[#allocation3 + $0xf0] sm:$0xff] %vm250, %v473
        %538 = vst.msk [vmem:[#allocation3 + $0xf8] sm:$0xff] %vm250, %v474
        %539 = vst.msk [vmem:[#allocation3 + $0x100] sm:$0xff] %vm250, %v475
        %540 = vst.msk [vmem:[#allocation3 + $0x108] sm:$0xff] %vm250, %v476
        %541 = vst.msk [vmem:[#allocation3 + $0x110] sm:$0xff] %vm250, %v477
        %542 = vst.msk [vmem:[#allocation3 + $0x118] sm:$0xff] %vm250, %v478
        %543 = vst.msk [vmem:[#allocation3 + $0x120] sm:$0xff] %vm250, %v479
        %544 = vst.msk [vmem:[#allocation3 + $0x128] sm:$0xff] %vm250, %v480
        %545 = vst.msk [vmem:[#allocation3 + $0x130] sm:$0xff] %vm250, %v481
        %546 = vst.msk [vmem:[#allocation3 + $0x138] sm:$0xff] %vm250, %v482
        %547 = vst.msk [vmem:[#allocation3 + $0x140] sm:$0xff] %vm250, %v483
        %548 = vst.msk [vmem:[#allocation3 + $0x148] sm:$0xff] %vm250, %v484
        %549 = vst.msk [vmem:[#allocation3 + $0x150] sm:$0xff] %vm250, %v485
        %550 = vst.msk [vmem:[#allocation3 + $0x158] sm:$0xff] %vm250, %v486
        %551 = vst.msk [vmem:[#allocation3 + $0x160] sm:$0xff] %vm250, %v487
        %552 = vst.msk [vmem:[#allocation3 + $0x168] sm:$0xff] %vm250, %v488
        %553 = vst.msk [vmem:[#allocation3 + $0x170] sm:$0xff] %vm250, %v489
        %554 = vst.msk [vmem:[#allocation3 + $0x178] sm:$0xff] %vm250, %v490
        %555 = vst.msk [vmem:[#allocation3 + $0x180] sm:$0xff] %vm250, %v491
        %556 = vst.msk [vmem:[#allocation3 + $0x188] sm:$0xff] %vm250, %v492
        %557 = vst.msk [vmem:[#allocation3 + $0x190] sm:$0xff] %vm250, %v493
        %558 = vst.msk [vmem:[#allocation3 + $0x198] sm:$0xff] %vm250, %v494
        %559 = vst.msk [vmem:[#allocation3 + $0x1a0] sm:$0xff] %vm250, %v495
        %560 = vst.msk [vmem:[#allocation3 + $0x1a8] sm:$0xff] %vm250, %v496
        %561 = vst.msk [vmem:[#allocation3 + $0x1b0] sm:$0xff] %vm250, %v497
        %562 = vst.msk [vmem:[#allocation3 + $0x1b8] sm:$0xff] %vm250, %v498
        %563 = vst.msk [vmem:[#allocation3 + $0x1c0] sm:$0xff] %vm250, %v499
        %564 = vst.msk [vmem:[#allocation3 + $0x1c8] sm:$0xff] %vm250, %v500
        %565 = vst.msk [vmem:[#allocation3 + $0x1d0] sm:$0xff] %vm250, %v501
        %566 = vst.msk [vmem:[#allocation3 + $0x1d8] sm:$0xff] %vm250, %v502
        %567 = vst.msk [vmem:[#allocation3 + $0x1e0] sm:$0xff] %vm250, %v503
        %568 = vst.msk [vmem:[#allocation3 + $0x1e8] sm:$0xff] %vm250, %v504
        %569 = vst.msk [vmem:[#allocation3 + $0x1f0] sm:$0xff] %vm250, %v505
        %570 = vst.msk [vmem:[#allocation3 + $0x1f8] sm:$0xff] %vm250, %v506
      $region36: #{tpu_custom_call.1} parent=31 // pred_fallthru
        _
      %v571 = vld [vmem:[%s227] sm:$0xff]
      %v572 = vld [vmem:[%s227 + $0x8] sm:$0xff]
      %v573 = vld [vmem:[%s227 + $0x10] sm:$0xff]
      %v574 = vld [vmem:[%s237] sm:$0x7]
      %v575 = vld [vmem:[%s237 + $0x3] sm:$0x7]
      %v576 = vld [vmem:[%s237 + $0x6] sm:$0x7]
      %v577 = vld [vmem:[%s237 + $0x9] sm:$0x7]
      %v578 = vld [vmem:[%s237 + $0xc] sm:$0x7]
      %v579 = vld [vmem:[%s237 + $0xf] sm:$0x7]
      %v580 = vld [vmem:[%s237 + $0x12] sm:$0x7]
      %v581 = vld [vmem:[%s237 + $0x15] sm:$0x7]
      %v582 = vld [vmem:[%s237 + $0x18] sm:$0x7]
      %v583 = vld [vmem:[%s237 + $0x1b] sm:$0x7]
      %v584 = vld [vmem:[%s237 + $0x1e] sm:$0x7]
      %v585 = vld [vmem:[%s237 + $0x21] sm:$0x7]
      %v586 = vld [vmem:[%s237 + $0x24] sm:$0x7]
      %v587 = vld [vmem:[%s237 + $0x27] sm:$0x7]
      %v588 = vld [vmem:[%s237 + $0x2a] sm:$0x7]
      %v589 = vld [vmem:[%s237 + $0x2d] sm:$0x7]
      %v590 = vld [vmem:[%s237 + $0x30] sm:$0x7]
      %v591 = vld [vmem:[%s237 + $0x33] sm:$0x7]
      %v592 = vld [vmem:[%s237 + $0x36] sm:$0x7]
      %v593 = vld [vmem:[%s237 + $0x39] sm:$0x7]
      %v594 = vld [vmem:[%s237 + $0x3c] sm:$0x7]
      %v595 = vld [vmem:[%s237 + $0x3f] sm:$0x7]
      %v596 = vld [vmem:[%s237 + $0x42] sm:$0x7]
      %v597 = vld [vmem:[%s237 + $0x45] sm:$0x7]
      %v598 = vld [vmem:[%s237 + $0x48] sm:$0x7]
      %v599 = vld [vmem:[%s237 + $0x4b] sm:$0x7]
      %v600 = vld [vmem:[%s237 + $0x4e] sm:$0x7]
      %v601 = vld [vmem:[%s237 + $0x51] sm:$0x7]
      %v602 = vld [vmem:[%s237 + $0x54] sm:$0x7]
      %v603 = vld [vmem:[%s237 + $0x57] sm:$0x7]
      %v604 = vld [vmem:[%s237 + $0x5a] sm:$0x7]
      %v605 = vld [vmem:[%s237 + $0x5d] sm:$0x7]
      %v606 = vld [vmem:[%s237 + $0x60] sm:$0x7]
      %v607 = vld [vmem:[%s237 + $0x63] sm:$0x7]
      %v608 = vld [vmem:[%s237 + $0x66] sm:$0x7]
      %v609 = vld [vmem:[%s237 + $0x69] sm:$0x7]
      %v610 = vld [vmem:[%s237 + $0x6c] sm:$0x7]
      %v611 = vld [vmem:[%s237 + $0x6f] sm:$0x7]
      %v612 = vld [vmem:[%s237 + $0x72] sm:$0x7]
      %v613 = vld [vmem:[%s237 + $0x75] sm:$0x7]
      %v614 = vld [vmem:[%s237 + $0x78] sm:$0x7]
      %v615 = vld [vmem:[%s237 + $0x7b] sm:$0x7]
      %v616 = vld [vmem:[%s237 + $0x7e] sm:$0x7]
      %v617 = vld [vmem:[%s237 + $0x81] sm:$0x7]
      %v618 = vld [vmem:[%s237 + $0x84] sm:$0x7]
      %v619 = vld [vmem:[%s237 + $0x87] sm:$0x7]
      %v620 = vld [vmem:[%s237 + $0x8a] sm:$0x7]
      %v621 = vld [vmem:[%s237 + $0x8d] sm:$0x7]
      %v622 = vld [vmem:[%s237 + $0x90] sm:$0x7]
      %v623 = vld [vmem:[%s237 + $0x93] sm:$0x7]
      %v624 = vld [vmem:[%s237 + $0x96] sm:$0x7]
      %v625 = vld [vmem:[%s237 + $0x99] sm:$0x7]
      %v626 = vld [vmem:[%s237 + $0x9c] sm:$0x7]
      %v627 = vld [vmem:[%s237 + $0x9f] sm:$0x7]
      %v628 = vld [vmem:[%s237 + $0xa2] sm:$0x7]
      %v629 = vld [vmem:[%s237 + $0xa5] sm:$0x7]
      %v630 = vld [vmem:[%s237 + $0xa8] sm:$0x7]
      %v631 = vld [vmem:[%s237 + $0xab] sm:$0x7]
      %v632 = vld [vmem:[%s237 + $0xae] sm:$0x7]
      %v633 = vld [vmem:[%s237 + $0xb1] sm:$0x7]
      %v634 = vld [vmem:[%s237 + $0xb4] sm:$0x7]
      %v635 = vld [vmem:[%s237 + $0xb7] sm:$0x7]
      %v636 = vld [vmem:[%s237 + $0xba] sm:$0x7]
      %v637 = vld [vmem:[%s237 + $0xbd] sm:$0x7]
      %v638 = vunpack.c.l.bf16 %v574
      %v639 = vunpack.c.l.bf16 %v575
      %v640 = vunpack.c.l.bf16 %v576
      %v641 = vunpack.c.l.bf16 %v577
      %v642 = vunpack.c.l.bf16 %v578
      %v643 = vunpack.c.l.bf16 %v579
      %v644 = vunpack.c.l.bf16 %v580
      %v645 = vunpack.c.l.bf16 %v581
      %v646 = vunpack.c.l.bf16 %v582
      %v647 = vunpack.c.l.bf16 %v583
      %v648 = vunpack.c.l.bf16 %v584
      %v649 = vunpack.c.l.bf16 %v585
      %v650 = vunpack.c.l.bf16 %v586
      %v651 = vunpack.c.l.bf16 %v587
      %v652 = vunpack.c.l.bf16 %v588
      %v653 = vunpack.c.l.bf16 %v589
      %v654 = vunpack.c.l.bf16 %v590
      %v655 = vunpack.c.l.bf16 %v591
      %v656 = vunpack.c.l.bf16 %v592
      %v657 = vunpack.c.l.bf16 %v593
      %v658 = vunpack.c.l.bf16 %v594
      %v659 = vunpack.c.l.bf16 %v595
      %v660 = vunpack.c.l.bf16 %v596
      %v661 = vunpack.c.l.bf16 %v597
      %v662 = vunpack.c.l.bf16 %v598
      %v663 = vunpack.c.l.bf16 %v599
      %v664 = vunpack.c.l.bf16 %v600
      %v665 = vunpack.c.l.bf16 %v601
      %v666 = vunpack.c.l.bf16 %v602
      %v667 = vunpack.c.l.bf16 %v603
      %v668 = vunpack.c.l.bf16 %v604
      %v669 = vunpack.c.l.bf16 %v605
      %v670 = vunpack.c.l.bf16 %v606
      %v671 = vunpack.c.l.bf16 %v607
      %v672 = vunpack.c.l.bf16 %v608
      %v673 = vunpack.c.l.bf16 %v609
      %v674 = vunpack.c.l.bf16 %v610
      %v675 = vunpack.c.l.bf16 %v611
      %v676 = vunpack.c.l.bf16 %v612
      %v677 = vunpack.c.l.bf16 %v613
      %v678 = vunpack.c.l.bf16 %v614
      %v679 = vunpack.c.l.bf16 %v615
      %v680 = vunpack.c.l.bf16 %v616
      %v681 = vunpack.c.l.bf16 %v617
      %v682 = vunpack.c.l.bf16 %v618
      %v683 = vunpack.c.l.bf16 %v619
      %v684 = vunpack.c.l.bf16 %v620
      %v685 = vunpack.c.l.bf16 %v621
      %v686 = vunpack.c.l.bf16 %v622
      %v687 = vunpack.c.l.bf16 %v623
      %v688 = vunpack.c.l.bf16 %v624
      %v689 = vunpack.c.l.bf16 %v625
      %v690 = vunpack.c.l.bf16 %v626
      %v691 = vunpack.c.l.bf16 %v627
      %v692 = vunpack.c.l.bf16 %v628
      %v693 = vunpack.c.l.bf16 %v629
      %v694 = vunpack.c.l.bf16 %v630
      %v695 = vunpack.c.l.bf16 %v631
      %v696 = vunpack.c.l.bf16 %v632
      %v697 = vunpack.c.l.bf16 %v633
      %v698 = vunpack.c.l.bf16 %v634
      %v699 = vunpack.c.l.bf16 %v635
      %v700 = vunpack.c.l.bf16 %v636
      %v701 = vunpack.c.l.bf16 %v637
      %v702 = vld [vmem:[#allocation3] sm:$0xff]
      %v703 = vld [vmem:[#allocation3 + $0x8] sm:$0xff]
      %v704 = vld [vmem:[#allocation3 + $0x10] sm:$0xff]
      %v705 = vld [vmem:[#allocation3 + $0x18] sm:$0xff]
      %v706 = vld [vmem:[#allocation3 + $0x20] sm:$0xff]
      %v707 = vld [vmem:[#allocation3 + $0x28] sm:$0xff]
      %v708 = vld [vmem:[#allocation3 + $0x30] sm:$0xff]
      %v709 = vld [vmem:[#allocation3 + $0x38] sm:$0xff]
      %v710 = vld [vmem:[#allocation3 + $0x40] sm:$0xff]
      %v711 = vld [vmem:[#allocation3 + $0x48] sm:$0xff]
      %v712 = vld [vmem:[#allocation3 + $0x50] sm:$0xff]
      %v713 = vld [vmem:[#allocation3 + $0x58] sm:$0xff]
      %v714 = vld [vmem:[#allocation3 + $0x60] sm:$0xff]
      %v715 = vld [vmem:[#allocation3 + $0x68] sm:$0xff]
      %v716 = vld [vmem:[#allocation3 + $0x70] sm:$0xff]
      %v717 = vld [vmem:[#allocation3 + $0x78] sm:$0xff]
      %v718 = vld [vmem:[#allocation3 + $0x80] sm:$0xff]
      %v719 = vld [vmem:[#allocation3 + $0x88] sm:$0xff]
      %v720 = vld [vmem:[#allocation3 + $0x90] sm:$0xff]
      %v721 = vld [vmem:[#allocation3 + $0x98] sm:$0xff]
      %v722 = vld [vmem:[#allocation3 + $0xa0] sm:$0xff]
      %v723 = vld [vmem:[#allocation3 + $0xa8] sm:$0xff]
      %v724 = vld [vmem:[#allocation3 + $0xb0] sm:$0xff]
      %v725 = vld [vmem:[#allocation3 + $0xb8] sm:$0xff]
      %v726 = vld [vmem:[#allocation3 + $0xc0] sm:$0xff]
      %v727 = vld [vmem:[#allocation3 + $0xc8] sm:$0xff]
      %v728 = vld [vmem:[#allocation3 + $0xd0] sm:$0xff]
      %v729 = vld [vmem:[#allocation3 + $0xd8] sm:$0xff]
      %v730 = vld [vmem:[#allocation3 + $0xe0] sm:$0xff]
      %v731 = vld [vmem:[#allocation3 + $0xe8] sm:$0xff]
      %v732 = vld [vmem:[#allocation3 + $0xf0] sm:$0xff]
      %v733 = vld [vmem:[#allocation3 + $0xf8] sm:$0xff]
      %v734 = vld [vmem:[#allocation3 + $0x100] sm:$0xff]
      %v735 = vld [vmem:[#allocation3 + $0x108] sm:$0xff]
      %v736 = vld [vmem:[#allocation3 + $0x110] sm:$0xff]
      %v737 = vld [vmem:[#allocation3 + $0x118] sm:$0xff]
      %v738 = vld [vmem:[#allocation3 + $0x120] sm:$0xff]
      %v739 = vld [vmem:[#allocation3 + $0x128] sm:$0xff]
      %v740 = vld [vmem:[#allocation3 + $0x130] sm:$0xff]
      %v741 = vld [vmem:[#allocation3 + $0x138] sm:$0xff]
      %v742 = vld [vmem:[#allocation3 + $0x140] sm:$0xff]
      %v743 = vld [vmem:[#allocation3 + $0x148] sm:$0xff]
      %v744 = vld [vmem:[#allocation3 + $0x150] sm:$0xff]
      %v745 = vld [vmem:[#allocation3 + $0x158] sm:$0xff]
      %v746 = vld [vmem:[#allocation3 + $0x160] sm:$0xff]
      %v747 = vld [vmem:[#allocation3 + $0x168] sm:$0xff]
      %v748 = vld [vmem:[#allocation3 + $0x170] sm:$0xff]
      %v749 = vld [vmem:[#allocation3 + $0x178] sm:$0xff]
      %v750 = vld [vmem:[#allocation3 + $0x180] sm:$0xff]
      %v751 = vld [vmem:[#allocation3 + $0x188] sm:$0xff]
      %v752 = vld [vmem:[#allocation3 + $0x190] sm:$0xff]
      %v753 = vld [vmem:[#allocation3 + $0x198] sm:$0xff]
      %v754 = vld [vmem:[#allocation3 + $0x1a0] sm:$0xff]
      %v755 = vld [vmem:[#allocation3 + $0x1a8] sm:$0xff]
      %v756 = vld [vmem:[#allocation3 + $0x1b0] sm:$0xff]
      %v757 = vld [vmem:[#allocation3 + $0x1b8] sm:$0xff]
      %v758 = vld [vmem:[#allocation3 + $0x1c0] sm:$0xff]
      %v759 = vld [vmem:[#allocation3 + $0x1c8] sm:$0xff]
      %v760 = vld [vmem:[#allocation3 + $0x1d0] sm:$0xff]
      %v761 = vld [vmem:[#allocation3 + $0x1d8] sm:$0xff]
      %v762 = vld [vmem:[#allocation3 + $0x1e0] sm:$0xff]
      %v763 = vld [vmem:[#allocation3 + $0x1e8] sm:$0xff]
      %v764 = vld [vmem:[#allocation3 + $0x1f0] sm:$0xff]
      %v765 = vld [vmem:[#allocation3 + $0x1f8] sm:$0xff]
      %v766 = vmul.f32 %v571, 0.1
      %v767 = vmul.f32 %v572, 0.1
      %v768 = vmul.f32 %v573, 0.1
      %770 = vset.pattern.permute.xlu0 0
      %771 = vperm.xlu0 %770, %v702
      %v772 = vpop.permute.xlu0 %771
      %775 = vset.pattern.permute.xlu0 0
      %776 = vperm.xlu0 %775, %v703
      %v777 = vpop.permute.xlu0 %776
      %780 = vset.pattern.permute.xlu0 0
      %781 = vperm.xlu0 %780, %v704
      %v782 = vpop.permute.xlu0 %781
      %785 = vset.pattern.permute.xlu0 0
      %786 = vperm.xlu0 %785, %v705
      %v787 = vpop.permute.xlu0 %786
      %790 = vset.pattern.permute.xlu0 0
      %791 = vperm.xlu0 %790, %v706
      %v792 = vpop.permute.xlu0 %791
      %795 = vset.pattern.permute.xlu0 0
      %796 = vperm.xlu0 %795, %v707
      %v797 = vpop.permute.xlu0 %796
      %800 = vset.pattern.permute.xlu0 0
      %801 = vperm.xlu0 %800, %v708
      %v802 = vpop.permute.xlu0 %801
      %805 = vset.pattern.permute.xlu0 0
      %806 = vperm.xlu0 %805, %v709
      %v807 = vpop.permute.xlu0 %806
      %810 = vset.pattern.permute.xlu0 0
      %811 = vperm.xlu0 %810, %v710
      %v812 = vpop.permute.xlu0 %811
      %815 = vset.pattern.permute.xlu0 0
      %816 = vperm.xlu0 %815, %v711
      %v817 = vpop.permute.xlu0 %816
      %820 = vset.pattern.permute.xlu0 0
      %821 = vperm.xlu0 %820, %v712
      %v822 = vpop.permute.xlu0 %821
      %825 = vset.pattern.permute.xlu0 0
      %826 = vperm.xlu0 %825, %v713
      %v827 = vpop.permute.xlu0 %826
      %830 = vset.pattern.permute.xlu0 0
      %831 = vperm.xlu0 %830, %v714
      %v832 = vpop.permute.xlu0 %831
      %835 = vset.pattern.permute.xlu0 0
      %836 = vperm.xlu0 %835, %v715
      %v837 = vpop.permute.xlu0 %836
      %840 = vset.pattern.permute.xlu0 0
      %841 = vperm.xlu0 %840, %v716
      %v842 = vpop.permute.xlu0 %841
      %845 = vset.pattern.permute.xlu0 0
      %846 = vperm.xlu0 %845, %v717
      %v847 = vpop.permute.xlu0 %846
      %850 = vset.pattern.permute.xlu0 0
      %851 = vperm.xlu0 %850, %v718
      %v852 = vpop.permute.xlu0 %851
      %855 = vset.pattern.permute.xlu0 0
      %856 = vperm.xlu0 %855, %v719
      %v857 = vpop.permute.xlu0 %856
      %860 = vset.pattern.permute.xlu0 0
      %861 = vperm.xlu0 %860, %v720
      %v862 = vpop.permute.xlu0 %861
      %865 = vset.pattern.permute.xlu0 0
      %866 = vperm.xlu0 %865, %v721
      %v867 = vpop.permute.xlu0 %866
      %870 = vset.pattern.permute.xlu0 0
      %871 = vperm.xlu0 %870, %v722
      %v872 = vpop.permute.xlu0 %871
      %875 = vset.pattern.permute.xlu0 0
      %876 = vperm.xlu0 %875, %v723
      %v877 = vpop.permute.xlu0 %876
      %880 = vset.pattern.permute.xlu0 0
      %881 = vperm.xlu0 %880, %v724
      %v882 = vpop.permute.xlu0 %881
      %885 = vset.pattern.permute.xlu0 0
      %886 = vperm.xlu0 %885, %v725
      %v887 = vpop.permute.xlu0 %886
      %890 = vset.pattern.permute.xlu0 0
      %891 = vperm.xlu0 %890, %v726
      %v892 = vpop.permute.xlu0 %891
      %895 = vset.pattern.permute.xlu0 0
      %896 = vperm.xlu0 %895, %v727
      %v897 = vpop.permute.xlu0 %896
      %900 = vset.pattern.permute.xlu0 0
      %901 = vperm.xlu0 %900, %v728
      %v902 = vpop.permute.xlu0 %901
      %905 = vset.pattern.permute.xlu0 0
      %906 = vperm.xlu0 %905, %v729
      %v907 = vpop.permute.xlu0 %906
      %910 = vset.pattern.permute.xlu0 0
      %911 = vperm.xlu0 %910, %v730
      %v912 = vpop.permute.xlu0 %911
      %915 = vset.pattern.permute.xlu0 0
      %916 = vperm.xlu0 %915, %v731
      %v917 = vpop.permute.xlu0 %916
      %920 = vset.pattern.permute.xlu0 0
      %921 = vperm.xlu0 %920, %v732
      %v922 = vpop.permute.xlu0 %921
      %925 = vset.pattern.permute.xlu0 0
      %926 = vperm.xlu0 %925, %v733
      %v927 = vpop.permute.xlu0 %926
      %930 = vset.pattern.permute.xlu0 0
      %931 = vperm.xlu0 %930, %v734
      %v932 = vpop.permute.xlu0 %931
      %935 = vset.pattern.permute.xlu0 0
      %936 = vperm.xlu0 %935, %v735
      %v937 = vpop.permute.xlu0 %936
      %940 = vset.pattern.permute.xlu0 0
      %941 = vperm.xlu0 %940, %v736
      %v942 = vpop.permute.xlu0 %941
      %945 = vset.pattern.permute.xlu0 0
      %946 = vperm.xlu0 %945, %v737
      %v947 = vpop.permute.xlu0 %946
      %950 = vset.pattern.permute.xlu0 0
      %951 = vperm.xlu0 %950, %v738
      %v952 = vpop.permute.xlu0 %951
      %955 = vset.pattern.permute.xlu0 0
      %956 = vperm.xlu0 %955, %v739
      %v957 = vpop.permute.xlu0 %956
      %960 = vset.pattern.permute.xlu0 0
      %961 = vperm.xlu0 %960, %v740
      %v962 = vpop.permute.xlu0 %961
      %965 = vset.pattern.permute.xlu0 0
      %966 = vperm.xlu0 %965, %v741
      %v967 = vpop.permute.xlu0 %966
      %970 = vset.pattern.permute.xlu0 0
      %971 = vperm.xlu0 %970, %v742
      %v972 = vpop.permute.xlu0 %971
      %975 = vset.pattern.permute.xlu0 0
      %976 = vperm.xlu0 %975, %v743
      %v977 = vpop.permute.xlu0 %976
      %980 = vset.pattern.permute.xlu0 0
      %981 = vperm.xlu0 %980, %v744
      %v982 = vpop.permute.xlu0 %981
      %985 = vset.pattern.permute.xlu0 0
      %986 = vperm.xlu0 %985, %v745
      %v987 = vpop.permute.xlu0 %986
      %990 = vset.pattern.permute.xlu0 0
      %991 = vperm.xlu0 %990, %v746
      %v992 = vpop.permute.xlu0 %991
      %995 = vset.pattern.permute.xlu0 0
      %996 = vperm.xlu0 %995, %v747
      %v997 = vpop.permute.xlu0 %996
      %1000 = vset.pattern.permute.xlu0 0
      %1001 = vperm.xlu0 %1000, %v748
      %v1002 = vpop.permute.xlu0 %1001
      %1005 = vset.pattern.permute.xlu0 0
      %1006 = vperm.xlu0 %1005, %v749
      %v1007 = vpop.permute.xlu0 %1006
      %1010 = vset.pattern.permute.xlu0 0
      %1011 = vperm.xlu0 %1010, %v750
      %v1012 = vpop.permute.xlu0 %1011
      %1015 = vset.pattern.permute.xlu0 0
      %1016 = vperm.xlu0 %1015, %v751
      %v1017 = vpop.permute.xlu0 %1016
      %1020 = vset.pattern.permute.xlu0 0
      %1021 = vperm.xlu0 %1020, %v752
      %v1022 = vpop.permute.xlu0 %1021
      %1025 = vset.pattern.permute.xlu0 0
      %1026 = vperm.xlu0 %1025, %v753
      %v1027 = vpop.permute.xlu0 %1026
      %1030 = vset.pattern.permute.xlu0 0
      %1031 = vperm.xlu0 %1030, %v754
      %v1032 = vpop.permute.xlu0 %1031
      %1035 = vset.pattern.permute.xlu0 0
      %1036 = vperm.xlu0 %1035, %v755
      %v1037 = vpop.permute.xlu0 %1036
      %1040 = vset.pattern.permute.xlu0 0
      %1041 = vperm.xlu0 %1040, %v756
      %v1042 = vpop.permute.xlu0 %1041
      %1045 = vset.pattern.permute.xlu0 0
      %1046 = vperm.xlu0 %1045, %v757
      %v1047 = vpop.permute.xlu0 %1046
      %1050 = vset.pattern.permute.xlu0 0
      %1051 = vperm.xlu0 %1050, %v758
      %v1052 = vpop.permute.xlu0 %1051
      %1055 = vset.pattern.permute.xlu0 0
      %1056 = vperm.xlu0 %1055, %v759
      %v1057 = vpop.permute.xlu0 %1056
      %1060 = vset.pattern.permute.xlu0 0
      %1061 = vperm.xlu0 %1060, %v760
      %v1062 = vpop.permute.xlu0 %1061
      %1065 = vset.pattern.permute.xlu0 0
      %1066 = vperm.xlu0 %1065, %v761
      %v1067 = vpop.permute.xlu0 %1066
      %1070 = vset.pattern.permute.xlu0 0
      %1071 = vperm.xlu0 %1070, %v762
      %v1072 = vpop.permute.xlu0 %1071
      %1075 = vset.pattern.permute.xlu0 0
      %1076 = vperm.xlu0 %1075, %v763
      %v1077 = vpop.permute.xlu0 %1076
      %1080 = vset.pattern.permute.xlu0 0
      %1081 = vperm.xlu0 %1080, %v764
      %v1082 = vpop.permute.xlu0 %1081
      %1085 = vset.pattern.permute.xlu0 0
      %1086 = vperm.xlu0 %1085, %v765
      %v1087 = vpop.permute.xlu0 %1086
      %v1089 = vadd.f32 %v772, %v766
      %v1090 = vadd.f32 %v772, %v767
      %v1091 = vadd.f32 %v772, %v768
      %v1092 = vadd.f32 %v777, %v766
      %v1093 = vadd.f32 %v777, %v767
      %v1094 = vadd.f32 %v777, %v768
      %v1095 = vadd.f32 %v782, %v766
      %v1096 = vadd.f32 %v782, %v767
      %v1097 = vadd.f32 %v782, %v768
      %v1098 = vadd.f32 %v787, %v766
      %v1099 = vadd.f32 %v787, %v767
      %v1100 = vadd.f32 %v787, %v768
      %v1101 = vadd.f32 %v792, %v766
      %v1102 = vadd.f32 %v792, %v767
      %v1103 = vadd.f32 %v792, %v768
      %v1104 = vadd.f32 %v797, %v766
      %v1105 = vadd.f32 %v797, %v767
      %v1106 = vadd.f32 %v797, %v768
      %v1107 = vadd.f32 %v802, %v766
      %v1108 = vadd.f32 %v802, %v767
      %v1109 = vadd.f32 %v802, %v768
      %v1110 = vadd.f32 %v807, %v766
      %v1111 = vadd.f32 %v807, %v767
      %v1112 = vadd.f32 %v807, %v768
      %v1113 = vadd.f32 %v812, %v766
      %v1114 = vadd.f32 %v812, %v767
      %v1115 = vadd.f32 %v812, %v768
      %v1116 = vadd.f32 %v817, %v766
      %v1117 = vadd.f32 %v817, %v767
      %v1118 = vadd.f32 %v817, %v768
      %v1119 = vadd.f32 %v822, %v766
      %v1120 = vadd.f32 %v822, %v767
      %v1121 = vadd.f32 %v822, %v768
      %v1122 = vadd.f32 %v827, %v766
      %v1123 = vadd.f32 %v827, %v767
      %v1124 = vadd.f32 %v827, %v768
      %v1125 = vadd.f32 %v832, %v766
      %v1126 = vadd.f32 %v832, %v767
      %v1127 = vadd.f32 %v832, %v768
      %v1128 = vadd.f32 %v837, %v766
      %v1129 = vadd.f32 %v837, %v767
      %v1130 = vadd.f32 %v837, %v768
      %v1131 = vadd.f32 %v842, %v766
      %v1132 = vadd.f32 %v842, %v767
      %v1133 = vadd.f32 %v842, %v768
      %v1134 = vadd.f32 %v847, %v766
      %v1135 = vadd.f32 %v847, %v767
      %v1136 = vadd.f32 %v847, %v768
      %v1137 = vadd.f32 %v852, %v766
      %v1138 = vadd.f32 %v852, %v767
      %v1139 = vadd.f32 %v852, %v768
      %v1140 = vadd.f32 %v857, %v766
      %v1141 = vadd.f32 %v857, %v767
      %v1142 = vadd.f32 %v857, %v768
      %v1143 = vadd.f32 %v862, %v766
      %v1144 = vadd.f32 %v862, %v767
      %v1145 = vadd.f32 %v862, %v768
      %v1146 = vadd.f32 %v867, %v766
      %v1147 = vadd.f32 %v867, %v767
      %v1148 = vadd.f32 %v867, %v768
      %v1149 = vadd.f32 %v872, %v766
      %v1150 = vadd.f32 %v872, %v767
      %v1151 = vadd.f32 %v872, %v768
      %v1152 = vadd.f32 %v877, %v766
      %v1153 = vadd.f32 %v877, %v767
      %v1154 = vadd.f32 %v877, %v768
      %v1155 = vadd.f32 %v882, %v766
      %v1156 = vadd.f32 %v882, %v767
      %v1157 = vadd.f32 %v882, %v768
      %v1158 = vadd.f32 %v887, %v766
      %v1159 = vadd.f32 %v887, %v767
      %v1160 = vadd.f32 %v887, %v768
      %v1161 = vadd.f32 %v892, %v766
      %v1162 = vadd.f32 %v892, %v767
      %v1163 = vadd.f32 %v892, %v768
      %v1164 = vadd.f32 %v897, %v766
      %v1165 = vadd.f32 %v897, %v767
      %v1166 = vadd.f32 %v897, %v768
      %v1167 = vadd.f32 %v902, %v766
      %v1168 = vadd.f32 %v902, %v767
      %v1169 = vadd.f32 %v902, %v768
      %v1170 = vadd.f32 %v907, %v766
      %v1171 = vadd.f32 %v907, %v767
      %v1172 = vadd.f32 %v907, %v768
      %v1173 = vadd.f32 %v912, %v766
      %v1174 = vadd.f32 %v912, %v767
      %v1175 = vadd.f32 %v912, %v768
      %v1176 = vadd.f32 %v917, %v766
      %v1177 = vadd.f32 %v917, %v767
      %v1178 = vadd.f32 %v917, %v768
      %v1179 = vadd.f32 %v922, %v766
      %v1180 = vadd.f32 %v922, %v767
      %v1181 = vadd.f32 %v922, %v768
      %v1182 = vadd.f32 %v927, %v766
      %v1183 = vadd.f32 %v927, %v767
      %v1184 = vadd.f32 %v927, %v768
      %v1185 = vadd.f32 %v932, %v766
      %v1186 = vadd.f32 %v932, %v767
      %v1187 = vadd.f32 %v932, %v768
      %v1188 = vadd.f32 %v937, %v766
      %v1189 = vadd.f32 %v937, %v767
      %v1190 = vadd.f32 %v937, %v768
      %v1191 = vadd.f32 %v942, %v766
      %v1192 = vadd.f32 %v942, %v767
      %v1193 = vadd.f32 %v942, %v768
      %v1194 = vadd.f32 %v947, %v766
      %v1195 = vadd.f32 %v947, %v767
      %v1196 = vadd.f32 %v947, %v768
      %v1197 = vadd.f32 %v952, %v766
      %v1198 = vadd.f32 %v952, %v767
      %v1199 = vadd.f32 %v952, %v768
      %v1200 = vadd.f32 %v957, %v766
      %v1201 = vadd.f32 %v957, %v767
      %v1202 = vadd.f32 %v957, %v768
      %v1203 = vadd.f32 %v962, %v766
      %v1204 = vadd.f32 %v962, %v767
      %v1205 = vadd.f32 %v962, %v768
      %v1206 = vadd.f32 %v967, %v766
      %v1207 = vadd.f32 %v967, %v767
      %v1208 = vadd.f32 %v967, %v768
      %v1209 = vadd.f32 %v972, %v766
      %v1210 = vadd.f32 %v972, %v767
      %v1211 = vadd.f32 %v972, %v768
      %v1212 = vadd.f32 %v977, %v766
      %v1213 = vadd.f32 %v977, %v767
      %v1214 = vadd.f32 %v977, %v768
      %v1215 = vadd.f32 %v982, %v766
      %v1216 = vadd.f32 %v982, %v767
      %v1217 = vadd.f32 %v982, %v768
      %v1218 = vadd.f32 %v987, %v766
      %v1219 = vadd.f32 %v987, %v767
      %v1220 = vadd.f32 %v987, %v768
      %v1221 = vadd.f32 %v992, %v766
      %v1222 = vadd.f32 %v992, %v767
      %v1223 = vadd.f32 %v992, %v768
      %v1224 = vadd.f32 %v997, %v766
      %v1225 = vadd.f32 %v997, %v767
      %v1226 = vadd.f32 %v997, %v768
      %v1227 = vadd.f32 %v1002, %v766
      %v1228 = vadd.f32 %v1002, %v767
      %v1229 = vadd.f32 %v1002, %v768
      %v1230 = vadd.f32 %v1007, %v766
      %v1231 = vadd.f32 %v1007, %v767
      %v1232 = vadd.f32 %v1007, %v768
      %v1233 = vadd.f32 %v1012, %v766
      %v1234 = vadd.f32 %v1012, %v767
      %v1235 = vadd.f32 %v1012, %v768
      %v1236 = vadd.f32 %v1017, %v766
      %v1237 = vadd.f32 %v1017, %v767
      %v1238 = vadd.f32 %v1017, %v768
      %v1239 = vadd.f32 %v1022, %v766
      %v1240 = vadd.f32 %v1022, %v767
      %v1241 = vadd.f32 %v1022, %v768
      %v1242 = vadd.f32 %v1027, %v766
      %v1243 = vadd.f32 %v1027, %v767
      %v1244 = vadd.f32 %v1027, %v768
      %v1245 = vadd.f32 %v1032, %v766
      %v1246 = vadd.f32 %v1032, %v767
      %v1247 = vadd.f32 %v1032, %v768
      %v1248 = vadd.f32 %v1037, %v766
      %v1249 = vadd.f32 %v1037, %v767
      %v1250 = vadd.f32 %v1037, %v768
      %v1251 = vadd.f32 %v1042, %v766
      %v1252 = vadd.f32 %v1042, %v767
      %v1253 = vadd.f32 %v1042, %v768
      %v1254 = vadd.f32 %v1047, %v766
      %v1255 = vadd.f32 %v1047, %v767
      %v1256 = vadd.f32 %v1047, %v768
      %v1257 = vadd.f32 %v1052, %v766
      %v1258 = vadd.f32 %v1052, %v767
      %v1259 = vadd.f32 %v1052, %v768
      %v1260 = vadd.f32 %v1057, %v766
      %v1261 = vadd.f32 %v1057, %v767
      %v1262 = vadd.f32 %v1057, %v768
      %v1263 = vadd.f32 %v1062, %v766
      %v1264 = vadd.f32 %v1062, %v767
      %v1265 = vadd.f32 %v1062, %v768
      %v1266 = vadd.f32 %v1067, %v766
      %v1267 = vadd.f32 %v1067, %v767
      %v1268 = vadd.f32 %v1067, %v768
      %v1269 = vadd.f32 %v1072, %v766
      %v1270 = vadd.f32 %v1072, %v767
      %v1271 = vadd.f32 %v1072, %v768
      %v1272 = vadd.f32 %v1077, %v766
      %v1273 = vadd.f32 %v1077, %v767
      %v1274 = vadd.f32 %v1077, %v768
      %v1275 = vadd.f32 %v1082, %v766
      %v1276 = vadd.f32 %v1082, %v767
      %v1277 = vadd.f32 %v1082, %v768
      %v1278 = vadd.f32 %v1087, %v766
      %v1279 = vadd.f32 %v1087, %v767
      %v1280 = vadd.f32 %v1087, %v768
      %v1281 = vrcp.pop %v1089
      %v1282 = vrcp.pop %v1090
      %v1283 = vrcp.pop %v1091
      %v1284 = vrcp.pop %v1092
      %v1285 = vrcp.pop %v1093
      %v1286 = vrcp.pop %v1094
      %v1287 = vrcp.pop %v1095
      %v1288 = vrcp.pop %v1096
      %v1289 = vrcp.pop %v1097
      %v1290 = vrcp.pop %v1098
      %v1291 = vrcp.pop %v1099
      %v1292 = vrcp.pop %v1100
      %v1293 = vrcp.pop %v1101
      %v1294 = vrcp.pop %v1102
      %v1295 = vrcp.pop %v1103
      %v1296 = vrcp.pop %v1104
      %v1297 = vrcp.pop %v1105
      %v1298 = vrcp.pop %v1106
      %v1299 = vrcp.pop %v1107
      %v1300 = vrcp.pop %v1108
      %v1301 = vrcp.pop %v1109
      %v1302 = vrcp.pop %v1110
      %v1303 = vrcp.pop %v1111
      %v1304 = vrcp.pop %v1112
      %v1305 = vrcp.pop %v1113
      %v1306 = vrcp.pop %v1114
      %v1307 = vrcp.pop %v1115
      %v1308 = vrcp.pop %v1116
      %v1309 = vrcp.pop %v1117
      %v1310 = vrcp.pop %v1118
      %v1311 = vrcp.pop %v1119
      %v1312 = vrcp.pop %v1120
      %v1313 = vrcp.pop %v1121
      %v1314 = vrcp.pop %v1122
      %v1315 = vrcp.pop %v1123
      %v1316 = vrcp.pop %v1124
      %v1317 = vrcp.pop %v1125
      %v1318 = vrcp.pop %v1126
      %v1319 = vrcp.pop %v1127
      %v1320 = vrcp.pop %v1128
      %v1321 = vrcp.pop %v1129
      %v1322 = vrcp.pop %v1130
      %v1323 = vrcp.pop %v1131
      %v1324 = vrcp.pop %v1132
      %v1325 = vrcp.pop %v1133
      %v1326 = vrcp.pop %v1134
      %v1327 = vrcp.pop %v1135
      %v1328 = vrcp.pop %v1136
      %v1329 = vrcp.pop %v1137
      %v1330 = vrcp.pop %v1138
      %v1331 = vrcp.pop %v1139
      %v1332 = vrcp.pop %v1140
      %v1333 = vrcp.pop %v1141
      %v1334 = vrcp.pop %v1142
      %v1335 = vrcp.pop %v1143
      %v1336 = vrcp.pop %v1144
      %v1337 = vrcp.pop %v1145
      %v1338 = vrcp.pop %v1146
      %v1339 = vrcp.pop %v1147
      %v1340 = vrcp.pop %v1148
      %v1341 = vrcp.pop %v1149
      %v1342 = vrcp.pop %v1150
      %v1343 = vrcp.pop %v1151
      %v1344 = vrcp.pop %v1152
      %v1345 = vrcp.pop %v1153
      %v1346 = vrcp.pop %v1154
      %v1347 = vrcp.pop %v1155
      %v1348 = vrcp.pop %v1156
      %v1349 = vrcp.pop %v1157
      %v1350 = vrcp.pop %v1158
      %v1351 = vrcp.pop %v1159
      %v1352 = vrcp.pop %v1160
      %v1353 = vrcp.pop %v1161
      %v1354 = vrcp.pop %v1162
      %v1355 = vrcp.pop %v1163
      %v1356 = vrcp.pop %v1164
      %v1357 = vrcp.pop %v1165
      %v1358 = vrcp.pop %v1166
      %v1359 = vrcp.pop %v1167
      %v1360 = vrcp.pop %v1168
      %v1361 = vrcp.pop %v1169
      %v1362 = vrcp.pop %v1170
      %v1363 = vrcp.pop %v1171
      %v1364 = vrcp.pop %v1172
      %v1365 = vrcp.pop %v1173
      %v1366 = vrcp.pop %v1174
      %v1367 = vrcp.pop %v1175
      %v1368 = vrcp.pop %v1176
      %v1369 = vrcp.pop %v1177
      %v1370 = vrcp.pop %v1178
      %v1371 = vrcp.pop %v1179
      %v1372 = vrcp.pop %v1180
      %v1373 = vrcp.pop %v1181
      %v1374 = vrcp.pop %v1182
      %v1375 = vrcp.pop %v1183
      %v1376 = vrcp.pop %v1184
      %v1377 = vrcp.pop %v1185
      %v1378 = vrcp.pop %v1186
      %v1379 = vrcp.pop %v1187
      %v1380 = vrcp.pop %v1188
      %v1381 = vrcp.pop %v1189
      %v1382 = vrcp.pop %v1190
      %v1383 = vrcp.pop %v1191
      %v1384 = vrcp.pop %v1192
      %v1385 = vrcp.pop %v1193
      %v1386 = vrcp.pop %v1194
      %v1387 = vrcp.pop %v1195
      %v1388 = vrcp.pop %v1196
      %v1389 = vrcp.pop %v1197
      %v1390 = vrcp.pop %v1198
      %v1391 = vrcp.pop %v1199
      %v1392 = vrcp.pop %v1200
      %v1393 = vrcp.pop %v1201
      %v1394 = vrcp.pop %v1202
      %v1395 = vrcp.pop %v1203
      %v1396 = vrcp.pop %v1204
      %v1397 = vrcp.pop %v1205
      %v1398 = vrcp.pop %v1206
      %v1399 = vrcp.pop %v1207
      %v1400 = vrcp.pop %v1208
      %v1401 = vrcp.pop %v1209
      %v1402 = vrcp.pop %v1210
      %v1403 = vrcp.pop %v1211
      %v1404 = vrcp.pop %v1212
      %v1405 = vrcp.pop %v1213
      %v1406 = vrcp.pop %v1214
      %v1407 = vrcp.pop %v1215
      %v1408 = vrcp.pop %v1216
      %v1409 = vrcp.pop %v1217
      %v1410 = vrcp.pop %v1218
      %v1411 = vrcp.pop %v1219
      %v1412 = vrcp.pop %v1220
      %v1413 = vrcp.pop %v1221
      %v1414 = vrcp.pop %v1222
      %v1415 = vrcp.pop %v1223
      %v1416 = vrcp.pop %v1224
      %v1417 = vrcp.pop %v1225
      %v1418 = vrcp.pop %v1226
      %v1419 = vrcp.pop %v1227
      %v1420 = vrcp.pop %v1228
      %v1421 = vrcp.pop %v1229
      %v1422 = vrcp.pop %v1230
      %v1423 = vrcp.pop %v1231
      %v1424 = vrcp.pop %v1232
      %v1425 = vrcp.pop %v1233
      %v1426 = vrcp.pop %v1234
      %v1427 = vrcp.pop %v1235
      %v1428 = vrcp.pop %v1236
      %v1429 = vrcp.pop %v1237
      %v1430 = vrcp.pop %v1238
      %v1431 = vrcp.pop %v1239
      %v1432 = vrcp.pop %v1240
      %v1433 = vrcp.pop %v1241
      %v1434 = vrcp.pop %v1242
      %v1435 = vrcp.pop %v1243
      %v1436 = vrcp.pop %v1244
      %v1437 = vrcp.pop %v1245
      %v1438 = vrcp.pop %v1246
      %v1439 = vrcp.pop %v1247
      %v1440 = vrcp.pop %v1248
      %v1441 = vrcp.pop %v1249
      %v1442 = vrcp.pop %v1250
      %v1443 = vrcp.pop %v1251
      %v1444 = vrcp.pop %v1252
      %v1445 = vrcp.pop %v1253
      %v1446 = vrcp.pop %v1254
      %v1447 = vrcp.pop %v1255
      %v1448 = vrcp.pop %v1256
      %v1449 = vrcp.pop %v1257
      %v1450 = vrcp.pop %v1258
      %v1451 = vrcp.pop %v1259
      %v1452 = vrcp.pop %v1260
      %v1453 = vrcp.pop %v1261
      %v1454 = vrcp.pop %v1262
      %v1455 = vrcp.pop %v1263
      %v1456 = vrcp.pop %v1264
      %v1457 = vrcp.pop %v1265
      %v1458 = vrcp.pop %v1266
      %v1459 = vrcp.pop %v1267
      %v1460 = vrcp.pop %v1268
      %v1461 = vrcp.pop %v1269
      %v1462 = vrcp.pop %v1270
      %v1463 = vrcp.pop %v1271
      %v1464 = vrcp.pop %v1272
      %v1465 = vrcp.pop %v1273
      %v1466 = vrcp.pop %v1274
      %v1467 = vrcp.pop %v1275
      %v1468 = vrcp.pop %v1276
      %v1469 = vrcp.pop %v1277
      %v1470 = vrcp.pop %v1278
      %v1471 = vrcp.pop %v1279
      %v1472 = vrcp.pop %v1280
      %v1473 = vmul.f32 %v1089, %v1281
      %v1474 = vmul.f32 %v1090, %v1282
      %v1475 = vmul.f32 %v1091, %v1283
      %v1476 = vmul.f32 %v1092, %v1284
      %v1477 = vmul.f32 %v1093, %v1285
      %v1478 = vmul.f32 %v1094, %v1286
      %v1479 = vmul.f32 %v1095, %v1287
      %v1480 = vmul.f32 %v1096, %v1288
      %v1481 = vmul.f32 %v1097, %v1289
      %v1482 = vmul.f32 %v1098, %v1290
      %v1483 = vmul.f32 %v1099, %v1291
      %v1484 = vmul.f32 %v1100, %v1292
      %v1485 = vmul.f32 %v1101, %v1293
      %v1486 = vmul.f32 %v1102, %v1294
      %v1487 = vmul.f32 %v1103, %v1295
      %v1488 = vmul.f32 %v1104, %v1296
      %v1489 = vmul.f32 %v1105, %v1297
      %v1490 = vmul.f32 %v1106, %v1298
      %v1491 = vmul.f32 %v1107, %v1299
      %v1492 = vmul.f32 %v1108, %v1300
      %v1493 = vmul.f32 %v1109, %v1301
      %v1494 = vmul.f32 %v1110, %v1302
      %v1495 = vmul.f32 %v1111, %v1303
      %v1496 = vmul.f32 %v1112, %v1304
      %v1497 = vmul.f32 %v1113, %v1305
      %v1498 = vmul.f32 %v1114, %v1306
      %v1499 = vmul.f32 %v1115, %v1307
      %v1500 = vmul.f32 %v1116, %v1308
      %v1501 = vmul.f32 %v1117, %v1309
      %v1502 = vmul.f32 %v1118, %v1310
      %v1503 = vmul.f32 %v1119, %v1311
      %v1504 = vmul.f32 %v1120, %v1312
      %v1505 = vmul.f32 %v1121, %v1313
      %v1506 = vmul.f32 %v1122, %v1314
      %v1507 = vmul.f32 %v1123, %v1315
      %v1508 = vmul.f32 %v1124, %v1316
      %v1509 = vmul.f32 %v1125, %v1317
      %v1510 = vmul.f32 %v1126, %v1318
      %v1511 = vmul.f32 %v1127, %v1319
      %v1512 = vmul.f32 %v1128, %v1320
      %v1513 = vmul.f32 %v1129, %v1321
      %v1514 = vmul.f32 %v1130, %v1322
      %v1515 = vmul.f32 %v1131, %v1323
      %v1516 = vmul.f32 %v1132, %v1324
      %v1517 = vmul.f32 %v1133, %v1325
      %v1518 = vmul.f32 %v1134, %v1326
      %v1519 = vmul.f32 %v1135, %v1327
      %v1520 = vmul.f32 %v1136, %v1328
      %v1521 = vmul.f32 %v1137, %v1329
      %v1522 = vmul.f32 %v1138, %v1330
      %v1523 = vmul.f32 %v1139, %v1331
      %v1524 = vmul.f32 %v1140, %v1332
      %v1525 = vmul.f32 %v1141, %v1333
      %v1526 = vmul.f32 %v1142, %v1334
      %v1527 = vmul.f32 %v1143, %v1335
      %v1528 = vmul.f32 %v1144, %v1336
      %v1529 = vmul.f32 %v1145, %v1337
      %v1530 = vmul.f32 %v1146, %v1338
      %v1531 = vmul.f32 %v1147, %v1339
      %v1532 = vmul.f32 %v1148, %v1340
      %v1533 = vmul.f32 %v1149, %v1341
      %v1534 = vmul.f32 %v1150, %v1342
      %v1535 = vmul.f32 %v1151, %v1343
      %v1536 = vmul.f32 %v1152, %v1344
      %v1537 = vmul.f32 %v1153, %v1345
      %v1538 = vmul.f32 %v1154, %v1346
      %v1539 = vmul.f32 %v1155, %v1347
      %v1540 = vmul.f32 %v1156, %v1348
      %v1541 = vmul.f32 %v1157, %v1349
      %v1542 = vmul.f32 %v1158, %v1350
      %v1543 = vmul.f32 %v1159, %v1351
      %v1544 = vmul.f32 %v1160, %v1352
      %v1545 = vmul.f32 %v1161, %v1353
      %v1546 = vmul.f32 %v1162, %v1354
      %v1547 = vmul.f32 %v1163, %v1355
      %v1548 = vmul.f32 %v1164, %v1356
      %v1549 = vmul.f32 %v1165, %v1357
      %v1550 = vmul.f32 %v1166, %v1358
      %v1551 = vmul.f32 %v1167, %v1359
      %v1552 = vmul.f32 %v1168, %v1360
      %v1553 = vmul.f32 %v1169, %v1361
      %v1554 = vmul.f32 %v1170, %v1362
      %v1555 = vmul.f32 %v1171, %v1363
      %v1556 = vmul.f32 %v1172, %v1364
      %v1557 = vmul.f32 %v1173, %v1365
      %v1558 = vmul.f32 %v1174, %v1366
      %v1559 = vmul.f32 %v1175, %v1367
      %v1560 = vmul.f32 %v1176, %v1368
      %v1561 = vmul.f32 %v1177, %v1369
      %v1562 = vmul.f32 %v1178, %v1370
      %v1563 = vmul.f32 %v1179, %v1371
      %v1564 = vmul.f32 %v1180, %v1372
      %v1565 = vmul.f32 %v1181, %v1373
      %v1566 = vmul.f32 %v1182, %v1374
      %v1567 = vmul.f32 %v1183, %v1375
      %v1568 = vmul.f32 %v1184, %v1376
      %v1569 = vmul.f32 %v1185, %v1377
      %v1570 = vmul.f32 %v1186, %v1378
      %v1571 = vmul.f32 %v1187, %v1379
      %v1572 = vmul.f32 %v1188, %v1380
      %v1573 = vmul.f32 %v1189, %v1381
      %v1574 = vmul.f32 %v1190, %v1382
      %v1575 = vmul.f32 %v1191, %v1383
      %v1576 = vmul.f32 %v1192, %v1384
      %v1577 = vmul.f32 %v1193, %v1385
      %v1578 = vmul.f32 %v1194, %v1386
      %v1579 = vmul.f32 %v1195, %v1387
      %v1580 = vmul.f32 %v1196, %v1388
      %v1581 = vmul.f32 %v1197, %v1389
      %v1582 = vmul.f32 %v1198, %v1390
      %v1583 = vmul.f32 %v1199, %v1391
      %v1584 = vmul.f32 %v1200, %v1392
      %v1585 = vmul.f32 %v1201, %v1393
      %v1586 = vmul.f32 %v1202, %v1394
      %v1587 = vmul.f32 %v1203, %v1395
      %v1588 = vmul.f32 %v1204, %v1396
      %v1589 = vmul.f32 %v1205, %v1397
      %v1590 = vmul.f32 %v1206, %v1398
      %v1591 = vmul.f32 %v1207, %v1399
      %v1592 = vmul.f32 %v1208, %v1400
      %v1593 = vmul.f32 %v1209, %v1401
      %v1594 = vmul.f32 %v1210, %v1402
      %v1595 = vmul.f32 %v1211, %v1403
      %v1596 = vmul.f32 %v1212, %v1404
      %v1597 = vmul.f32 %v1213, %v1405
      %v1598 = vmul.f32 %v1214, %v1406
      %v1599 = vmul.f32 %v1215, %v1407
      %v1600 = vmul.f32 %v1216, %v1408
      %v1601 = vmul.f32 %v1217, %v1409
      %v1602 = vmul.f32 %v1218, %v1410
      %v1603 = vmul.f32 %v1219, %v1411
      %v1604 = vmul.f32 %v1220, %v1412
      %v1605 = vmul.f32 %v1221, %v1413
      %v1606 = vmul.f32 %v1222, %v1414
      %v1607 = vmul.f32 %v1223, %v1415
      %v1608 = vmul.f32 %v1224, %v1416
      %v1609 = vmul.f32 %v1225, %v1417
      %v1610 = vmul.f32 %v1226, %v1418
      %v1611 = vmul.f32 %v1227, %v1419
      %v1612 = vmul.f32 %v1228, %v1420
      %v1613 = vmul.f32 %v1229, %v1421
      %v1614 = vmul.f32 %v1230, %v1422
      %v1615 = vmul.f32 %v1231, %v1423
      %v1616 = vmul.f32 %v1232, %v1424
      %v1617 = vmul.f32 %v1233, %v1425
      %v1618 = vmul.f32 %v1234, %v1426
      %v1619 = vmul.f32 %v1235, %v1427
      %v1620 = vmul.f32 %v1236, %v1428
      %v1621 = vmul.f32 %v1237, %v1429
      %v1622 = vmul.f32 %v1238, %v1430
      %v1623 = vmul.f32 %v1239, %v1431
      %v1624 = vmul.f32 %v1240, %v1432
      %v1625 = vmul.f32 %v1241, %v1433
      %v1626 = vmul.f32 %v1242, %v1434
      %v1627 = vmul.f32 %v1243, %v1435
      %v1628 = vmul.f32 %v1244, %v1436
      %v1629 = vmul.f32 %v1245, %v1437
      %v1630 = vmul.f32 %v1246, %v1438
      %v1631 = vmul.f32 %v1247, %v1439
      %v1632 = vmul.f32 %v1248, %v1440
      %v1633 = vmul.f32 %v1249, %v1441
      %v1634 = vmul.f32 %v1250, %v1442
      %v1635 = vmul.f32 %v1251, %v1443
      %v1636 = vmul.f32 %v1252, %v1444
      %v1637 = vmul.f32 %v1253, %v1445
      %v1638 = vmul.f32 %v1254, %v1446
      %v1639 = vmul.f32 %v1255, %v1447
      %v1640 = vmul.f32 %v1256, %v1448
      %v1641 = vmul.f32 %v1257, %v1449
      %v1642 = vmul.f32 %v1258, %v1450
      %v1643 = vmul.f32 %v1259, %v1451
      %v1644 = vmul.f32 %v1260, %v1452
      %v1645 = vmul.f32 %v1261, %v1453
      %v1646 = vmul.f32 %v1262, %v1454
      %v1647 = vmul.f32 %v1263, %v1455
      %v1648 = vmul.f32 %v1264, %v1456
      %v1649 = vmul.f32 %v1265, %v1457
      %v1650 = vmul.f32 %v1266, %v1458
      %v1651 = vmul.f32 %v1267, %v1459
      %v1652 = vmul.f32 %v1268, %v1460
      %v1653 = vmul.f32 %v1269, %v1461
      %v1654 = vmul.f32 %v1270, %v1462
      %v1655 = vmul.f32 %v1271, %v1463
      %v1656 = vmul.f32 %v1272, %v1464
      %v1657 = vmul.f32 %v1273, %v1465
      %v1658 = vmul.f32 %v1274, %v1466
      %v1659 = vmul.f32 %v1275, %v1467
      %v1660 = vmul.f32 %v1276, %v1468
      %v1661 = vmul.f32 %v1277, %v1469
      %v1662 = vmul.f32 %v1278, %v1470
      %v1663 = vmul.f32 %v1279, %v1471
      %v1664 = vmul.f32 %v1280, %v1472
      %v1665 = vsub.f32 2.0, %v1473
      %v1666 = vsub.f32 2.0, %v1474
      %v1667 = vsub.f32 2.0, %v1475
      %v1668 = vsub.f32 2.0, %v1476
      %v1669 = vsub.f32 2.0, %v1477
      %v1670 = vsub.f32 2.0, %v1478
      %v1671 = vsub.f32 2.0, %v1479
      %v1672 = vsub.f32 2.0, %v1480
      %v1673 = vsub.f32 2.0, %v1481
      %v1674 = vsub.f32 2.0, %v1482
      %v1675 = vsub.f32 2.0, %v1483
      %v1676 = vsub.f32 2.0, %v1484
      %v1677 = vsub.f32 2.0, %v1485
      %v1678 = vsub.f32 2.0, %v1486
      %v1679 = vsub.f32 2.0, %v1487
      %v1680 = vsub.f32 2.0, %v1488
      %v1681 = vsub.f32 2.0, %v1489
      %v1682 = vsub.f32 2.0, %v1490
      %v1683 = vsub.f32 2.0, %v1491
      %v1684 = vsub.f32 2.0, %v1492
      %v1685 = vsub.f32 2.0, %v1493
      %v1686 = vsub.f32 2.0, %v1494
      %v1687 = vsub.f32 2.0, %v1495
      %v1688 = vsub.f32 2.0, %v1496
      %v1689 = vsub.f32 2.0, %v1497
      %v1690 = vsub.f32 2.0, %v1498
      %v1691 = vsub.f32 2.0, %v1499
      %v1692 = vsub.f32 2.0, %v1500
      %v1693 = vsub.f32 2.0, %v1501
      %v1694 = vsub.f32 2.0, %v1502
      %v1695 = vsub.f32 2.0, %v1503
      %v1696 = vsub.f32 2.0, %v1504
      %v1697 = vsub.f32 2.0, %v1505
      %v1698 = vsub.f32 2.0, %v1506
      %v1699 = vsub.f32 2.0, %v1507
      %v1700 = vsub.f32 2.0, %v1508
      %v1701 = vsub.f32 2.0, %v1509
      %v1702 = vsub.f32 2.0, %v1510
      %v1703 = vsub.f32 2.0, %v1511
      %v1704 = vsub.f32 2.0, %v1512
      %v1705 = vsub.f32 2.0, %v1513
      %v1706 = vsub.f32 2.0, %v1514
      %v1707 = vsub.f32 2.0, %v1515
      %v1708 = vsub.f32 2.0, %v1516
      %v1709 = vsub.f32 2.0, %v1517
      %v1710 = vsub.f32 2.0, %v1518
      %v1711 = vsub.f32 2.0, %v1519
      %v1712 = vsub.f32 2.0, %v1520
      %v1713 = vsub.f32 2.0, %v1521
      %v1714 = vsub.f32 2.0, %v1522
      %v1715 = vsub.f32 2.0, %v1523
      %v1716 = vsub.f32 2.0, %v1524
      %v1717 = vsub.f32 2.0, %v1525
      %v1718 = vsub.f32 2.0, %v1526
      %v1719 = vsub.f32 2.0, %v1527
      %v1720 = vsub.f32 2.0, %v1528
      %v1721 = vsub.f32 2.0, %v1529
      %v1722 = vsub.f32 2.0, %v1530
      %v1723 = vsub.f32 2.0, %v1531
      %v1724 = vsub.f32 2.0, %v1532
      %v1725 = vsub.f32 2.0, %v1533
      %v1726 = vsub.f32 2.0, %v1534
      %v1727 = vsub.f32 2.0, %v1535
      %v1728 = vsub.f32 2.0, %v1536
      %v1729 = vsub.f32 2.0, %v1537
      %v1730 = vsub.f32 2.0, %v1538
      %v1731 = vsub.f32 2.0, %v1539
      %v1732 = vsub.f32 2.0, %v1540
      %v1733 = vsub.f32 2.0, %v1541
      %v1734 = vsub.f32 2.0, %v1542
      %v1735 = vsub.f32 2.0, %v1543
      %v1736 = vsub.f32 2.0, %v1544
      %v1737 = vsub.f32 2.0, %v1545
      %v1738 = vsub.f32 2.0, %v1546
      %v1739 = vsub.f32 2.0, %v1547
      %v1740 = vsub.f32 2.0, %v1548
      %v1741 = vsub.f32 2.0, %v1549
      %v1742 = vsub.f32 2.0, %v1550
      %v1743 = vsub.f32 2.0, %v1551
      %v1744 = vsub.f32 2.0, %v1552
      %v1745 = vsub.f32 2.0, %v1553
      %v1746 = vsub.f32 2.0, %v1554
      %v1747 = vsub.f32 2.0, %v1555
      %v1748 = vsub.f32 2.0, %v1556
      %v1749 = vsub.f32 2.0, %v1557
      %v1750 = vsub.f32 2.0, %v1558
      %v1751 = vsub.f32 2.0, %v1559
      %v1752 = vsub.f32 2.0, %v1560
      %v1753 = vsub.f32 2.0, %v1561
      %v1754 = vsub.f32 2.0, %v1562
      %v1755 = vsub.f32 2.0, %v1563
      %v1756 = vsub.f32 2.0, %v1564
      %v1757 = vsub.f32 2.0, %v1565
      %v1758 = vsub.f32 2.0, %v1566
      %v1759 = vsub.f32 2.0, %v1567
      %v1760 = vsub.f32 2.0, %v1568
      %v1761 = vsub.f32 2.0, %v1569
      %v1762 = vsub.f32 2.0, %v1570
      %v1763 = vsub.f32 2.0, %v1571
      %v1764 = vsub.f32 2.0, %v1572
      %v1765 = vsub.f32 2.0, %v1573
      %v1766 = vsub.f32 2.0, %v1574
      %v1767 = vsub.f32 2.0, %v1575
      %v1768 = vsub.f32 2.0, %v1576
      %v1769 = vsub.f32 2.0, %v1577
      %v1770 = vsub.f32 2.0, %v1578
      %v1771 = vsub.f32 2.0, %v1579
      %v1772 = vsub.f32 2.0, %v1580
      %v1773 = vsub.f32 2.0, %v1581
      %v1774 = vsub.f32 2.0, %v1582
      %v1775 = vsub.f32 2.0, %v1583
      %v1776 = vsub.f32 2.0, %v1584
      %v1777 = vsub.f32 2.0, %v1585
      %v1778 = vsub.f32 2.0, %v1586
      %v1779 = vsub.f32 2.0, %v1587
      %v1780 = vsub.f32 2.0, %v1588
      %v1781 = vsub.f32 2.0, %v1589
      %v1782 = vsub.f32 2.0, %v1590
      %v1783 = vsub.f32 2.0, %v1591
      %v1784 = vsub.f32 2.0, %v1592
      %v1785 = vsub.f32 2.0, %v1593
      %v1786 = vsub.f32 2.0, %v1594
      %v1787 = vsub.f32 2.0, %v1595
      %v1788 = vsub.f32 2.0, %v1596
      %v1789 = vsub.f32 2.0, %v1597
      %v1790 = vsub.f32 2.0, %v1598
      %v1791 = vsub.f32 2.0, %v1599
      %v1792 = vsub.f32 2.0, %v1600
      %v1793 = vsub.f32 2.0, %v1601
      %v1794 = vsub.f32 2.0, %v1602
      %v1795 = vsub.f32 2.0, %v1603
      %v1796 = vsub.f32 2.0, %v1604
      %v1797 = vsub.f32 2.0, %v1605
      %v1798 = vsub.f32 2.0, %v1606
      %v1799 = vsub.f32 2.0, %v1607
      %v1800 = vsub.f32 2.0, %v1608
      %v1801 = vsub.f32 2.0, %v1609
      %v1802 = vsub.f32 2.0, %v1610
      %v1803 = vsub.f32 2.0, %v1611
      %v1804 = vsub.f32 2.0, %v1612
      %v1805 = vsub.f32 2.0, %v1613
      %v1806 = vsub.f32 2.0, %v1614
      %v1807 = vsub.f32 2.0, %v1615
      %v1808 = vsub.f32 2.0, %v1616
      %v1809 = vsub.f32 2.0, %v1617
      %v1810 = vsub.f32 2.0, %v1618
      %v1811 = vsub.f32 2.0, %v1619
      %v1812 = vsub.f32 2.0, %v1620
      %v1813 = vsub.f32 2.0, %v1621
      %v1814 = vsub.f32 2.0, %v1622
      %v1815 = vsub.f32 2.0, %v1623
      %v1816 = vsub.f32 2.0, %v1624
      %v1817 = vsub.f32 2.0, %v1625
      %v1818 = vsub.f32 2.0, %v1626
      %v1819 = vsub.f32 2.0, %v1627
      %v1820 = vsub.f32 2.0, %v1628
      %v1821 = vsub.f32 2.0, %v1629
      %v1822 = vsub.f32 2.0, %v1630
      %v1823 = vsub.f32 2.0, %v1631
      %v1824 = vsub.f32 2.0, %v1632
      %v1825 = vsub.f32 2.0, %v1633
      %v1826 = vsub.f32 2.0, %v1634
      %v1827 = vsub.f32 2.0, %v1635
      %v1828 = vsub.f32 2.0, %v1636
      %v1829 = vsub.f32 2.0, %v1637
      %v1830 = vsub.f32 2.0, %v1638
      %v1831 = vsub.f32 2.0, %v1639
      %v1832 = vsub.f32 2.0, %v1640
      %v1833 = vsub.f32 2.0, %v1641
      %v1834 = vsub.f32 2.0, %v1642
      %v1835 = vsub.f32 2.0, %v1643
      %v1836 = vsub.f32 2.0, %v1644
      %v1837 = vsub.f32 2.0, %v1645
      %v1838 = vsub.f32 2.0, %v1646
      %v1839 = vsub.f32 2.0, %v1647
      %v1840 = vsub.f32 2.0, %v1648
      %v1841 = vsub.f32 2.0, %v1649
      %v1842 = vsub.f32 2.0, %v1650
      %v1843 = vsub.f32 2.0, %v1651
      %v1844 = vsub.f32 2.0, %v1652
      %v1845 = vsub.f32 2.0, %v1653
      %v1846 = vsub.f32 2.0, %v1654
      %v1847 = vsub.f32 2.0, %v1655
      %v1848 = vsub.f32 2.0, %v1656
      %v1849 = vsub.f32 2.0, %v1657
      %v1850 = vsub.f32 2.0, %v1658
      %v1851 = vsub.f32 2.0, %v1659
      %v1852 = vsub.f32 2.0, %v1660
      %v1853 = vsub.f32 2.0, %v1661
      %v1854 = vsub.f32 2.0, %v1662
      %v1855 = vsub.f32 2.0, %v1663
      %v1856 = vsub.f32 2.0, %v1664
      %v1857 = vmul.f32 %v1281, %v1665
      %v1858 = vmul.f32 %v1282, %v1666
      %v1859 = vmul.f32 %v1283, %v1667
      %v1860 = vmul.f32 %v1284, %v1668
      %v1861 = vmul.f32 %v1285, %v1669
      %v1862 = vmul.f32 %v1286, %v1670
      %v1863 = vmul.f32 %v1287, %v1671
      %v1864 = vmul.f32 %v1288, %v1672
      %v1865 = vmul.f32 %v1289, %v1673
      %v1866 = vmul.f32 %v1290, %v1674
      %v1867 = vmul.f32 %v1291, %v1675
      %v1868 = vmul.f32 %v1292, %v1676
      %v1869 = vmul.f32 %v1293, %v1677
      %v1870 = vmul.f32 %v1294, %v1678
      %v1871 = vmul.f32 %v1295, %v1679
      %v1872 = vmul.f32 %v1296, %v1680
      %v1873 = vmul.f32 %v1297, %v1681
      %v1874 = vmul.f32 %v1298, %v1682
      %v1875 = vmul.f32 %v1299, %v1683
      %v1876 = vmul.f32 %v1300, %v1684
      %v1877 = vmul.f32 %v1301, %v1685
      %v1878 = vmul.f32 %v1302, %v1686
      %v1879 = vmul.f32 %v1303, %v1687
      %v1880 = vmul.f32 %v1304, %v1688
      %v1881 = vmul.f32 %v1305, %v1689
      %v1882 = vmul.f32 %v1306, %v1690
      %v1883 = vmul.f32 %v1307, %v1691
      %v1884 = vmul.f32 %v1308, %v1692
      %v1885 = vmul.f32 %v1309, %v1693
      %v1886 = vmul.f32 %v1310, %v1694
      %v1887 = vmul.f32 %v1311, %v1695
      %v1888 = vmul.f32 %v1312, %v1696
      %v1889 = vmul.f32 %v1313, %v1697
      %v1890 = vmul.f32 %v1314, %v1698
      %v1891 = vmul.f32 %v1315, %v1699
      %v1892 = vmul.f32 %v1316, %v1700
      %v1893 = vmul.f32 %v1317, %v1701
      %v1894 = vmul.f32 %v1318, %v1702
      %v1895 = vmul.f32 %v1319, %v1703
      %v1896 = vmul.f32 %v1320, %v1704
      %v1897 = vmul.f32 %v1321, %v1705
      %v1898 = vmul.f32 %v1322, %v1706
      %v1899 = vmul.f32 %v1323, %v1707
      %v1900 = vmul.f32 %v1324, %v1708
      %v1901 = vmul.f32 %v1325, %v1709
      %v1902 = vmul.f32 %v1326, %v1710
      %v1903 = vmul.f32 %v1327, %v1711
      %v1904 = vmul.f32 %v1328, %v1712
      %v1905 = vmul.f32 %v1329, %v1713
      %v1906 = vmul.f32 %v1330, %v1714
      %v1907 = vmul.f32 %v1331, %v1715
      %v1908 = vmul.f32 %v1332, %v1716
      %v1909 = vmul.f32 %v1333, %v1717
      %v1910 = vmul.f32 %v1334, %v1718
      %v1911 = vmul.f32 %v1335, %v1719
      %v1912 = vmul.f32 %v1336, %v1720
      %v1913 = vmul.f32 %v1337, %v1721
      %v1914 = vmul.f32 %v1338, %v1722
      %v1915 = vmul.f32 %v1339, %v1723
      %v1916 = vmul.f32 %v1340, %v1724
      %v1917 = vmul.f32 %v1341, %v1725
      %v1918 = vmul.f32 %v1342, %v1726
      %v1919 = vmul.f32 %v1343, %v1727
      %v1920 = vmul.f32 %v1344, %v1728
      %v1921 = vmul.f32 %v1345, %v1729
      %v1922 = vmul.f32 %v1346, %v1730
      %v1923 = vmul.f32 %v1347, %v1731
      %v1924 = vmul.f32 %v1348, %v1732
      %v1925 = vmul.f32 %v1349, %v1733
      %v1926 = vmul.f32 %v1350, %v1734
      %v1927 = vmul.f32 %v1351, %v1735
      %v1928 = vmul.f32 %v1352, %v1736
      %v1929 = vmul.f32 %v1353, %v1737
      %v1930 = vmul.f32 %v1354, %v1738
      %v1931 = vmul.f32 %v1355, %v1739
      %v1932 = vmul.f32 %v1356, %v1740
      %v1933 = vmul.f32 %v1357, %v1741
      %v1934 = vmul.f32 %v1358, %v1742
      %v1935 = vmul.f32 %v1359, %v1743
      %v1936 = vmul.f32 %v1360, %v1744
      %v1937 = vmul.f32 %v1361, %v1745
      %v1938 = vmul.f32 %v1362, %v1746
      %v1939 = vmul.f32 %v1363, %v1747
      %v1940 = vmul.f32 %v1364, %v1748
      %v1941 = vmul.f32 %v1365, %v1749
      %v1942 = vmul.f32 %v1366, %v1750
      %v1943 = vmul.f32 %v1367, %v1751
      %v1944 = vmul.f32 %v1368, %v1752
      %v1945 = vmul.f32 %v1369, %v1753
      %v1946 = vmul.f32 %v1370, %v1754
      %v1947 = vmul.f32 %v1371, %v1755
      %v1948 = vmul.f32 %v1372, %v1756
      %v1949 = vmul.f32 %v1373, %v1757
      %v1950 = vmul.f32 %v1374, %v1758
      %v1951 = vmul.f32 %v1375, %v1759
      %v1952 = vmul.f32 %v1376, %v1760
      %v1953 = vmul.f32 %v1377, %v1761
      %v1954 = vmul.f32 %v1378, %v1762
      %v1955 = vmul.f32 %v1379, %v1763
      %v1956 = vmul.f32 %v1380, %v1764
      %v1957 = vmul.f32 %v1381, %v1765
      %v1958 = vmul.f32 %v1382, %v1766
      %v1959 = vmul.f32 %v1383, %v1767
      %v1960 = vmul.f32 %v1384, %v1768
      %v1961 = vmul.f32 %v1385, %v1769
      %v1962 = vmul.f32 %v1386, %v1770
      %v1963 = vmul.f32 %v1387, %v1771
      %v1964 = vmul.f32 %v1388, %v1772
      %v1965 = vmul.f32 %v1389, %v1773
      %v1966 = vmul.f32 %v1390, %v1774
      %v1967 = vmul.f32 %v1391, %v1775
      %v1968 = vmul.f32 %v1392, %v1776
      %v1969 = vmul.f32 %v1393, %v1777
      %v1970 = vmul.f32 %v1394, %v1778
      %v1971 = vmul.f32 %v1395, %v1779
      %v1972 = vmul.f32 %v1396, %v1780
      %v1973 = vmul.f32 %v1397, %v1781
      %v1974 = vmul.f32 %v1398, %v1782
      %v1975 = vmul.f32 %v1399, %v1783
      %v1976 = vmul.f32 %v1400, %v1784
      %v1977 = vmul.f32 %v1401, %v1785
      %v1978 = vmul.f32 %v1402, %v1786
      %v1979 = vmul.f32 %v1403, %v1787
      %v1980 = vmul.f32 %v1404, %v1788
      %v1981 = vmul.f32 %v1405, %v1789
      %v1982 = vmul.f32 %v1406, %v1790
      %v1983 = vmul.f32 %v1407, %v1791
      %v1984 = vmul.f32 %v1408, %v1792
      %v1985 = vmul.f32 %v1409, %v1793
      %v1986 = vmul.f32 %v1410, %v1794
      %v1987 = vmul.f32 %v1411, %v1795
      %v1988 = vmul.f32 %v1412, %v1796
      %v1989 = vmul.f32 %v1413, %v1797
      %v1990 = vmul.f32 %v1414, %v1798
      %v1991 = vmul.f32 %v1415, %v1799
      %v1992 = vmul.f32 %v1416, %v1800
      %v1993 = vmul.f32 %v1417, %v1801
      %v1994 = vmul.f32 %v1418, %v1802
      %v1995 = vmul.f32 %v1419, %v1803
      %v1996 = vmul.f32 %v1420, %v1804
      %v1997 = vmul.f32 %v1421, %v1805
      %v1998 = vmul.f32 %v1422, %v1806
      %v1999 = vmul.f32 %v1423, %v1807
      %v2000 = vmul.f32 %v1424, %v1808
      %v2001 = vmul.f32 %v1425, %v1809
      %v2002 = vmul.f32 %v1426, %v1810
      %v2003 = vmul.f32 %v1427, %v1811
      %v2004 = vmul.f32 %v1428, %v1812
      %v2005 = vmul.f32 %v1429, %v1813
      %v2006 = vmul.f32 %v1430, %v1814
      %v2007 = vmul.f32 %v1431, %v1815
      %v2008 = vmul.f32 %v1432, %v1816
      %v2009 = vmul.f32 %v1433, %v1817
      %v2010 = vmul.f32 %v1434, %v1818
      %v2011 = vmul.f32 %v1435, %v1819
      %v2012 = vmul.f32 %v1436, %v1820
      %v2013 = vmul.f32 %v1437, %v1821
      %v2014 = vmul.f32 %v1438, %v1822
      %v2015 = vmul.f32 %v1439, %v1823
      %v2016 = vmul.f32 %v1440, %v1824
      %v2017 = vmul.f32 %v1441, %v1825
      %v2018 = vmul.f32 %v1442, %v1826
      %v2019 = vmul.f32 %v1443, %v1827
      %v2020 = vmul.f32 %v1444, %v1828
      %v2021 = vmul.f32 %v1445, %v1829
      %v2022 = vmul.f32 %v1446, %v1830
      %v2023 = vmul.f32 %v1447, %v1831
      %v2024 = vmul.f32 %v1448, %v1832
      %v2025 = vmul.f32 %v1449, %v1833
      %v2026 = vmul.f32 %v1450, %v1834
      %v2027 = vmul.f32 %v1451, %v1835
      %v2028 = vmul.f32 %v1452, %v1836
      %v2029 = vmul.f32 %v1453, %v1837
      %v2030 = vmul.f32 %v1454, %v1838
      %v2031 = vmul.f32 %v1455, %v1839
      %v2032 = vmul.f32 %v1456, %v1840
      %v2033 = vmul.f32 %v1457, %v1841
      %v2034 = vmul.f32 %v1458, %v1842
      %v2035 = vmul.f32 %v1459, %v1843
      %v2036 = vmul.f32 %v1460, %v1844
      %v2037 = vmul.f32 %v1461, %v1845
      %v2038 = vmul.f32 %v1462, %v1846
      %v2039 = vmul.f32 %v1463, %v1847
      %v2040 = vmul.f32 %v1464, %v1848
      %v2041 = vmul.f32 %v1465, %v1849
      %v2042 = vmul.f32 %v1466, %v1850
      %v2043 = vmul.f32 %v1467, %v1851
      %v2044 = vmul.f32 %v1468, %v1852
      %v2045 = vmul.f32 %v1469, %v1853
      %v2046 = vmul.f32 %v1470, %v1854
      %v2047 = vmul.f32 %v1471, %v1855
      %v2048 = vmul.f32 %v1472, %v1856
      %v2049 = vmul.f32 %v571, %v1857
      %v2050 = vmul.f32 %v572, %v1858
      %v2051 = vmul.f32 %v573, %v1859
      %v2052 = vmul.f32 %v571, %v1860
      %v2053 = vmul.f32 %v572, %v1861
      %v2054 = vmul.f32 %v573, %v1862
      %v2055 = vmul.f32 %v571, %v1863
      %v2056 = vmul.f32 %v572, %v1864
      %v2057 = vmul.f32 %v573, %v1865
      %v2058 = vmul.f32 %v571, %v1866
      %v2059 = vmul.f32 %v572, %v1867
      %v2060 = vmul.f32 %v573, %v1868
      %v2061 = vmul.f32 %v571, %v1869
      %v2062 = vmul.f32 %v572, %v1870
      %v2063 = vmul.f32 %v573, %v1871
      %v2064 = vmul.f32 %v571, %v1872
      %v2065 = vmul.f32 %v572, %v1873
      %v2066 = vmul.f32 %v573, %v1874
      %v2067 = vmul.f32 %v571, %v1875
      %v2068 = vmul.f32 %v572, %v1876
      %v2069 = vmul.f32 %v573, %v1877
      %v2070 = vmul.f32 %v571, %v1878
      %v2071 = vmul.f32 %v572, %v1879
      %v2072 = vmul.f32 %v573, %v1880
      %v2073 = vmul.f32 %v571, %v1881
      %v2074 = vmul.f32 %v572, %v1882
      %v2075 = vmul.f32 %v573, %v1883
      %v2076 = vmul.f32 %v571, %v1884
      %v2077 = vmul.f32 %v572, %v1885
      %v2078 = vmul.f32 %v573, %v1886
      %v2079 = vmul.f32 %v571, %v1887
      %v2080 = vmul.f32 %v572, %v1888
      %v2081 = vmul.f32 %v573, %v1889
      %v2082 = vmul.f32 %v571, %v1890
      %v2083 = vmul.f32 %v572, %v1891
      %v2084 = vmul.f32 %v573, %v1892
      %v2085 = vmul.f32 %v571, %v1893
      %v2086 = vmul.f32 %v572, %v1894
      %v2087 = vmul.f32 %v573, %v1895
      %v2088 = vmul.f32 %v571, %v1896
      %v2089 = vmul.f32 %v572, %v1897
      %v2090 = vmul.f32 %v573, %v1898
      %v2091 = vmul.f32 %v571, %v1899
      %v2092 = vmul.f32 %v572, %v1900
      %v2093 = vmul.f32 %v573, %v1901
      %v2094 = vmul.f32 %v571, %v1902
      %v2095 = vmul.f32 %v572, %v1903
      %v2096 = vmul.f32 %v573, %v1904
      %v2097 = vmul.f32 %v571, %v1905
      %v2098 = vmul.f32 %v572, %v1906
      %v2099 = vmul.f32 %v573, %v1907
      %v2100 = vmul.f32 %v571, %v1908
      %v2101 = vmul.f32 %v572, %v1909
      %v2102 = vmul.f32 %v573, %v1910
      %v2103 = vmul.f32 %v571, %v1911
      %v2104 = vmul.f32 %v572, %v1912
      %v2105 = vmul.f32 %v573, %v1913
      %v2106 = vmul.f32 %v571, %v1914
      %v2107 = vmul.f32 %v572, %v1915
      %v2108 = vmul.f32 %v573, %v1916
      %v2109 = vmul.f32 %v571, %v1917
      %v2110 = vmul.f32 %v572, %v1918
      %v2111 = vmul.f32 %v573, %v1919
      %v2112 = vmul.f32 %v571, %v1920
      %v2113 = vmul.f32 %v572, %v1921
      %v2114 = vmul.f32 %v573, %v1922
      %v2115 = vmul.f32 %v571, %v1923
      %v2116 = vmul.f32 %v572, %v1924
      %v2117 = vmul.f32 %v573, %v1925
      %v2118 = vmul.f32 %v571, %v1926
      %v2119 = vmul.f32 %v572, %v1927
      %v2120 = vmul.f32 %v573, %v1928
      %v2121 = vmul.f32 %v571, %v1929
      %v2122 = vmul.f32 %v572, %v1930
      %v2123 = vmul.f32 %v573, %v1931
      %v2124 = vmul.f32 %v571, %v1932
      %v2125 = vmul.f32 %v572, %v1933
      %v2126 = vmul.f32 %v573, %v1934
      %v2127 = vmul.f32 %v571, %v1935
      %v2128 = vmul.f32 %v572, %v1936
      %v2129 = vmul.f32 %v573, %v1937
      %v2130 = vmul.f32 %v571, %v1938
      %v2131 = vmul.f32 %v572, %v1939
      %v2132 = vmul.f32 %v573, %v1940
      %v2133 = vmul.f32 %v571, %v1941
      %v2134 = vmul.f32 %v572, %v1942
      %v2135 = vmul.f32 %v573, %v1943
      %v2136 = vmul.f32 %v571, %v1944
      %v2137 = vmul.f32 %v572, %v1945
      %v2138 = vmul.f32 %v573, %v1946
      %v2139 = vmul.f32 %v571, %v1947
      %v2140 = vmul.f32 %v572, %v1948
      %v2141 = vmul.f32 %v573, %v1949
      %v2142 = vmul.f32 %v571, %v1950
      %v2143 = vmul.f32 %v572, %v1951
      %v2144 = vmul.f32 %v573, %v1952
      %v2145 = vmul.f32 %v571, %v1953
      %v2146 = vmul.f32 %v572, %v1954
      %v2147 = vmul.f32 %v573, %v1955
      %v2148 = vmul.f32 %v571, %v1956
      %v2149 = vmul.f32 %v572, %v1957
      %v2150 = vmul.f32 %v573, %v1958
      %v2151 = vmul.f32 %v571, %v1959
      %v2152 = vmul.f32 %v572, %v1960
      %v2153 = vmul.f32 %v573, %v1961
      %v2154 = vmul.f32 %v571, %v1962
      %v2155 = vmul.f32 %v572, %v1963
      %v2156 = vmul.f32 %v573, %v1964
      %v2157 = vmul.f32 %v571, %v1965
      %v2158 = vmul.f32 %v572, %v1966
      %v2159 = vmul.f32 %v573, %v1967
      %v2160 = vmul.f32 %v571, %v1968
      %v2161 = vmul.f32 %v572, %v1969
      %v2162 = vmul.f32 %v573, %v1970
      %v2163 = vmul.f32 %v571, %v1971
      %v2164 = vmul.f32 %v572, %v1972
      %v2165 = vmul.f32 %v573, %v1973
      %v2166 = vmul.f32 %v571, %v1974
      %v2167 = vmul.f32 %v572, %v1975
      %v2168 = vmul.f32 %v573, %v1976
      %v2169 = vmul.f32 %v571, %v1977
      %v2170 = vmul.f32 %v572, %v1978
      %v2171 = vmul.f32 %v573, %v1979
      %v2172 = vmul.f32 %v571, %v1980
      %v2173 = vmul.f32 %v572, %v1981
      %v2174 = vmul.f32 %v573, %v1982
      %v2175 = vmul.f32 %v571, %v1983
      %v2176 = vmul.f32 %v572, %v1984
      %v2177 = vmul.f32 %v573, %v1985
      %v2178 = vmul.f32 %v571, %v1986
      %v2179 = vmul.f32 %v572, %v1987
      %v2180 = vmul.f32 %v573, %v1988
      %v2181 = vmul.f32 %v571, %v1989
      %v2182 = vmul.f32 %v572, %v1990
      %v2183 = vmul.f32 %v573, %v1991
      %v2184 = vmul.f32 %v571, %v1992
      %v2185 = vmul.f32 %v572, %v1993
      %v2186 = vmul.f32 %v573, %v1994
      %v2187 = vmul.f32 %v571, %v1995
      %v2188 = vmul.f32 %v572, %v1996
      %v2189 = vmul.f32 %v573, %v1997
      %v2190 = vmul.f32 %v571, %v1998
      %v2191 = vmul.f32 %v572, %v1999
      %v2192 = vmul.f32 %v573, %v2000
      %v2193 = vmul.f32 %v571, %v2001
      %v2194 = vmul.f32 %v572, %v2002
      %v2195 = vmul.f32 %v573, %v2003
      %v2196 = vmul.f32 %v571, %v2004
      %v2197 = vmul.f32 %v572, %v2005
      %v2198 = vmul.f32 %v573, %v2006
      %v2199 = vmul.f32 %v571, %v2007
      %v2200 = vmul.f32 %v572, %v2008
      %v2201 = vmul.f32 %v573, %v2009
      %v2202 = vmul.f32 %v571, %v2010
      %v2203 = vmul.f32 %v572, %v2011
      %v2204 = vmul.f32 %v573, %v2012
      %v2205 = vmul.f32 %v571, %v2013
      %v2206 = vmul.f32 %v572, %v2014
      %v2207 = vmul.f32 %v573, %v2015
      %v2208 = vmul.f32 %v571, %v2016
      %v2209 = vmul.f32 %v572, %v2017
      %v2210 = vmul.f32 %v573, %v2018
      %v2211 = vmul.f32 %v571, %v2019
      %v2212 = vmul.f32 %v572, %v2020
      %v2213 = vmul.f32 %v573, %v2021
      %v2214 = vmul.f32 %v571, %v2022
      %v2215 = vmul.f32 %v572, %v2023
      %v2216 = vmul.f32 %v573, %v2024
      %v2217 = vmul.f32 %v571, %v2025
      %v2218 = vmul.f32 %v572, %v2026
      %v2219 = vmul.f32 %v573, %v2027
      %v2220 = vmul.f32 %v571, %v2028
      %v2221 = vmul.f32 %v572, %v2029
      %v2222 = vmul.f32 %v573, %v2030
      %v2223 = vmul.f32 %v571, %v2031
      %v2224 = vmul.f32 %v572, %v2032
      %v2225 = vmul.f32 %v573, %v2033
      %v2226 = vmul.f32 %v571, %v2034
      %v2227 = vmul.f32 %v572, %v2035
      %v2228 = vmul.f32 %v573, %v2036
      %v2229 = vmul.f32 %v571, %v2037
      %v2230 = vmul.f32 %v572, %v2038
      %v2231 = vmul.f32 %v573, %v2039
      %v2232 = vmul.f32 %v571, %v2040
      %v2233 = vmul.f32 %v572, %v2041
      %v2234 = vmul.f32 %v573, %v2042
      %v2235 = vmul.f32 %v571, %v2043
      %v2236 = vmul.f32 %v572, %v2044
      %v2237 = vmul.f32 %v573, %v2045
      %v2238 = vmul.f32 %v571, %v2046
      %v2239 = vmul.f32 %v572, %v2047
      %v2240 = vmul.f32 %v573, %v2048
      %v2305 = vlaneseq
      %v2306 = vshrl.u32 %v2305, 7
      %v2307 = vsub.s32 0, %v2306
      %v2308 = vrot.slane %v638, %v2307
      %v2309 = vlaneseq
      %v2310 = vshrl.u32 %v2309, 7
      %v2311 = vsub.s32 2, %v2310
      %v2312 = vrot.slane %v638, %v2311
      %v2313 = vlaneseq
      %v2314 = vshrl.u32 %v2313, 7
      %v2315 = vsub.s32 4, %v2314
      %v2316 = vrot.slane %v638, %v2315
      %v2317 = vlaneseq
      %v2318 = vshrl.u32 %v2317, 7
      %v2319 = vsub.s32 0, %v2318
      %v2320 = vrot.slane %v639, %v2319
      %v2321 = vlaneseq
      %v2322 = vshrl.u32 %v2321, 7
      %v2323 = vsub.s32 2, %v2322
      %v2324 = vrot.slane %v639, %v2323
      %v2325 = vlaneseq
      %v2326 = vshrl.u32 %v2325, 7
      %v2327 = vsub.s32 4, %v2326
      %v2328 = vrot.slane %v639, %v2327
      %v2329 = vlaneseq
      %v2330 = vshrl.u32 %v2329, 7
      %v2331 = vsub.s32 0, %v2330
      %v2332 = vrot.slane %v640, %v2331
      %v2333 = vlaneseq
      %v2334 = vshrl.u32 %v2333, 7
      %v2335 = vsub.s32 2, %v2334
      %v2336 = vrot.slane %v640, %v2335
      %v2337 = vlaneseq
      %v2338 = vshrl.u32 %v2337, 7
      %v2339 = vsub.s32 4, %v2338
      %v2340 = vrot.slane %v640, %v2339
      %v2341 = vlaneseq
      %v2342 = vshrl.u32 %v2341, 7
      %v2343 = vsub.s32 0, %v2342
      %v2344 = vrot.slane %v641, %v2343
      %v2345 = vlaneseq
      %v2346 = vshrl.u32 %v2345, 7
      %v2347 = vsub.s32 2, %v2346
      %v2348 = vrot.slane %v641, %v2347
      %v2349 = vlaneseq
      %v2350 = vshrl.u32 %v2349, 7
      %v2351 = vsub.s32 4, %v2350
      %v2352 = vrot.slane %v641, %v2351
      %v2353 = vlaneseq
      %v2354 = vshrl.u32 %v2353, 7
      %v2355 = vsub.s32 0, %v2354
      %v2356 = vrot.slane %v642, %v2355
      %v2357 = vlaneseq
      %v2358 = vshrl.u32 %v2357, 7
      %v2359 = vsub.s32 2, %v2358
      %v2360 = vrot.slane %v642, %v2359
      %v2361 = vlaneseq
      %v2362 = vshrl.u32 %v2361, 7
      %v2363 = vsub.s32 4, %v2362
      %v2364 = vrot.slane %v642, %v2363
      %v2365 = vlaneseq
      %v2366 = vshrl.u32 %v2365, 7
      %v2367 = vsub.s32 0, %v2366
      %v2368 = vrot.slane %v643, %v2367
      %v2369 = vlaneseq
      %v2370 = vshrl.u32 %v2369, 7
      %v2371 = vsub.s32 2, %v2370
      %v2372 = vrot.slane %v643, %v2371
      %v2373 = vlaneseq
      %v2374 = vshrl.u32 %v2373, 7
      %v2375 = vsub.s32 4, %v2374
      %v2376 = vrot.slane %v643, %v2375
      %v2377 = vlaneseq
      %v2378 = vshrl.u32 %v2377, 7
      %v2379 = vsub.s32 0, %v2378
      %v2380 = vrot.slane %v644, %v2379
      %v2381 = vlaneseq
      %v2382 = vshrl.u32 %v2381, 7
      %v2383 = vsub.s32 2, %v2382
      %v2384 = vrot.slane %v644, %v2383
      %v2385 = vlaneseq
      %v2386 = vshrl.u32 %v2385, 7
      %v2387 = vsub.s32 4, %v2386
      %v2388 = vrot.slane %v644, %v2387
      %v2389 = vlaneseq
      %v2390 = vshrl.u32 %v2389, 7
      %v2391 = vsub.s32 0, %v2390
      %v2392 = vrot.slane %v645, %v2391
      %v2393 = vlaneseq
      %v2394 = vshrl.u32 %v2393, 7
      %v2395 = vsub.s32 2, %v2394
      %v2396 = vrot.slane %v645, %v2395
      %v2397 = vlaneseq
      %v2398 = vshrl.u32 %v2397, 7
      %v2399 = vsub.s32 4, %v2398
      %v2400 = vrot.slane %v645, %v2399
      %v2401 = vlaneseq
      %v2402 = vshrl.u32 %v2401, 7
      %v2403 = vsub.s32 0, %v2402
      %v2404 = vrot.slane %v646, %v2403
      %v2405 = vlaneseq
      %v2406 = vshrl.u32 %v2405, 7
      %v2407 = vsub.s32 2, %v2406
      %v2408 = vrot.slane %v646, %v2407
      %v2409 = vlaneseq
      %v2410 = vshrl.u32 %v2409, 7
      %v2411 = vsub.s32 4, %v2410
      %v2412 = vrot.slane %v646, %v2411
      %v2413 = vlaneseq
      %v2414 = vshrl.u32 %v2413, 7
      %v2415 = vsub.s32 0, %v2414
      %v2416 = vrot.slane %v647, %v2415
      %v2417 = vlaneseq
      %v2418 = vshrl.u32 %v2417, 7
      %v2419 = vsub.s32 2, %v2418
      %v2420 = vrot.slane %v647, %v2419
      %v2421 = vlaneseq
      %v2422 = vshrl.u32 %v2421, 7
      %v2423 = vsub.s32 4, %v2422
      %v2424 = vrot.slane %v647, %v2423
      %v2425 = vlaneseq
      %v2426 = vshrl.u32 %v2425, 7
      %v2427 = vsub.s32 0, %v2426
      %v2428 = vrot.slane %v648, %v2427
      %v2429 = vlaneseq
      %v2430 = vshrl.u32 %v2429, 7
      %v2431 = vsub.s32 2, %v2430
      %v2432 = vrot.slane %v648, %v2431
      %v2433 = vlaneseq
      %v2434 = vshrl.u32 %v2433, 7
      %v2435 = vsub.s32 4, %v2434
      %v2436 = vrot.slane %v648, %v2435
      %v2437 = vlaneseq
      %v2438 = vshrl.u32 %v2437, 7
      %v2439 = vsub.s32 0, %v2438
      %v2440 = vrot.slane %v649, %v2439
      %v2441 = vlaneseq
      %v2442 = vshrl.u32 %v2441, 7
      %v2443 = vsub.s32 2, %v2442
      %v2444 = vrot.slane %v649, %v2443
      %v2445 = vlaneseq
      %v2446 = vshrl.u32 %v2445, 7
      %v2447 = vsub.s32 4, %v2446
      %v2448 = vrot.slane %v649, %v2447
      %v2449 = vlaneseq
      %v2450 = vshrl.u32 %v2449, 7
      %v2451 = vsub.s32 0, %v2450
      %v2452 = vrot.slane %v650, %v2451
      %v2453 = vlaneseq
      %v2454 = vshrl.u32 %v2453, 7
      %v2455 = vsub.s32 2, %v2454
      %v2456 = vrot.slane %v650, %v2455
      %v2457 = vlaneseq
      %v2458 = vshrl.u32 %v2457, 7
      %v2459 = vsub.s32 4, %v2458
      %v2460 = vrot.slane %v650, %v2459
      %v2461 = vlaneseq
      %v2462 = vshrl.u32 %v2461, 7
      %v2463 = vsub.s32 0, %v2462
      %v2464 = vrot.slane %v651, %v2463
      %v2465 = vlaneseq
      %v2466 = vshrl.u32 %v2465, 7
      %v2467 = vsub.s32 2, %v2466
      %v2468 = vrot.slane %v651, %v2467
      %v2469 = vlaneseq
      %v2470 = vshrl.u32 %v2469, 7
      %v2471 = vsub.s32 4, %v2470
      %v2472 = vrot.slane %v651, %v2471
      %v2473 = vlaneseq
      %v2474 = vshrl.u32 %v2473, 7
      %v2475 = vsub.s32 0, %v2474
      %v2476 = vrot.slane %v652, %v2475
      %v2477 = vlaneseq
      %v2478 = vshrl.u32 %v2477, 7
      %v2479 = vsub.s32 2, %v2478
      %v2480 = vrot.slane %v652, %v2479
      %v2481 = vlaneseq
      %v2482 = vshrl.u32 %v2481, 7
      %v2483 = vsub.s32 4, %v2482
      %v2484 = vrot.slane %v652, %v2483
      %v2485 = vlaneseq
      %v2486 = vshrl.u32 %v2485, 7
      %v2487 = vsub.s32 0, %v2486
      %v2488 = vrot.slane %v653, %v2487
      %v2489 = vlaneseq
      %v2490 = vshrl.u32 %v2489, 7
      %v2491 = vsub.s32 2, %v2490
      %v2492 = vrot.slane %v653, %v2491
      %v2493 = vlaneseq
      %v2494 = vshrl.u32 %v2493, 7
      %v2495 = vsub.s32 4, %v2494
      %v2496 = vrot.slane %v653, %v2495
      %v2497 = vlaneseq
      %v2498 = vshrl.u32 %v2497, 7
      %v2499 = vsub.s32 0, %v2498
      %v2500 = vrot.slane %v654, %v2499
      %v2501 = vlaneseq
      %v2502 = vshrl.u32 %v2501, 7
      %v2503 = vsub.s32 2, %v2502
      %v2504 = vrot.slane %v654, %v2503
      %v2505 = vlaneseq
      %v2506 = vshrl.u32 %v2505, 7
      %v2507 = vsub.s32 4, %v2506
      %v2508 = vrot.slane %v654, %v2507
      %v2509 = vlaneseq
      %v2510 = vshrl.u32 %v2509, 7
      %v2511 = vsub.s32 0, %v2510
      %v2512 = vrot.slane %v655, %v2511
      %v2513 = vlaneseq
      %v2514 = vshrl.u32 %v2513, 7
      %v2515 = vsub.s32 2, %v2514
      %v2516 = vrot.slane %v655, %v2515
      %v2517 = vlaneseq
      %v2518 = vshrl.u32 %v2517, 7
      %v2519 = vsub.s32 4, %v2518
      %v2520 = vrot.slane %v655, %v2519
      %v2521 = vlaneseq
      %v2522 = vshrl.u32 %v2521, 7
      %v2523 = vsub.s32 0, %v2522
      %v2524 = vrot.slane %v656, %v2523
      %v2525 = vlaneseq
      %v2526 = vshrl.u32 %v2525, 7
      %v2527 = vsub.s32 2, %v2526
      %v2528 = vrot.slane %v656, %v2527
      %v2529 = vlaneseq
      %v2530 = vshrl.u32 %v2529, 7
      %v2531 = vsub.s32 4, %v2530
      %v2532 = vrot.slane %v656, %v2531
      %v2533 = vlaneseq
      %v2534 = vshrl.u32 %v2533, 7
      %v2535 = vsub.s32 0, %v2534
      %v2536 = vrot.slane %v657, %v2535
      %v2537 = vlaneseq
      %v2538 = vshrl.u32 %v2537, 7
      %v2539 = vsub.s32 2, %v2538
      %v2540 = vrot.slane %v657, %v2539
      %v2541 = vlaneseq
      %v2542 = vshrl.u32 %v2541, 7
      %v2543 = vsub.s32 4, %v2542
      %v2544 = vrot.slane %v657, %v2543
      %v2545 = vlaneseq
      %v2546 = vshrl.u32 %v2545, 7
      %v2547 = vsub.s32 0, %v2546
      %v2548 = vrot.slane %v658, %v2547
      %v2549 = vlaneseq
      %v2550 = vshrl.u32 %v2549, 7
      %v2551 = vsub.s32 2, %v2550
      %v2552 = vrot.slane %v658, %v2551
      %v2553 = vlaneseq
      %v2554 = vshrl.u32 %v2553, 7
      %v2555 = vsub.s32 4, %v2554
      %v2556 = vrot.slane %v658, %v2555
      %v2557 = vlaneseq
      %v2558 = vshrl.u32 %v2557, 7
      %v2559 = vsub.s32 0, %v2558
      %v2560 = vrot.slane %v659, %v2559
      %v2561 = vlaneseq
      %v2562 = vshrl.u32 %v2561, 7
      %v2563 = vsub.s32 2, %v2562
      %v2564 = vrot.slane %v659, %v2563
      %v2565 = vlaneseq
      %v2566 = vshrl.u32 %v2565, 7
      %v2567 = vsub.s32 4, %v2566
      %v2568 = vrot.slane %v659, %v2567
      %v2569 = vlaneseq
      %v2570 = vshrl.u32 %v2569, 7
      %v2571 = vsub.s32 0, %v2570
      %v2572 = vrot.slane %v660, %v2571
      %v2573 = vlaneseq
      %v2574 = vshrl.u32 %v2573, 7
      %v2575 = vsub.s32 2, %v2574
      %v2576 = vrot.slane %v660, %v2575
      %v2577 = vlaneseq
      %v2578 = vshrl.u32 %v2577, 7
      %v2579 = vsub.s32 4, %v2578
      %v2580 = vrot.slane %v660, %v2579
      %v2581 = vlaneseq
      %v2582 = vshrl.u32 %v2581, 7
      %v2583 = vsub.s32 0, %v2582
      %v2584 = vrot.slane %v661, %v2583
      %v2585 = vlaneseq
      %v2586 = vshrl.u32 %v2585, 7
      %v2587 = vsub.s32 2, %v2586
      %v2588 = vrot.slane %v661, %v2587
      %v2589 = vlaneseq
      %v2590 = vshrl.u32 %v2589, 7
      %v2591 = vsub.s32 4, %v2590
      %v2592 = vrot.slane %v661, %v2591
      %v2593 = vlaneseq
      %v2594 = vshrl.u32 %v2593, 7
      %v2595 = vsub.s32 0, %v2594
      %v2596 = vrot.slane %v662, %v2595
      %v2597 = vlaneseq
      %v2598 = vshrl.u32 %v2597, 7
      %v2599 = vsub.s32 2, %v2598
      %v2600 = vrot.slane %v662, %v2599
      %v2601 = vlaneseq
      %v2602 = vshrl.u32 %v2601, 7
      %v2603 = vsub.s32 4, %v2602
      %v2604 = vrot.slane %v662, %v2603
      %v2605 = vlaneseq
      %v2606 = vshrl.u32 %v2605, 7
      %v2607 = vsub.s32 0, %v2606
      %v2608 = vrot.slane %v663, %v2607
      %v2609 = vlaneseq
      %v2610 = vshrl.u32 %v2609, 7
      %v2611 = vsub.s32 2, %v2610
      %v2612 = vrot.slane %v663, %v2611
      %v2613 = vlaneseq
      %v2614 = vshrl.u32 %v2613, 7
      %v2615 = vsub.s32 4, %v2614
      %v2616 = vrot.slane %v663, %v2615
      %v2617 = vlaneseq
      %v2618 = vshrl.u32 %v2617, 7
      %v2619 = vsub.s32 0, %v2618
      %v2620 = vrot.slane %v664, %v2619
      %v2621 = vlaneseq
      %v2622 = vshrl.u32 %v2621, 7
      %v2623 = vsub.s32 2, %v2622
      %v2624 = vrot.slane %v664, %v2623
      %v2625 = vlaneseq
      %v2626 = vshrl.u32 %v2625, 7
      %v2627 = vsub.s32 4, %v2626
      %v2628 = vrot.slane %v664, %v2627
      %v2629 = vlaneseq
      %v2630 = vshrl.u32 %v2629, 7
      %v2631 = vsub.s32 0, %v2630
      %v2632 = vrot.slane %v665, %v2631
      %v2633 = vlaneseq
      %v2634 = vshrl.u32 %v2633, 7
      %v2635 = vsub.s32 2, %v2634
      %v2636 = vrot.slane %v665, %v2635
      %v2637 = vlaneseq
      %v2638 = vshrl.u32 %v2637, 7
      %v2639 = vsub.s32 4, %v2638
      %v2640 = vrot.slane %v665, %v2639
      %v2641 = vlaneseq
      %v2642 = vshrl.u32 %v2641, 7
      %v2643 = vsub.s32 0, %v2642
      %v2644 = vrot.slane %v666, %v2643
      %v2645 = vlaneseq
      %v2646 = vshrl.u32 %v2645, 7
      %v2647 = vsub.s32 2, %v2646
      %v2648 = vrot.slane %v666, %v2647
      %v2649 = vlaneseq
      %v2650 = vshrl.u32 %v2649, 7
      %v2651 = vsub.s32 4, %v2650
      %v2652 = vrot.slane %v666, %v2651
      %v2653 = vlaneseq
      %v2654 = vshrl.u32 %v2653, 7
      %v2655 = vsub.s32 0, %v2654
      %v2656 = vrot.slane %v667, %v2655
      %v2657 = vlaneseq
      %v2658 = vshrl.u32 %v2657, 7
      %v2659 = vsub.s32 2, %v2658
      %v2660 = vrot.slane %v667, %v2659
      %v2661 = vlaneseq
      %v2662 = vshrl.u32 %v2661, 7
      %v2663 = vsub.s32 4, %v2662
      %v2664 = vrot.slane %v667, %v2663
      %v2665 = vlaneseq
      %v2666 = vshrl.u32 %v2665, 7
      %v2667 = vsub.s32 0, %v2666
      %v2668 = vrot.slane %v668, %v2667
      %v2669 = vlaneseq
      %v2670 = vshrl.u32 %v2669, 7
      %v2671 = vsub.s32 2, %v2670
      %v2672 = vrot.slane %v668, %v2671
      %v2673 = vlaneseq
      %v2674 = vshrl.u32 %v2673, 7
      %v2675 = vsub.s32 4, %v2674
      %v2676 = vrot.slane %v668, %v2675
      %v2677 = vlaneseq
      %v2678 = vshrl.u32 %v2677, 7
      %v2679 = vsub.s32 0, %v2678
      %v2680 = vrot.slane %v669, %v2679
      %v2681 = vlaneseq
      %v2682 = vshrl.u32 %v2681, 7
      %v2683 = vsub.s32 2, %v2682
      %v2684 = vrot.slane %v669, %v2683
      %v2685 = vlaneseq
      %v2686 = vshrl.u32 %v2685, 7
      %v2687 = vsub.s32 4, %v2686
      %v2688 = vrot.slane %v669, %v2687
      %v2689 = vlaneseq
      %v2690 = vshrl.u32 %v2689, 7
      %v2691 = vsub.s32 0, %v2690
      %v2692 = vrot.slane %v670, %v2691
      %v2693 = vlaneseq
      %v2694 = vshrl.u32 %v2693, 7
      %v2695 = vsub.s32 2, %v2694
      %v2696 = vrot.slane %v670, %v2695
      %v2697 = vlaneseq
      %v2698 = vshrl.u32 %v2697, 7
      %v2699 = vsub.s32 4, %v2698
      %v2700 = vrot.slane %v670, %v2699
      %v2701 = vlaneseq
      %v2702 = vshrl.u32 %v2701, 7
      %v2703 = vsub.s32 0, %v2702
      %v2704 = vrot.slane %v671, %v2703
      %v2705 = vlaneseq
      %v2706 = vshrl.u32 %v2705, 7
      %v2707 = vsub.s32 2, %v2706
      %v2708 = vrot.slane %v671, %v2707
      %v2709 = vlaneseq
      %v2710 = vshrl.u32 %v2709, 7
      %v2711 = vsub.s32 4, %v2710
      %v2712 = vrot.slane %v671, %v2711
      %v2713 = vlaneseq
      %v2714 = vshrl.u32 %v2713, 7
      %v2715 = vsub.s32 0, %v2714
      %v2716 = vrot.slane %v672, %v2715
      %v2717 = vlaneseq
      %v2718 = vshrl.u32 %v2717, 7
      %v2719 = vsub.s32 2, %v2718
      %v2720 = vrot.slane %v672, %v2719
      %v2721 = vlaneseq
      %v2722 = vshrl.u32 %v2721, 7
      %v2723 = vsub.s32 4, %v2722
      %v2724 = vrot.slane %v672, %v2723
      %v2725 = vlaneseq
      %v2726 = vshrl.u32 %v2725, 7
      %v2727 = vsub.s32 0, %v2726
      %v2728 = vrot.slane %v673, %v2727
      %v2729 = vlaneseq
      %v2730 = vshrl.u32 %v2729, 7
      %v2731 = vsub.s32 2, %v2730
      %v2732 = vrot.slane %v673, %v2731
      %v2733 = vlaneseq
      %v2734 = vshrl.u32 %v2733, 7
      %v2735 = vsub.s32 4, %v2734
      %v2736 = vrot.slane %v673, %v2735
      %v2737 = vlaneseq
      %v2738 = vshrl.u32 %v2737, 7
      %v2739 = vsub.s32 0, %v2738
      %v2740 = vrot.slane %v674, %v2739
      %v2741 = vlaneseq
      %v2742 = vshrl.u32 %v2741, 7
      %v2743 = vsub.s32 2, %v2742
      %v2744 = vrot.slane %v674, %v2743
      %v2745 = vlaneseq
      %v2746 = vshrl.u32 %v2745, 7
      %v2747 = vsub.s32 4, %v2746
      %v2748 = vrot.slane %v674, %v2747
      %v2749 = vlaneseq
      %v2750 = vshrl.u32 %v2749, 7
      %v2751 = vsub.s32 0, %v2750
      %v2752 = vrot.slane %v675, %v2751
      %v2753 = vlaneseq
      %v2754 = vshrl.u32 %v2753, 7
      %v2755 = vsub.s32 2, %v2754
      %v2756 = vrot.slane %v675, %v2755
      %v2757 = vlaneseq
      %v2758 = vshrl.u32 %v2757, 7
      %v2759 = vsub.s32 4, %v2758
      %v2760 = vrot.slane %v675, %v2759
      %v2761 = vlaneseq
      %v2762 = vshrl.u32 %v2761, 7
      %v2763 = vsub.s32 0, %v2762
      %v2764 = vrot.slane %v676, %v2763
      %v2765 = vlaneseq
      %v2766 = vshrl.u32 %v2765, 7
      %v2767 = vsub.s32 2, %v2766
      %v2768 = vrot.slane %v676, %v2767
      %v2769 = vlaneseq
      %v2770 = vshrl.u32 %v2769, 7
      %v2771 = vsub.s32 4, %v2770
      %v2772 = vrot.slane %v676, %v2771
      %v2773 = vlaneseq
      %v2774 = vshrl.u32 %v2773, 7
      %v2775 = vsub.s32 0, %v2774
      %v2776 = vrot.slane %v677, %v2775
      %v2777 = vlaneseq
      %v2778 = vshrl.u32 %v2777, 7
      %v2779 = vsub.s32 2, %v2778
      %v2780 = vrot.slane %v677, %v2779
      %v2781 = vlaneseq
      %v2782 = vshrl.u32 %v2781, 7
      %v2783 = vsub.s32 4, %v2782
      %v2784 = vrot.slane %v677, %v2783
      %v2785 = vlaneseq
      %v2786 = vshrl.u32 %v2785, 7
      %v2787 = vsub.s32 0, %v2786
      %v2788 = vrot.slane %v678, %v2787
      %v2789 = vlaneseq
      %v2790 = vshrl.u32 %v2789, 7
      %v2791 = vsub.s32 2, %v2790
      %v2792 = vrot.slane %v678, %v2791
      %v2793 = vlaneseq
      %v2794 = vshrl.u32 %v2793, 7
      %v2795 = vsub.s32 4, %v2794
      %v2796 = vrot.slane %v678, %v2795
      %v2797 = vlaneseq
      %v2798 = vshrl.u32 %v2797, 7
      %v2799 = vsub.s32 0, %v2798
      %v2800 = vrot.slane %v679, %v2799
      %v2801 = vlaneseq
      %v2802 = vshrl.u32 %v2801, 7
      %v2803 = vsub.s32 2, %v2802
      %v2804 = vrot.slane %v679, %v2803
      %v2805 = vlaneseq
      %v2806 = vshrl.u32 %v2805, 7
      %v2807 = vsub.s32 4, %v2806
      %v2808 = vrot.slane %v679, %v2807
      %v2809 = vlaneseq
      %v2810 = vshrl.u32 %v2809, 7
      %v2811 = vsub.s32 0, %v2810
      %v2812 = vrot.slane %v680, %v2811
      %v2813 = vlaneseq
      %v2814 = vshrl.u32 %v2813, 7
      %v2815 = vsub.s32 2, %v2814
      %v2816 = vrot.slane %v680, %v2815
      %v2817 = vlaneseq
      %v2818 = vshrl.u32 %v2817, 7
      %v2819 = vsub.s32 4, %v2818
      %v2820 = vrot.slane %v680, %v2819
      %v2821 = vlaneseq
      %v2822 = vshrl.u32 %v2821, 7
      %v2823 = vsub.s32 0, %v2822
      %v2824 = vrot.slane %v681, %v2823
      %v2825 = vlaneseq
      %v2826 = vshrl.u32 %v2825, 7
      %v2827 = vsub.s32 2, %v2826
      %v2828 = vrot.slane %v681, %v2827
      %v2829 = vlaneseq
      %v2830 = vshrl.u32 %v2829, 7
      %v2831 = vsub.s32 4, %v2830
      %v2832 = vrot.slane %v681, %v2831
      %v2833 = vlaneseq
      %v2834 = vshrl.u32 %v2833, 7
      %v2835 = vsub.s32 0, %v2834
      %v2836 = vrot.slane %v682, %v2835
      %v2837 = vlaneseq
      %v2838 = vshrl.u32 %v2837, 7
      %v2839 = vsub.s32 2, %v2838
      %v2840 = vrot.slane %v682, %v2839
      %v2841 = vlaneseq
      %v2842 = vshrl.u32 %v2841, 7
      %v2843 = vsub.s32 4, %v2842
      %v2844 = vrot.slane %v682, %v2843
      %v2845 = vlaneseq
      %v2846 = vshrl.u32 %v2845, 7
      %v2847 = vsub.s32 0, %v2846
      %v2848 = vrot.slane %v683, %v2847
      %v2849 = vlaneseq
      %v2850 = vshrl.u32 %v2849, 7
      %v2851 = vsub.s32 2, %v2850
      %v2852 = vrot.slane %v683, %v2851
      %v2853 = vlaneseq
      %v2854 = vshrl.u32 %v2853, 7
      %v2855 = vsub.s32 4, %v2854
      %v2856 = vrot.slane %v683, %v2855
      %v2857 = vlaneseq
      %v2858 = vshrl.u32 %v2857, 7
      %v2859 = vsub.s32 0, %v2858
      %v2860 = vrot.slane %v684, %v2859
      %v2861 = vlaneseq
      %v2862 = vshrl.u32 %v2861, 7
      %v2863 = vsub.s32 2, %v2862
      %v2864 = vrot.slane %v684, %v2863
      %v2865 = vlaneseq
      %v2866 = vshrl.u32 %v2865, 7
      %v2867 = vsub.s32 4, %v2866
      %v2868 = vrot.slane %v684, %v2867
      %v2869 = vlaneseq
      %v2870 = vshrl.u32 %v2869, 7
      %v2871 = vsub.s32 0, %v2870
      %v2872 = vrot.slane %v685, %v2871
      %v2873 = vlaneseq
      %v2874 = vshrl.u32 %v2873, 7
      %v2875 = vsub.s32 2, %v2874
      %v2876 = vrot.slane %v685, %v2875
      %v2877 = vlaneseq
      %v2878 = vshrl.u32 %v2877, 7
      %v2879 = vsub.s32 4, %v2878
      %v2880 = vrot.slane %v685, %v2879
      %v2881 = vlaneseq
      %v2882 = vshrl.u32 %v2881, 7
      %v2883 = vsub.s32 0, %v2882
      %v2884 = vrot.slane %v686, %v2883
      %v2885 = vlaneseq
      %v2886 = vshrl.u32 %v2885, 7
      %v2887 = vsub.s32 2, %v2886
      %v2888 = vrot.slane %v686, %v2887
      %v2889 = vlaneseq
      %v2890 = vshrl.u32 %v2889, 7
      %v2891 = vsub.s32 4, %v2890
      %v2892 = vrot.slane %v686, %v2891
      %v2893 = vlaneseq
      %v2894 = vshrl.u32 %v2893, 7
      %v2895 = vsub.s32 0, %v2894
      %v2896 = vrot.slane %v687, %v2895
      %v2897 = vlaneseq
      %v2898 = vshrl.u32 %v2897, 7
      %v2899 = vsub.s32 2, %v2898
      %v2900 = vrot.slane %v687, %v2899
      %v2901 = vlaneseq
      %v2902 = vshrl.u32 %v2901, 7
      %v2903 = vsub.s32 4, %v2902
      %v2904 = vrot.slane %v687, %v2903
      %v2905 = vlaneseq
      %v2906 = vshrl.u32 %v2905, 7
      %v2907 = vsub.s32 0, %v2906
      %v2908 = vrot.slane %v688, %v2907
      %v2909 = vlaneseq
      %v2910 = vshrl.u32 %v2909, 7
      %v2911 = vsub.s32 2, %v2910
      %v2912 = vrot.slane %v688, %v2911
      %v2913 = vlaneseq
      %v2914 = vshrl.u32 %v2913, 7
      %v2915 = vsub.s32 4, %v2914
      %v2916 = vrot.slane %v688, %v2915
      %v2917 = vlaneseq
      %v2918 = vshrl.u32 %v2917, 7
      %v2919 = vsub.s32 0, %v2918
      %v2920 = vrot.slane %v689, %v2919
      %v2921 = vlaneseq
      %v2922 = vshrl.u32 %v2921, 7
      %v2923 = vsub.s32 2, %v2922
      %v2924 = vrot.slane %v689, %v2923
      %v2925 = vlaneseq
      %v2926 = vshrl.u32 %v2925, 7
      %v2927 = vsub.s32 4, %v2926
      %v2928 = vrot.slane %v689, %v2927
      %v2929 = vlaneseq
      %v2930 = vshrl.u32 %v2929, 7
      %v2931 = vsub.s32 0, %v2930
      %v2932 = vrot.slane %v690, %v2931
      %v2933 = vlaneseq
      %v2934 = vshrl.u32 %v2933, 7
      %v2935 = vsub.s32 2, %v2934
      %v2936 = vrot.slane %v690, %v2935
      %v2937 = vlaneseq
      %v2938 = vshrl.u32 %v2937, 7
      %v2939 = vsub.s32 4, %v2938
      %v2940 = vrot.slane %v690, %v2939
      %v2941 = vlaneseq
      %v2942 = vshrl.u32 %v2941, 7
      %v2943 = vsub.s32 0, %v2942
      %v2944 = vrot.slane %v691, %v2943
      %v2945 = vlaneseq
      %v2946 = vshrl.u32 %v2945, 7
      %v2947 = vsub.s32 2, %v2946
      %v2948 = vrot.slane %v691, %v2947
      %v2949 = vlaneseq
      %v2950 = vshrl.u32 %v2949, 7
      %v2951 = vsub.s32 4, %v2950
      %v2952 = vrot.slane %v691, %v2951
      %v2953 = vlaneseq
      %v2954 = vshrl.u32 %v2953, 7
      %v2955 = vsub.s32 0, %v2954
      %v2956 = vrot.slane %v692, %v2955
      %v2957 = vlaneseq
      %v2958 = vshrl.u32 %v2957, 7
      %v2959 = vsub.s32 2, %v2958
      %v2960 = vrot.slane %v692, %v2959
      %v2961 = vlaneseq
      %v2962 = vshrl.u32 %v2961, 7
      %v2963 = vsub.s32 4, %v2962
      %v2964 = vrot.slane %v692, %v2963
      %v2965 = vlaneseq
      %v2966 = vshrl.u32 %v2965, 7
      %v2967 = vsub.s32 0, %v2966
      %v2968 = vrot.slane %v693, %v2967
      %v2969 = vlaneseq
      %v2970 = vshrl.u32 %v2969, 7
      %v2971 = vsub.s32 2, %v2970
      %v2972 = vrot.slane %v693, %v2971
      %v2973 = vlaneseq
      %v2974 = vshrl.u32 %v2973, 7
      %v2975 = vsub.s32 4, %v2974
      %v2976 = vrot.slane %v693, %v2975
      %v2977 = vlaneseq
      %v2978 = vshrl.u32 %v2977, 7
      %v2979 = vsub.s32 0, %v2978
      %v2980 = vrot.slane %v694, %v2979
      %v2981 = vlaneseq
      %v2982 = vshrl.u32 %v2981, 7
      %v2983 = vsub.s32 2, %v2982
      %v2984 = vrot.slane %v694, %v2983
      %v2985 = vlaneseq
      %v2986 = vshrl.u32 %v2985, 7
      %v2987 = vsub.s32 4, %v2986
      %v2988 = vrot.slane %v694, %v2987
      %v2989 = vlaneseq
      %v2990 = vshrl.u32 %v2989, 7
      %v2991 = vsub.s32 0, %v2990
      %v2992 = vrot.slane %v695, %v2991
      %v2993 = vlaneseq
      %v2994 = vshrl.u32 %v2993, 7
      %v2995 = vsub.s32 2, %v2994
      %v2996 = vrot.slane %v695, %v2995
      %v2997 = vlaneseq
      %v2998 = vshrl.u32 %v2997, 7
      %v2999 = vsub.s32 4, %v2998
      %v3000 = vrot.slane %v695, %v2999
      %v3001 = vlaneseq
      %v3002 = vshrl.u32 %v3001, 7
      %v3003 = vsub.s32 0, %v3002
      %v3004 = vrot.slane %v696, %v3003
      %v3005 = vlaneseq
      %v3006 = vshrl.u32 %v3005, 7
      %v3007 = vsub.s32 2, %v3006
      %v3008 = vrot.slane %v696, %v3007
      %v3009 = vlaneseq
      %v3010 = vshrl.u32 %v3009, 7
      %v3011 = vsub.s32 4, %v3010
      %v3012 = vrot.slane %v696, %v3011
      %v3013 = vlaneseq
      %v3014 = vshrl.u32 %v3013, 7
      %v3015 = vsub.s32 0, %v3014
      %v3016 = vrot.slane %v697, %v3015
      %v3017 = vlaneseq
      %v3018 = vshrl.u32 %v3017, 7
      %v3019 = vsub.s32 2, %v3018
      %v3020 = vrot.slane %v697, %v3019
      %v3021 = vlaneseq
      %v3022 = vshrl.u32 %v3021, 7
      %v3023 = vsub.s32 4, %v3022
      %v3024 = vrot.slane %v697, %v3023
      %v3025 = vlaneseq
      %v3026 = vshrl.u32 %v3025, 7
      %v3027 = vsub.s32 0, %v3026
      %v3028 = vrot.slane %v698, %v3027
      %v3029 = vlaneseq
      %v3030 = vshrl.u32 %v3029, 7
      %v3031 = vsub.s32 2, %v3030
      %v3032 = vrot.slane %v698, %v3031
      %v3033 = vlaneseq
      %v3034 = vshrl.u32 %v3033, 7
      %v3035 = vsub.s32 4, %v3034
      %v3036 = vrot.slane %v698, %v3035
      %v3037 = vlaneseq
      %v3038 = vshrl.u32 %v3037, 7
      %v3039 = vsub.s32 0, %v3038
      %v3040 = vrot.slane %v699, %v3039
      %v3041 = vlaneseq
      %v3042 = vshrl.u32 %v3041, 7
      %v3043 = vsub.s32 2, %v3042
      %v3044 = vrot.slane %v699, %v3043
      %v3045 = vlaneseq
      %v3046 = vshrl.u32 %v3045, 7
      %v3047 = vsub.s32 4, %v3046
      %v3048 = vrot.slane %v699, %v3047
      %v3049 = vlaneseq
      %v3050 = vshrl.u32 %v3049, 7
      %v3051 = vsub.s32 0, %v3050
      %v3052 = vrot.slane %v700, %v3051
      %v3053 = vlaneseq
      %v3054 = vshrl.u32 %v3053, 7
      %v3055 = vsub.s32 2, %v3054
      %v3056 = vrot.slane %v700, %v3055
      %v3057 = vlaneseq
      %v3058 = vshrl.u32 %v3057, 7
      %v3059 = vsub.s32 4, %v3058
      %v3060 = vrot.slane %v700, %v3059
      %v3061 = vlaneseq
      %v3062 = vshrl.u32 %v3061, 7
      %v3063 = vsub.s32 0, %v3062
      %v3064 = vrot.slane %v701, %v3063
      %v3065 = vlaneseq
      %v3066 = vshrl.u32 %v3065, 7
      %v3067 = vsub.s32 2, %v3066
      %v3068 = vrot.slane %v701, %v3067
      %v3069 = vlaneseq
      %v3070 = vshrl.u32 %v3069, 7
      %v3071 = vsub.s32 4, %v3070
      %v3072 = vrot.slane %v701, %v3071
      %v3265 = vlaneseq
      %v3266 = vshrl.u32 %v3265, 7
      %v3267 = vsub.s32 0, %v3266
      %v3268 = vrot.slane %v2308, %v3267
      %v3269 = vlaneseq
      %v3270 = vshrl.u32 %v3269, 7
      %v3271 = vsub.s32 0, %v3270
      %v3272 = vrot.slane %v2312, %v3271
      %v3273 = vlaneseq
      %v3274 = vshrl.u32 %v3273, 7
      %v3275 = vsub.s32 0, %v3274
      %v3276 = vrot.slane %v2316, %v3275
      %v3277 = vlaneseq
      %v3278 = vshrl.u32 %v3277, 7
      %v3279 = vsub.s32 0, %v3278
      %v3280 = vrot.slane %v2320, %v3279
      %v3281 = vlaneseq
      %v3282 = vshrl.u32 %v3281, 7
      %v3283 = vsub.s32 0, %v3282
      %v3284 = vrot.slane %v2324, %v3283
      %v3285 = vlaneseq
      %v3286 = vshrl.u32 %v3285, 7
      %v3287 = vsub.s32 0, %v3286
      %v3288 = vrot.slane %v2328, %v3287
      %v3289 = vlaneseq
      %v3290 = vshrl.u32 %v3289, 7
      %v3291 = vsub.s32 0, %v3290
      %v3292 = vrot.slane %v2332, %v3291
      %v3293 = vlaneseq
      %v3294 = vshrl.u32 %v3293, 7
      %v3295 = vsub.s32 0, %v3294
      %v3296 = vrot.slane %v2336, %v3295
      %v3297 = vlaneseq
      %v3298 = vshrl.u32 %v3297, 7
      %v3299 = vsub.s32 0, %v3298
      %v3300 = vrot.slane %v2340, %v3299
      %v3301 = vlaneseq
      %v3302 = vshrl.u32 %v3301, 7
      %v3303 = vsub.s32 0, %v3302
      %v3304 = vrot.slane %v2344, %v3303
      %v3305 = vlaneseq
      %v3306 = vshrl.u32 %v3305, 7
      %v3307 = vsub.s32 0, %v3306
      %v3308 = vrot.slane %v2348, %v3307
      %v3309 = vlaneseq
      %v3310 = vshrl.u32 %v3309, 7
      %v3311 = vsub.s32 0, %v3310
      %v3312 = vrot.slane %v2352, %v3311
      %v3313 = vlaneseq
      %v3314 = vshrl.u32 %v3313, 7
      %v3315 = vsub.s32 0, %v3314
      %v3316 = vrot.slane %v2356, %v3315
      %v3317 = vlaneseq
      %v3318 = vshrl.u32 %v3317, 7
      %v3319 = vsub.s32 0, %v3318
      %v3320 = vrot.slane %v2360, %v3319
      %v3321 = vlaneseq
      %v3322 = vshrl.u32 %v3321, 7
      %v3323 = vsub.s32 0, %v3322
      %v3324 = vrot.slane %v2364, %v3323
      %v3325 = vlaneseq
      %v3326 = vshrl.u32 %v3325, 7
      %v3327 = vsub.s32 0, %v3326
      %v3328 = vrot.slane %v2368, %v3327
      %v3329 = vlaneseq
      %v3330 = vshrl.u32 %v3329, 7
      %v3331 = vsub.s32 0, %v3330
      %v3332 = vrot.slane %v2372, %v3331
      %v3333 = vlaneseq
      %v3334 = vshrl.u32 %v3333, 7
      %v3335 = vsub.s32 0, %v3334
      %v3336 = vrot.slane %v2376, %v3335
      %v3337 = vlaneseq
      %v3338 = vshrl.u32 %v3337, 7
      %v3339 = vsub.s32 0, %v3338
      %v3340 = vrot.slane %v2380, %v3339
      %v3341 = vlaneseq
      %v3342 = vshrl.u32 %v3341, 7
      %v3343 = vsub.s32 0, %v3342
      %v3344 = vrot.slane %v2384, %v3343
      %v3345 = vlaneseq
      %v3346 = vshrl.u32 %v3345, 7
      %v3347 = vsub.s32 0, %v3346
      %v3348 = vrot.slane %v2388, %v3347
      %v3349 = vlaneseq
      %v3350 = vshrl.u32 %v3349, 7
      %v3351 = vsub.s32 0, %v3350
      %v3352 = vrot.slane %v2392, %v3351
      %v3353 = vlaneseq
      %v3354 = vshrl.u32 %v3353, 7
      %v3355 = vsub.s32 0, %v3354
      %v3356 = vrot.slane %v2396, %v3355
      %v3357 = vlaneseq
      %v3358 = vshrl.u32 %v3357, 7
      %v3359 = vsub.s32 0, %v3358
      %v3360 = vrot.slane %v2400, %v3359
      %v3361 = vlaneseq
      %v3362 = vshrl.u32 %v3361, 7
      %v3363 = vsub.s32 0, %v3362
      %v3364 = vrot.slane %v2404, %v3363
      %v3365 = vlaneseq
      %v3366 = vshrl.u32 %v3365, 7
      %v3367 = vsub.s32 0, %v3366
      %v3368 = vrot.slane %v2408, %v3367
      %v3369 = vlaneseq
      %v3370 = vshrl.u32 %v3369, 7
      %v3371 = vsub.s32 0, %v3370
      %v3372 = vrot.slane %v2412, %v3371
      %v3373 = vlaneseq
      %v3374 = vshrl.u32 %v3373, 7
      %v3375 = vsub.s32 0, %v3374
      %v3376 = vrot.slane %v2416, %v3375
      %v3377 = vlaneseq
      %v3378 = vshrl.u32 %v3377, 7
      %v3379 = vsub.s32 0, %v3378
      %v3380 = vrot.slane %v2420, %v3379
      %v3381 = vlaneseq
      %v3382 = vshrl.u32 %v3381, 7
      %v3383 = vsub.s32 0, %v3382
      %v3384 = vrot.slane %v2424, %v3383
      %v3385 = vlaneseq
      %v3386 = vshrl.u32 %v3385, 7
      %v3387 = vsub.s32 0, %v3386
      %v3388 = vrot.slane %v2428, %v3387
      %v3389 = vlaneseq
      %v3390 = vshrl.u32 %v3389, 7
      %v3391 = vsub.s32 0, %v3390
      %v3392 = vrot.slane %v2432, %v3391
      %v3393 = vlaneseq
      %v3394 = vshrl.u32 %v3393, 7
      %v3395 = vsub.s32 0, %v3394
      %v3396 = vrot.slane %v2436, %v3395
      %v3397 = vlaneseq
      %v3398 = vshrl.u32 %v3397, 7
      %v3399 = vsub.s32 0, %v3398
      %v3400 = vrot.slane %v2440, %v3399
      %v3401 = vlaneseq
      %v3402 = vshrl.u32 %v3401, 7
      %v3403 = vsub.s32 0, %v3402
      %v3404 = vrot.slane %v2444, %v3403
      %v3405 = vlaneseq
      %v3406 = vshrl.u32 %v3405, 7
      %v3407 = vsub.s32 0, %v3406
      %v3408 = vrot.slane %v2448, %v3407
      %v3409 = vlaneseq
      %v3410 = vshrl.u32 %v3409, 7
      %v3411 = vsub.s32 0, %v3410
      %v3412 = vrot.slane %v2452, %v3411
      %v3413 = vlaneseq
      %v3414 = vshrl.u32 %v3413, 7
      %v3415 = vsub.s32 0, %v3414
      %v3416 = vrot.slane %v2456, %v3415
      %v3417 = vlaneseq
      %v3418 = vshrl.u32 %v3417, 7
      %v3419 = vsub.s32 0, %v3418
      %v3420 = vrot.slane %v2460, %v3419
      %v3421 = vlaneseq
      %v3422 = vshrl.u32 %v3421, 7
      %v3423 = vsub.s32 0, %v3422
      %v3424 = vrot.slane %v2464, %v3423
      %v3425 = vlaneseq
      %v3426 = vshrl.u32 %v3425, 7
      %v3427 = vsub.s32 0, %v3426
      %v3428 = vrot.slane %v2468, %v3427
      %v3429 = vlaneseq
      %v3430 = vshrl.u32 %v3429, 7
      %v3431 = vsub.s32 0, %v3430
      %v3432 = vrot.slane %v2472, %v3431
      %v3433 = vlaneseq
      %v3434 = vshrl.u32 %v3433, 7
      %v3435 = vsub.s32 0, %v3434
      %v3436 = vrot.slane %v2476, %v3435
      %v3437 = vlaneseq
      %v3438 = vshrl.u32 %v3437, 7
      %v3439 = vsub.s32 0, %v3438
      %v3440 = vrot.slane %v2480, %v3439
      %v3441 = vlaneseq
      %v3442 = vshrl.u32 %v3441, 7
      %v3443 = vsub.s32 0, %v3442
      %v3444 = vrot.slane %v2484, %v3443
      %v3445 = vlaneseq
      %v3446 = vshrl.u32 %v3445, 7
      %v3447 = vsub.s32 0, %v3446
      %v3448 = vrot.slane %v2488, %v3447
      %v3449 = vlaneseq
      %v3450 = vshrl.u32 %v3449, 7
      %v3451 = vsub.s32 0, %v3450
      %v3452 = vrot.slane %v2492, %v3451
      %v3453 = vlaneseq
      %v3454 = vshrl.u32 %v3453, 7
      %v3455 = vsub.s32 0, %v3454
      %v3456 = vrot.slane %v2496, %v3455
      %v3457 = vlaneseq
      %v3458 = vshrl.u32 %v3457, 7
      %v3459 = vsub.s32 0, %v3458
      %v3460 = vrot.slane %v2500, %v3459
      %v3461 = vlaneseq
      %v3462 = vshrl.u32 %v3461, 7
      %v3463 = vsub.s32 0, %v3462
      %v3464 = vrot.slane %v2504, %v3463
      %v3465 = vlaneseq
      %v3466 = vshrl.u32 %v3465, 7
      %v3467 = vsub.s32 0, %v3466
      %v3468 = vrot.slane %v2508, %v3467
      %v3469 = vlaneseq
      %v3470 = vshrl.u32 %v3469, 7
      %v3471 = vsub.s32 0, %v3470
      %v3472 = vrot.slane %v2512, %v3471
      %v3473 = vlaneseq
      %v3474 = vshrl.u32 %v3473, 7
      %v3475 = vsub.s32 0, %v3474
      %v3476 = vrot.slane %v2516, %v3475
      %v3477 = vlaneseq
      %v3478 = vshrl.u32 %v3477, 7
      %v3479 = vsub.s32 0, %v3478
      %v3480 = vrot.slane %v2520, %v3479
      %v3481 = vlaneseq
      %v3482 = vshrl.u32 %v3481, 7
      %v3483 = vsub.s32 0, %v3482
      %v3484 = vrot.slane %v2524, %v3483
      %v3485 = vlaneseq
      %v3486 = vshrl.u32 %v3485, 7
      %v3487 = vsub.s32 0, %v3486
      %v3488 = vrot.slane %v2528, %v3487
      %v3489 = vlaneseq
      %v3490 = vshrl.u32 %v3489, 7
      %v3491 = vsub.s32 0, %v3490
      %v3492 = vrot.slane %v2532, %v3491
      %v3493 = vlaneseq
      %v3494 = vshrl.u32 %v3493, 7
      %v3495 = vsub.s32 0, %v3494
      %v3496 = vrot.slane %v2536, %v3495
      %v3497 = vlaneseq
      %v3498 = vshrl.u32 %v3497, 7
      %v3499 = vsub.s32 0, %v3498
      %v3500 = vrot.slane %v2540, %v3499
      %v3501 = vlaneseq
      %v3502 = vshrl.u32 %v3501, 7
      %v3503 = vsub.s32 0, %v3502
      %v3504 = vrot.slane %v2544, %v3503
      %v3505 = vlaneseq
      %v3506 = vshrl.u32 %v3505, 7
      %v3507 = vsub.s32 0, %v3506
      %v3508 = vrot.slane %v2548, %v3507
      %v3509 = vlaneseq
      %v3510 = vshrl.u32 %v3509, 7
      %v3511 = vsub.s32 0, %v3510
      %v3512 = vrot.slane %v2552, %v3511
      %v3513 = vlaneseq
      %v3514 = vshrl.u32 %v3513, 7
      %v3515 = vsub.s32 0, %v3514
      %v3516 = vrot.slane %v2556, %v3515
      %v3517 = vlaneseq
      %v3518 = vshrl.u32 %v3517, 7
      %v3519 = vsub.s32 0, %v3518
      %v3520 = vrot.slane %v2560, %v3519
      %v3521 = vlaneseq
      %v3522 = vshrl.u32 %v3521, 7
      %v3523 = vsub.s32 0, %v3522
      %v3524 = vrot.slane %v2564, %v3523
      %v3525 = vlaneseq
      %v3526 = vshrl.u32 %v3525, 7
      %v3527 = vsub.s32 0, %v3526
      %v3528 = vrot.slane %v2568, %v3527
      %v3529 = vlaneseq
      %v3530 = vshrl.u32 %v3529, 7
      %v3531 = vsub.s32 0, %v3530
      %v3532 = vrot.slane %v2572, %v3531
      %v3533 = vlaneseq
      %v3534 = vshrl.u32 %v3533, 7
      %v3535 = vsub.s32 0, %v3534
      %v3536 = vrot.slane %v2576, %v3535
      %v3537 = vlaneseq
      %v3538 = vshrl.u32 %v3537, 7
      %v3539 = vsub.s32 0, %v3538
      %v3540 = vrot.slane %v2580, %v3539
      %v3541 = vlaneseq
      %v3542 = vshrl.u32 %v3541, 7
      %v3543 = vsub.s32 0, %v3542
      %v3544 = vrot.slane %v2584, %v3543
      %v3545 = vlaneseq
      %v3546 = vshrl.u32 %v3545, 7
      %v3547 = vsub.s32 0, %v3546
      %v3548 = vrot.slane %v2588, %v3547
      %v3549 = vlaneseq
      %v3550 = vshrl.u32 %v3549, 7
      %v3551 = vsub.s32 0, %v3550
      %v3552 = vrot.slane %v2592, %v3551
      %v3553 = vlaneseq
      %v3554 = vshrl.u32 %v3553, 7
      %v3555 = vsub.s32 0, %v3554
      %v3556 = vrot.slane %v2596, %v3555
      %v3557 = vlaneseq
      %v3558 = vshrl.u32 %v3557, 7
      %v3559 = vsub.s32 0, %v3558
      %v3560 = vrot.slane %v2600, %v3559
      %v3561 = vlaneseq
      %v3562 = vshrl.u32 %v3561, 7
      %v3563 = vsub.s32 0, %v3562
      %v3564 = vrot.slane %v2604, %v3563
      %v3565 = vlaneseq
      %v3566 = vshrl.u32 %v3565, 7
      %v3567 = vsub.s32 0, %v3566
      %v3568 = vrot.slane %v2608, %v3567
      %v3569 = vlaneseq
      %v3570 = vshrl.u32 %v3569, 7
      %v3571 = vsub.s32 0, %v3570
      %v3572 = vrot.slane %v2612, %v3571
      %v3573 = vlaneseq
      %v3574 = vshrl.u32 %v3573, 7
      %v3575 = vsub.s32 0, %v3574
      %v3576 = vrot.slane %v2616, %v3575
      %v3577 = vlaneseq
      %v3578 = vshrl.u32 %v3577, 7
      %v3579 = vsub.s32 0, %v3578
      %v3580 = vrot.slane %v2620, %v3579
      %v3581 = vlaneseq
      %v3582 = vshrl.u32 %v3581, 7
      %v3583 = vsub.s32 0, %v3582
      %v3584 = vrot.slane %v2624, %v3583
      %v3585 = vlaneseq
      %v3586 = vshrl.u32 %v3585, 7
      %v3587 = vsub.s32 0, %v3586
      %v3588 = vrot.slane %v2628, %v3587
      %v3589 = vlaneseq
      %v3590 = vshrl.u32 %v3589, 7
      %v3591 = vsub.s32 0, %v3590
      %v3592 = vrot.slane %v2632, %v3591
      %v3593 = vlaneseq
      %v3594 = vshrl.u32 %v3593, 7
      %v3595 = vsub.s32 0, %v3594
      %v3596 = vrot.slane %v2636, %v3595
      %v3597 = vlaneseq
      %v3598 = vshrl.u32 %v3597, 7
      %v3599 = vsub.s32 0, %v3598
      %v3600 = vrot.slane %v2640, %v3599
      %v3601 = vlaneseq
      %v3602 = vshrl.u32 %v3601, 7
      %v3603 = vsub.s32 0, %v3602
      %v3604 = vrot.slane %v2644, %v3603
      %v3605 = vlaneseq
      %v3606 = vshrl.u32 %v3605, 7
      %v3607 = vsub.s32 0, %v3606
      %v3608 = vrot.slane %v2648, %v3607
      %v3609 = vlaneseq
      %v3610 = vshrl.u32 %v3609, 7
      %v3611 = vsub.s32 0, %v3610
      %v3612 = vrot.slane %v2652, %v3611
      %v3613 = vlaneseq
      %v3614 = vshrl.u32 %v3613, 7
      %v3615 = vsub.s32 0, %v3614
      %v3616 = vrot.slane %v2656, %v3615
      %v3617 = vlaneseq
      %v3618 = vshrl.u32 %v3617, 7
      %v3619 = vsub.s32 0, %v3618
      %v3620 = vrot.slane %v2660, %v3619
      %v3621 = vlaneseq
      %v3622 = vshrl.u32 %v3621, 7
      %v3623 = vsub.s32 0, %v3622
      %v3624 = vrot.slane %v2664, %v3623
      %v3625 = vlaneseq
      %v3626 = vshrl.u32 %v3625, 7
      %v3627 = vsub.s32 0, %v3626
      %v3628 = vrot.slane %v2668, %v3627
      %v3629 = vlaneseq
      %v3630 = vshrl.u32 %v3629, 7
      %v3631 = vsub.s32 0, %v3630
      %v3632 = vrot.slane %v2672, %v3631
      %v3633 = vlaneseq
      %v3634 = vshrl.u32 %v3633, 7
      %v3635 = vsub.s32 0, %v3634
      %v3636 = vrot.slane %v2676, %v3635
      %v3637 = vlaneseq
      %v3638 = vshrl.u32 %v3637, 7
      %v3639 = vsub.s32 0, %v3638
      %v3640 = vrot.slane %v2680, %v3639
      %v3641 = vlaneseq
      %v3642 = vshrl.u32 %v3641, 7
      %v3643 = vsub.s32 0, %v3642
      %v3644 = vrot.slane %v2684, %v3643
      %v3645 = vlaneseq
      %v3646 = vshrl.u32 %v3645, 7
      %v3647 = vsub.s32 0, %v3646
      %v3648 = vrot.slane %v2688, %v3647
      %v3649 = vlaneseq
      %v3650 = vshrl.u32 %v3649, 7
      %v3651 = vsub.s32 0, %v3650
      %v3652 = vrot.slane %v2692, %v3651
      %v3653 = vlaneseq
      %v3654 = vshrl.u32 %v3653, 7
      %v3655 = vsub.s32 0, %v3654
      %v3656 = vrot.slane %v2696, %v3655
      %v3657 = vlaneseq
      %v3658 = vshrl.u32 %v3657, 7
      %v3659 = vsub.s32 0, %v3658
      %v3660 = vrot.slane %v2700, %v3659
      %v3661 = vlaneseq
      %v3662 = vshrl.u32 %v3661, 7
      %v3663 = vsub.s32 0, %v3662
      %v3664 = vrot.slane %v2704, %v3663
      %v3665 = vlaneseq
      %v3666 = vshrl.u32 %v3665, 7
      %v3667 = vsub.s32 0, %v3666
      %v3668 = vrot.slane %v2708, %v3667
      %v3669 = vlaneseq
      %v3670 = vshrl.u32 %v3669, 7
      %v3671 = vsub.s32 0, %v3670
      %v3672 = vrot.slane %v2712, %v3671
      %v3673 = vlaneseq
      %v3674 = vshrl.u32 %v3673, 7
      %v3675 = vsub.s32 0, %v3674
      %v3676 = vrot.slane %v2716, %v3675
      %v3677 = vlaneseq
      %v3678 = vshrl.u32 %v3677, 7
      %v3679 = vsub.s32 0, %v3678
      %v3680 = vrot.slane %v2720, %v3679
      %v3681 = vlaneseq
      %v3682 = vshrl.u32 %v3681, 7
      %v3683 = vsub.s32 0, %v3682
      %v3684 = vrot.slane %v2724, %v3683
      %v3685 = vlaneseq
      %v3686 = vshrl.u32 %v3685, 7
      %v3687 = vsub.s32 0, %v3686
      %v3688 = vrot.slane %v2728, %v3687
      %v3689 = vlaneseq
      %v3690 = vshrl.u32 %v3689, 7
      %v3691 = vsub.s32 0, %v3690
      %v3692 = vrot.slane %v2732, %v3691
      %v3693 = vlaneseq
      %v3694 = vshrl.u32 %v3693, 7
      %v3695 = vsub.s32 0, %v3694
      %v3696 = vrot.slane %v2736, %v3695
      %v3697 = vlaneseq
      %v3698 = vshrl.u32 %v3697, 7
      %v3699 = vsub.s32 0, %v3698
      %v3700 = vrot.slane %v2740, %v3699
      %v3701 = vlaneseq
      %v3702 = vshrl.u32 %v3701, 7
      %v3703 = vsub.s32 0, %v3702
      %v3704 = vrot.slane %v2744, %v3703
      %v3705 = vlaneseq
      %v3706 = vshrl.u32 %v3705, 7
      %v3707 = vsub.s32 0, %v3706
      %v3708 = vrot.slane %v2748, %v3707
      %v3709 = vlaneseq
      %v3710 = vshrl.u32 %v3709, 7
      %v3711 = vsub.s32 0, %v3710
      %v3712 = vrot.slane %v2752, %v3711
      %v3713 = vlaneseq
      %v3714 = vshrl.u32 %v3713, 7
      %v3715 = vsub.s32 0, %v3714
      %v3716 = vrot.slane %v2756, %v3715
      %v3717 = vlaneseq
      %v3718 = vshrl.u32 %v3717, 7
      %v3719 = vsub.s32 0, %v3718
      %v3720 = vrot.slane %v2760, %v3719
      %v3721 = vlaneseq
      %v3722 = vshrl.u32 %v3721, 7
      %v3723 = vsub.s32 0, %v3722
      %v3724 = vrot.slane %v2764, %v3723
      %v3725 = vlaneseq
      %v3726 = vshrl.u32 %v3725, 7
      %v3727 = vsub.s32 0, %v3726
      %v3728 = vrot.slane %v2768, %v3727
      %v3729 = vlaneseq
      %v3730 = vshrl.u32 %v3729, 7
      %v3731 = vsub.s32 0, %v3730
      %v3732 = vrot.slane %v2772, %v3731
      %v3733 = vlaneseq
      %v3734 = vshrl.u32 %v3733, 7
      %v3735 = vsub.s32 0, %v3734
      %v3736 = vrot.slane %v2776, %v3735
      %v3737 = vlaneseq
      %v3738 = vshrl.u32 %v3737, 7
      %v3739 = vsub.s32 0, %v3738
      %v3740 = vrot.slane %v2780, %v3739
      %v3741 = vlaneseq
      %v3742 = vshrl.u32 %v3741, 7
      %v3743 = vsub.s32 0, %v3742
      %v3744 = vrot.slane %v2784, %v3743
      %v3745 = vlaneseq
      %v3746 = vshrl.u32 %v3745, 7
      %v3747 = vsub.s32 0, %v3746
      %v3748 = vrot.slane %v2788, %v3747
      %v3749 = vlaneseq
      %v3750 = vshrl.u32 %v3749, 7
      %v3751 = vsub.s32 0, %v3750
      %v3752 = vrot.slane %v2792, %v3751
      %v3753 = vlaneseq
      %v3754 = vshrl.u32 %v3753, 7
      %v3755 = vsub.s32 0, %v3754
      %v3756 = vrot.slane %v2796, %v3755
      %v3757 = vlaneseq
      %v3758 = vshrl.u32 %v3757, 7
      %v3759 = vsub.s32 0, %v3758
      %v3760 = vrot.slane %v2800, %v3759
      %v3761 = vlaneseq
      %v3762 = vshrl.u32 %v3761, 7
      %v3763 = vsub.s32 0, %v3762
      %v3764 = vrot.slane %v2804, %v3763
      %v3765 = vlaneseq
      %v3766 = vshrl.u32 %v3765, 7
      %v3767 = vsub.s32 0, %v3766
      %v3768 = vrot.slane %v2808, %v3767
      %v3769 = vlaneseq
      %v3770 = vshrl.u32 %v3769, 7
      %v3771 = vsub.s32 0, %v3770
      %v3772 = vrot.slane %v2812, %v3771
      %v3773 = vlaneseq
      %v3774 = vshrl.u32 %v3773, 7
      %v3775 = vsub.s32 0, %v3774
      %v3776 = vrot.slane %v2816, %v3775
      %v3777 = vlaneseq
      %v3778 = vshrl.u32 %v3777, 7
      %v3779 = vsub.s32 0, %v3778
      %v3780 = vrot.slane %v2820, %v3779
      %v3781 = vlaneseq
      %v3782 = vshrl.u32 %v3781, 7
      %v3783 = vsub.s32 0, %v3782
      %v3784 = vrot.slane %v2824, %v3783
      %v3785 = vlaneseq
      %v3786 = vshrl.u32 %v3785, 7
      %v3787 = vsub.s32 0, %v3786
      %v3788 = vrot.slane %v2828, %v3787
      %v3789 = vlaneseq
      %v3790 = vshrl.u32 %v3789, 7
      %v3791 = vsub.s32 0, %v3790
      %v3792 = vrot.slane %v2832, %v3791
      %v3793 = vlaneseq
      %v3794 = vshrl.u32 %v3793, 7
      %v3795 = vsub.s32 0, %v3794
      %v3796 = vrot.slane %v2836, %v3795
      %v3797 = vlaneseq
      %v3798 = vshrl.u32 %v3797, 7
      %v3799 = vsub.s32 0, %v3798
      %v3800 = vrot.slane %v2840, %v3799
      %v3801 = vlaneseq
      %v3802 = vshrl.u32 %v3801, 7
      %v3803 = vsub.s32 0, %v3802
      %v3804 = vrot.slane %v2844, %v3803
      %v3805 = vlaneseq
      %v3806 = vshrl.u32 %v3805, 7
      %v3807 = vsub.s32 0, %v3806
      %v3808 = vrot.slane %v2848, %v3807
      %v3809 = vlaneseq
      %v3810 = vshrl.u32 %v3809, 7
      %v3811 = vsub.s32 0, %v3810
      %v3812 = vrot.slane %v2852, %v3811
      %v3813 = vlaneseq
      %v3814 = vshrl.u32 %v3813, 7
      %v3815 = vsub.s32 0, %v3814
      %v3816 = vrot.slane %v2856, %v3815
      %v3817 = vlaneseq
      %v3818 = vshrl.u32 %v3817, 7
      %v3819 = vsub.s32 0, %v3818
      %v3820 = vrot.slane %v2860, %v3819
      %v3821 = vlaneseq
      %v3822 = vshrl.u32 %v3821, 7
      %v3823 = vsub.s32 0, %v3822
      %v3824 = vrot.slane %v2864, %v3823
      %v3825 = vlaneseq
      %v3826 = vshrl.u32 %v3825, 7
      %v3827 = vsub.s32 0, %v3826
      %v3828 = vrot.slane %v2868, %v3827
      %v3829 = vlaneseq
      %v3830 = vshrl.u32 %v3829, 7
      %v3831 = vsub.s32 0, %v3830
      %v3832 = vrot.slane %v2872, %v3831
      %v3833 = vlaneseq
      %v3834 = vshrl.u32 %v3833, 7
      %v3835 = vsub.s32 0, %v3834
      %v3836 = vrot.slane %v2876, %v3835
      %v3837 = vlaneseq
      %v3838 = vshrl.u32 %v3837, 7
      %v3839 = vsub.s32 0, %v3838
      %v3840 = vrot.slane %v2880, %v3839
      %v3841 = vlaneseq
      %v3842 = vshrl.u32 %v3841, 7
      %v3843 = vsub.s32 0, %v3842
      %v3844 = vrot.slane %v2884, %v3843
      %v3845 = vlaneseq
      %v3846 = vshrl.u32 %v3845, 7
      %v3847 = vsub.s32 0, %v3846
      %v3848 = vrot.slane %v2888, %v3847
      %v3849 = vlaneseq
      %v3850 = vshrl.u32 %v3849, 7
      %v3851 = vsub.s32 0, %v3850
      %v3852 = vrot.slane %v2892, %v3851
      %v3853 = vlaneseq
      %v3854 = vshrl.u32 %v3853, 7
      %v3855 = vsub.s32 0, %v3854
      %v3856 = vrot.slane %v2896, %v3855
      %v3857 = vlaneseq
      %v3858 = vshrl.u32 %v3857, 7
      %v3859 = vsub.s32 0, %v3858
      %v3860 = vrot.slane %v2900, %v3859
      %v3861 = vlaneseq
      %v3862 = vshrl.u32 %v3861, 7
      %v3863 = vsub.s32 0, %v3862
      %v3864 = vrot.slane %v2904, %v3863
      %v3865 = vlaneseq
      %v3866 = vshrl.u32 %v3865, 7
      %v3867 = vsub.s32 0, %v3866
      %v3868 = vrot.slane %v2908, %v3867
      %v3869 = vlaneseq
      %v3870 = vshrl.u32 %v3869, 7
      %v3871 = vsub.s32 0, %v3870
      %v3872 = vrot.slane %v2912, %v3871
      %v3873 = vlaneseq
      %v3874 = vshrl.u32 %v3873, 7
      %v3875 = vsub.s32 0, %v3874
      %v3876 = vrot.slane %v2916, %v3875
      %v3877 = vlaneseq
      %v3878 = vshrl.u32 %v3877, 7
      %v3879 = vsub.s32 0, %v3878
      %v3880 = vrot.slane %v2920, %v3879
      %v3881 = vlaneseq
      %v3882 = vshrl.u32 %v3881, 7
      %v3883 = vsub.s32 0, %v3882
      %v3884 = vrot.slane %v2924, %v3883
      %v3885 = vlaneseq
      %v3886 = vshrl.u32 %v3885, 7
      %v3887 = vsub.s32 0, %v3886
      %v3888 = vrot.slane %v2928, %v3887
      %v3889 = vlaneseq
      %v3890 = vshrl.u32 %v3889, 7
      %v3891 = vsub.s32 0, %v3890
      %v3892 = vrot.slane %v2932, %v3891
      %v3893 = vlaneseq
      %v3894 = vshrl.u32 %v3893, 7
      %v3895 = vsub.s32 0, %v3894
      %v3896 = vrot.slane %v2936, %v3895
      %v3897 = vlaneseq
      %v3898 = vshrl.u32 %v3897, 7
      %v3899 = vsub.s32 0, %v3898
      %v3900 = vrot.slane %v2940, %v3899
      %v3901 = vlaneseq
      %v3902 = vshrl.u32 %v3901, 7
      %v3903 = vsub.s32 0, %v3902
      %v3904 = vrot.slane %v2944, %v3903
      %v3905 = vlaneseq
      %v3906 = vshrl.u32 %v3905, 7
      %v3907 = vsub.s32 0, %v3906
      %v3908 = vrot.slane %v2948, %v3907
      %v3909 = vlaneseq
      %v3910 = vshrl.u32 %v3909, 7
      %v3911 = vsub.s32 0, %v3910
      %v3912 = vrot.slane %v2952, %v3911
      %v3913 = vlaneseq
      %v3914 = vshrl.u32 %v3913, 7
      %v3915 = vsub.s32 0, %v3914
      %v3916 = vrot.slane %v2956, %v3915
      %v3917 = vlaneseq
      %v3918 = vshrl.u32 %v3917, 7
      %v3919 = vsub.s32 0, %v3918
      %v3920 = vrot.slane %v2960, %v3919
      %v3921 = vlaneseq
      %v3922 = vshrl.u32 %v3921, 7
      %v3923 = vsub.s32 0, %v3922
      %v3924 = vrot.slane %v2964, %v3923
      %v3925 = vlaneseq
      %v3926 = vshrl.u32 %v3925, 7
      %v3927 = vsub.s32 0, %v3926
      %v3928 = vrot.slane %v2968, %v3927
      %v3929 = vlaneseq
      %v3930 = vshrl.u32 %v3929, 7
      %v3931 = vsub.s32 0, %v3930
      %v3932 = vrot.slane %v2972, %v3931
      %v3933 = vlaneseq
      %v3934 = vshrl.u32 %v3933, 7
      %v3935 = vsub.s32 0, %v3934
      %v3936 = vrot.slane %v2976, %v3935
      %v3937 = vlaneseq
      %v3938 = vshrl.u32 %v3937, 7
      %v3939 = vsub.s32 0, %v3938
      %v3940 = vrot.slane %v2980, %v3939
      %v3941 = vlaneseq
      %v3942 = vshrl.u32 %v3941, 7
      %v3943 = vsub.s32 0, %v3942
      %v3944 = vrot.slane %v2984, %v3943
      %v3945 = vlaneseq
      %v3946 = vshrl.u32 %v3945, 7
      %v3947 = vsub.s32 0, %v3946
      %v3948 = vrot.slane %v2988, %v3947
      %v3949 = vlaneseq
      %v3950 = vshrl.u32 %v3949, 7
      %v3951 = vsub.s32 0, %v3950
      %v3952 = vrot.slane %v2992, %v3951
      %v3953 = vlaneseq
      %v3954 = vshrl.u32 %v3953, 7
      %v3955 = vsub.s32 0, %v3954
      %v3956 = vrot.slane %v2996, %v3955
      %v3957 = vlaneseq
      %v3958 = vshrl.u32 %v3957, 7
      %v3959 = vsub.s32 0, %v3958
      %v3960 = vrot.slane %v3000, %v3959
      %v3961 = vlaneseq
      %v3962 = vshrl.u32 %v3961, 7
      %v3963 = vsub.s32 0, %v3962
      %v3964 = vrot.slane %v3004, %v3963
      %v3965 = vlaneseq
      %v3966 = vshrl.u32 %v3965, 7
      %v3967 = vsub.s32 0, %v3966
      %v3968 = vrot.slane %v3008, %v3967
      %v3969 = vlaneseq
      %v3970 = vshrl.u32 %v3969, 7
      %v3971 = vsub.s32 0, %v3970
      %v3972 = vrot.slane %v3012, %v3971
      %v3973 = vlaneseq
      %v3974 = vshrl.u32 %v3973, 7
      %v3975 = vsub.s32 0, %v3974
      %v3976 = vrot.slane %v3016, %v3975
      %v3977 = vlaneseq
      %v3978 = vshrl.u32 %v3977, 7
      %v3979 = vsub.s32 0, %v3978
      %v3980 = vrot.slane %v3020, %v3979
      %v3981 = vlaneseq
      %v3982 = vshrl.u32 %v3981, 7
      %v3983 = vsub.s32 0, %v3982
      %v3984 = vrot.slane %v3024, %v3983
      %v3985 = vlaneseq
      %v3986 = vshrl.u32 %v3985, 7
      %v3987 = vsub.s32 0, %v3986
      %v3988 = vrot.slane %v3028, %v3987
      %v3989 = vlaneseq
      %v3990 = vshrl.u32 %v3989, 7
      %v3991 = vsub.s32 0, %v3990
      %v3992 = vrot.slane %v3032, %v3991
      %v3993 = vlaneseq
      %v3994 = vshrl.u32 %v3993, 7
      %v3995 = vsub.s32 0, %v3994
      %v3996 = vrot.slane %v3036, %v3995
      %v3997 = vlaneseq
      %v3998 = vshrl.u32 %v3997, 7
      %v3999 = vsub.s32 0, %v3998
      %v4000 = vrot.slane %v3040, %v3999
      %v4001 = vlaneseq
      %v4002 = vshrl.u32 %v4001, 7
      %v4003 = vsub.s32 0, %v4002
      %v4004 = vrot.slane %v3044, %v4003
      %v4005 = vlaneseq
      %v4006 = vshrl.u32 %v4005, 7
      %v4007 = vsub.s32 0, %v4006
      %v4008 = vrot.slane %v3048, %v4007
      %v4009 = vlaneseq
      %v4010 = vshrl.u32 %v4009, 7
      %v4011 = vsub.s32 0, %v4010
      %v4012 = vrot.slane %v3052, %v4011
      %v4013 = vlaneseq
      %v4014 = vshrl.u32 %v4013, 7
      %v4015 = vsub.s32 0, %v4014
      %v4016 = vrot.slane %v3056, %v4015
      %v4017 = vlaneseq
      %v4018 = vshrl.u32 %v4017, 7
      %v4019 = vsub.s32 0, %v4018
      %v4020 = vrot.slane %v3060, %v4019
      %v4021 = vlaneseq
      %v4022 = vshrl.u32 %v4021, 7
      %v4023 = vsub.s32 0, %v4022
      %v4024 = vrot.slane %v3064, %v4023
      %v4025 = vlaneseq
      %v4026 = vshrl.u32 %v4025, 7
      %v4027 = vsub.s32 0, %v4026
      %v4028 = vrot.slane %v3068, %v4027
      %v4029 = vlaneseq
      %v4030 = vshrl.u32 %v4029, 7
      %v4031 = vsub.s32 0, %v4030
      %v4032 = vrot.slane %v3072, %v4031
      %v4033 = vmul.f32 %v3268, %v2049
      %v4034 = vmul.f32 %v3272, %v2050
      %v4035 = vmul.f32 %v3276, %v2051
      %v4036 = vmul.f32 %v3280, %v2052
      %v4037 = vmul.f32 %v3284, %v2053
      %v4038 = vmul.f32 %v3288, %v2054
      %v4039 = vmul.f32 %v3292, %v2055
      %v4040 = vmul.f32 %v3296, %v2056
      %v4041 = vmul.f32 %v3300, %v2057
      %v4042 = vmul.f32 %v3304, %v2058
      %v4043 = vmul.f32 %v3308, %v2059
      %v4044 = vmul.f32 %v3312, %v2060
      %v4045 = vmul.f32 %v3316, %v2061
      %v4046 = vmul.f32 %v3320, %v2062
      %v4047 = vmul.f32 %v3324, %v2063
      %v4048 = vmul.f32 %v3328, %v2064
      %v4049 = vmul.f32 %v3332, %v2065
      %v4050 = vmul.f32 %v3336, %v2066
      %v4051 = vmul.f32 %v3340, %v2067
      %v4052 = vmul.f32 %v3344, %v2068
      %v4053 = vmul.f32 %v3348, %v2069
      %v4054 = vmul.f32 %v3352, %v2070
      %v4055 = vmul.f32 %v3356, %v2071
      %v4056 = vmul.f32 %v3360, %v2072
      %v4057 = vmul.f32 %v3364, %v2073
      %v4058 = vmul.f32 %v3368, %v2074
      %v4059 = vmul.f32 %v3372, %v2075
      %v4060 = vmul.f32 %v3376, %v2076
      %v4061 = vmul.f32 %v3380, %v2077
      %v4062 = vmul.f32 %v3384, %v2078
      %v4063 = vmul.f32 %v3388, %v2079
      %v4064 = vmul.f32 %v3392, %v2080
      %v4065 = vmul.f32 %v3396, %v2081
      %v4066 = vmul.f32 %v3400, %v2082
      %v4067 = vmul.f32 %v3404, %v2083
      %v4068 = vmul.f32 %v3408, %v2084
      %v4069 = vmul.f32 %v3412, %v2085
      %v4070 = vmul.f32 %v3416, %v2086
      %v4071 = vmul.f32 %v3420, %v2087
      %v4072 = vmul.f32 %v3424, %v2088
      %v4073 = vmul.f32 %v3428, %v2089
      %v4074 = vmul.f32 %v3432, %v2090
      %v4075 = vmul.f32 %v3436, %v2091
      %v4076 = vmul.f32 %v3440, %v2092
      %v4077 = vmul.f32 %v3444, %v2093
      %v4078 = vmul.f32 %v3448, %v2094
      %v4079 = vmul.f32 %v3452, %v2095
      %v4080 = vmul.f32 %v3456, %v2096
      %v4081 = vmul.f32 %v3460, %v2097
      %v4082 = vmul.f32 %v3464, %v2098
      %v4083 = vmul.f32 %v3468, %v2099
      %v4084 = vmul.f32 %v3472, %v2100
      %v4085 = vmul.f32 %v3476, %v2101
      %v4086 = vmul.f32 %v3480, %v2102
      %v4087 = vmul.f32 %v3484, %v2103
      %v4088 = vmul.f32 %v3488, %v2104
      %v4089 = vmul.f32 %v3492, %v2105
      %v4090 = vmul.f32 %v3496, %v2106
      %v4091 = vmul.f32 %v3500, %v2107
      %v4092 = vmul.f32 %v3504, %v2108
      %v4093 = vmul.f32 %v3508, %v2109
      %v4094 = vmul.f32 %v3512, %v2110
      %v4095 = vmul.f32 %v3516, %v2111
      %v4096 = vmul.f32 %v3520, %v2112
      %v4097 = vmul.f32 %v3524, %v2113
      %v4098 = vmul.f32 %v3528, %v2114
      %v4099 = vmul.f32 %v3532, %v2115
      %v4100 = vmul.f32 %v3536, %v2116
      %v4101 = vmul.f32 %v3540, %v2117
      %v4102 = vmul.f32 %v3544, %v2118
      %v4103 = vmul.f32 %v3548, %v2119
      %v4104 = vmul.f32 %v3552, %v2120
      %v4105 = vmul.f32 %v3556, %v2121
      %v4106 = vmul.f32 %v3560, %v2122
      %v4107 = vmul.f32 %v3564, %v2123
      %v4108 = vmul.f32 %v3568, %v2124
      %v4109 = vmul.f32 %v3572, %v2125
      %v4110 = vmul.f32 %v3576, %v2126
      %v4111 = vmul.f32 %v3580, %v2127
      %v4112 = vmul.f32 %v3584, %v2128
      %v4113 = vmul.f32 %v3588, %v2129
      %v4114 = vmul.f32 %v3592, %v2130
      %v4115 = vmul.f32 %v3596, %v2131
      %v4116 = vmul.f32 %v3600, %v2132
      %v4117 = vmul.f32 %v3604, %v2133
      %v4118 = vmul.f32 %v3608, %v2134
      %v4119 = vmul.f32 %v3612, %v2135
      %v4120 = vmul.f32 %v3616, %v2136
      %v4121 = vmul.f32 %v3620, %v2137
      %v4122 = vmul.f32 %v3624, %v2138
      %v4123 = vmul.f32 %v3628, %v2139
      %v4124 = vmul.f32 %v3632, %v2140
      %v4125 = vmul.f32 %v3636, %v2141
      %v4126 = vmul.f32 %v3640, %v2142
      %v4127 = vmul.f32 %v3644, %v2143
      %v4128 = vmul.f32 %v3648, %v2144
      %v4129 = vmul.f32 %v3652, %v2145
      %v4130 = vmul.f32 %v3656, %v2146
      %v4131 = vmul.f32 %v3660, %v2147
      %v4132 = vmul.f32 %v3664, %v2148
      %v4133 = vmul.f32 %v3668, %v2149
      %v4134 = vmul.f32 %v3672, %v2150
      %v4135 = vmul.f32 %v3676, %v2151
      %v4136 = vmul.f32 %v3680, %v2152
      %v4137 = vmul.f32 %v3684, %v2153
      %v4138 = vmul.f32 %v3688, %v2154
      %v4139 = vmul.f32 %v3692, %v2155
      %v4140 = vmul.f32 %v3696, %v2156
      %v4141 = vmul.f32 %v3700, %v2157
      %v4142 = vmul.f32 %v3704, %v2158
      %v4143 = vmul.f32 %v3708, %v2159
      %v4144 = vmul.f32 %v3712, %v2160
      %v4145 = vmul.f32 %v3716, %v2161
      %v4146 = vmul.f32 %v3720, %v2162
      %v4147 = vmul.f32 %v3724, %v2163
      %v4148 = vmul.f32 %v3728, %v2164
      %v4149 = vmul.f32 %v3732, %v2165
      %v4150 = vmul.f32 %v3736, %v2166
      %v4151 = vmul.f32 %v3740, %v2167
      %v4152 = vmul.f32 %v3744, %v2168
      %v4153 = vmul.f32 %v3748, %v2169
      %v4154 = vmul.f32 %v3752, %v2170
      %v4155 = vmul.f32 %v3756, %v2171
      %v4156 = vmul.f32 %v3760, %v2172
      %v4157 = vmul.f32 %v3764, %v2173
      %v4158 = vmul.f32 %v3768, %v2174
      %v4159 = vmul.f32 %v3772, %v2175
      %v4160 = vmul.f32 %v3776, %v2176
      %v4161 = vmul.f32 %v3780, %v2177
      %v4162 = vmul.f32 %v3784, %v2178
      %v4163 = vmul.f32 %v3788, %v2179
      %v4164 = vmul.f32 %v3792, %v2180
      %v4165 = vmul.f32 %v3796, %v2181
      %v4166 = vmul.f32 %v3800, %v2182
      %v4167 = vmul.f32 %v3804, %v2183
      %v4168 = vmul.f32 %v3808, %v2184
      %v4169 = vmul.f32 %v3812, %v2185
      %v4170 = vmul.f32 %v3816, %v2186
      %v4171 = vmul.f32 %v3820, %v2187
      %v4172 = vmul.f32 %v3824, %v2188
      %v4173 = vmul.f32 %v3828, %v2189
      %v4174 = vmul.f32 %v3832, %v2190
      %v4175 = vmul.f32 %v3836, %v2191
      %v4176 = vmul.f32 %v3840, %v2192
      %v4177 = vmul.f32 %v3844, %v2193
      %v4178 = vmul.f32 %v3848, %v2194
      %v4179 = vmul.f32 %v3852, %v2195
      %v4180 = vmul.f32 %v3856, %v2196
      %v4181 = vmul.f32 %v3860, %v2197
      %v4182 = vmul.f32 %v3864, %v2198
      %v4183 = vmul.f32 %v3868, %v2199
      %v4184 = vmul.f32 %v3872, %v2200
      %v4185 = vmul.f32 %v3876, %v2201
      %v4186 = vmul.f32 %v3880, %v2202
      %v4187 = vmul.f32 %v3884, %v2203
      %v4188 = vmul.f32 %v3888, %v2204
      %v4189 = vmul.f32 %v3892, %v2205
      %v4190 = vmul.f32 %v3896, %v2206
      %v4191 = vmul.f32 %v3900, %v2207
      %v4192 = vmul.f32 %v3904, %v2208
      %v4193 = vmul.f32 %v3908, %v2209
      %v4194 = vmul.f32 %v3912, %v2210
      %v4195 = vmul.f32 %v3916, %v2211
      %v4196 = vmul.f32 %v3920, %v2212
      %v4197 = vmul.f32 %v3924, %v2213
      %v4198 = vmul.f32 %v3928, %v2214
      %v4199 = vmul.f32 %v3932, %v2215
      %v4200 = vmul.f32 %v3936, %v2216
      %v4201 = vmul.f32 %v3940, %v2217
      %v4202 = vmul.f32 %v3944, %v2218
      %v4203 = vmul.f32 %v3948, %v2219
      %v4204 = vmul.f32 %v3952, %v2220
      %v4205 = vmul.f32 %v3956, %v2221
      %v4206 = vmul.f32 %v3960, %v2222
      %v4207 = vmul.f32 %v3964, %v2223
      %v4208 = vmul.f32 %v3968, %v2224
      %v4209 = vmul.f32 %v3972, %v2225
      %v4210 = vmul.f32 %v3976, %v2226
      %v4211 = vmul.f32 %v3980, %v2227
      %v4212 = vmul.f32 %v3984, %v2228
      %v4213 = vmul.f32 %v3988, %v2229
      %v4214 = vmul.f32 %v3992, %v2230
      %v4215 = vmul.f32 %v3996, %v2231
      %v4216 = vmul.f32 %v4000, %v2232
      %v4217 = vmul.f32 %v4004, %v2233
      %v4218 = vmul.f32 %v4008, %v2234
      %v4219 = vmul.f32 %v4012, %v2235
      %v4220 = vmul.f32 %v4016, %v2236
      %v4221 = vmul.f32 %v4020, %v2237
      %v4222 = vmul.f32 %v4024, %v2238
      %v4223 = vmul.f32 %v4028, %v2239
      %v4224 = vmul.f32 %v4032, %v2240
      %v4225 = vld [vmem:[#allocation2] sm:$0xff]
      %v4226 = vld [vmem:[#allocation2 + $0x8] sm:$0xff]
      %v4227 = vld [vmem:[#allocation2 + $0x10] sm:$0xff]
      %v4228 = vld [vmem:[#allocation2 + $0x18] sm:$0xff]
      %v4229 = vld [vmem:[#allocation2 + $0x20] sm:$0xff]
      %v4230 = vld [vmem:[#allocation2 + $0x28] sm:$0xff]
      %v4231 = vld [vmem:[#allocation2 + $0x30] sm:$0xff]
      %v4232 = vld [vmem:[#allocation2 + $0x38] sm:$0xff]
      %v4233 = vld [vmem:[#allocation2 + $0x40] sm:$0xff]
      %v4234 = vld [vmem:[#allocation2 + $0x48] sm:$0xff]
      %v4235 = vld [vmem:[#allocation2 + $0x50] sm:$0xff]
      %v4236 = vld [vmem:[#allocation2 + $0x58] sm:$0xff]
      %v4237 = vld [vmem:[#allocation2 + $0x60] sm:$0xff]
      %v4238 = vld [vmem:[#allocation2 + $0x68] sm:$0xff]
      %v4239 = vld [vmem:[#allocation2 + $0x70] sm:$0xff]
      %v4240 = vld [vmem:[#allocation2 + $0x78] sm:$0xff]
      %v4241 = vld [vmem:[#allocation2 + $0x80] sm:$0xff]
      %v4242 = vld [vmem:[#allocation2 + $0x88] sm:$0xff]
      %v4243 = vld [vmem:[#allocation2 + $0x90] sm:$0xff]
      %v4244 = vld [vmem:[#allocation2 + $0x98] sm:$0xff]
      %v4245 = vld [vmem:[#allocation2 + $0xa0] sm:$0xff]
      %v4246 = vld [vmem:[#allocation2 + $0xa8] sm:$0xff]
      %v4247 = vld [vmem:[#allocation2 + $0xb0] sm:$0xff]
      %v4248 = vld [vmem:[#allocation2 + $0xb8] sm:$0xff]
      %v4249 = vld [vmem:[#allocation2 + $0xc0] sm:$0xff]
      %v4250 = vld [vmem:[#allocation2 + $0xc8] sm:$0xff]
      %v4251 = vld [vmem:[#allocation2 + $0xd0] sm:$0xff]
      %v4252 = vld [vmem:[#allocation2 + $0xd8] sm:$0xff]
      %v4253 = vld [vmem:[#allocation2 + $0xe0] sm:$0xff]
      %v4254 = vld [vmem:[#allocation2 + $0xe8] sm:$0xff]
      %v4255 = vld [vmem:[#allocation2 + $0xf0] sm:$0xff]
      %v4256 = vld [vmem:[#allocation2 + $0xf8] sm:$0xff]
      %v4257 = vld [vmem:[#allocation2 + $0x100] sm:$0xff]
      %v4258 = vld [vmem:[#allocation2 + $0x108] sm:$0xff]
      %v4259 = vld [vmem:[#allocation2 + $0x110] sm:$0xff]
      %v4260 = vld [vmem:[#allocation2 + $0x118] sm:$0xff]
      %v4261 = vld [vmem:[#allocation2 + $0x120] sm:$0xff]
      %v4262 = vld [vmem:[#allocation2 + $0x128] sm:$0xff]
      %v4263 = vld [vmem:[#allocation2 + $0x130] sm:$0xff]
      %v4264 = vld [vmem:[#allocation2 + $0x138] sm:$0xff]
      %v4265 = vld [vmem:[#allocation2 + $0x140] sm:$0xff]
      %v4266 = vld [vmem:[#allocation2 + $0x148] sm:$0xff]
      %v4267 = vld [vmem:[#allocation2 + $0x150] sm:$0xff]
      %v4268 = vld [vmem:[#allocation2 + $0x158] sm:$0xff]
      %v4269 = vld [vmem:[#allocation2 + $0x160] sm:$0xff]
      %v4270 = vld [vmem:[#allocation2 + $0x168] sm:$0xff]
      %v4271 = vld [vmem:[#allocation2 + $0x170] sm:$0xff]
      %v4272 = vld [vmem:[#allocation2 + $0x178] sm:$0xff]
      %v4273 = vld [vmem:[#allocation2 + $0x180] sm:$0xff]
      %v4274 = vld [vmem:[#allocation2 + $0x188] sm:$0xff]
      %v4275 = vld [vmem:[#allocation2 + $0x190] sm:$0xff]
      %v4276 = vld [vmem:[#allocation2 + $0x198] sm:$0xff]
      %v4277 = vld [vmem:[#allocation2 + $0x1a0] sm:$0xff]
      %v4278 = vld [vmem:[#allocation2 + $0x1a8] sm:$0xff]
      %v4279 = vld [vmem:[#allocation2 + $0x1b0] sm:$0xff]
      %v4280 = vld [vmem:[#allocation2 + $0x1b8] sm:$0xff]
      %v4281 = vld [vmem:[#allocation2 + $0x1c0] sm:$0xff]
      %v4282 = vld [vmem:[#allocation2 + $0x1c8] sm:$0xff]
      %v4283 = vld [vmem:[#allocation2 + $0x1d0] sm:$0xff]
      %v4284 = vld [vmem:[#allocation2 + $0x1d8] sm:$0xff]
      %v4285 = vld [vmem:[#allocation2 + $0x1e0] sm:$0xff]
      %v4286 = vld [vmem:[#allocation2 + $0x1e8] sm:$0xff]
      %v4287 = vld [vmem:[#allocation2 + $0x1f0] sm:$0xff]
      %v4288 = vld [vmem:[#allocation2 + $0x1f8] sm:$0xff]
      %v4289 = vadd.f32 %v4033, %v4034
      %v4290 = vadd.f32 %v4289, %v4035
      %4291 = vadd.xlane.f32.xlu0 %v4290
      %v4292 = vpop.xlane.xlu0 %4291
      %v4293 = vadd.f32 %v4036, %v4037
      %v4294 = vadd.f32 %v4293, %v4038
      %4295 = vadd.xlane.f32.xlu0 %v4294
      %v4296 = vpop.xlane.xlu0 %4295
      %v4297 = vadd.f32 %v4039, %v4040
      %v4298 = vadd.f32 %v4297, %v4041
      %4299 = vadd.xlane.f32.xlu0 %v4298
      %v4300 = vpop.xlane.xlu0 %4299
      %v4301 = vadd.f32 %v4042, %v4043
      %v4302 = vadd.f32 %v4301, %v4044
      %4303 = vadd.xlane.f32.xlu0 %v4302
      %v4304 = vpop.xlane.xlu0 %4303
      %v4305 = vadd.f32 %v4045, %v4046
      %v4306 = vadd.f32 %v4305, %v4047
      %4307 = vadd.xlane.f32.xlu0 %v4306
      %v4308 = vpop.xlane.xlu0 %4307
      %v4309 = vadd.f32 %v4048, %v4049
      %v4310 = vadd.f32 %v4309, %v4050
      %4311 = vadd.xlane.f32.xlu0 %v4310
      %v4312 = vpop.xlane.xlu0 %4311
      %v4313 = vadd.f32 %v4051, %v4052
      %v4314 = vadd.f32 %v4313, %v4053
      %4315 = vadd.xlane.f32.xlu0 %v4314
      %v4316 = vpop.xlane.xlu0 %4315
      %v4317 = vadd.f32 %v4054, %v4055
      %v4318 = vadd.f32 %v4317, %v4056
      %4319 = vadd.xlane.f32.xlu0 %v4318
      %v4320 = vpop.xlane.xlu0 %4319
      %v4321 = vadd.f32 %v4057, %v4058
      %v4322 = vadd.f32 %v4321, %v4059
      %4323 = vadd.xlane.f32.xlu0 %v4322
      %v4324 = vpop.xlane.xlu0 %4323
      %v4325 = vadd.f32 %v4060, %v4061
      %v4326 = vadd.f32 %v4325, %v4062
      %4327 = vadd.xlane.f32.xlu0 %v4326
      %v4328 = vpop.xlane.xlu0 %4327
      %v4329 = vadd.f32 %v4063, %v4064
      %v4330 = vadd.f32 %v4329, %v4065
      %4331 = vadd.xlane.f32.xlu0 %v4330
      %v4332 = vpop.xlane.xlu0 %4331
      %v4333 = vadd.f32 %v4066, %v4067
      %v4334 = vadd.f32 %v4333, %v4068
      %4335 = vadd.xlane.f32.xlu0 %v4334
      %v4336 = vpop.xlane.xlu0 %4335
      %v4337 = vadd.f32 %v4069, %v4070
      %v4338 = vadd.f32 %v4337, %v4071
      %4339 = vadd.xlane.f32.xlu0 %v4338
      %v4340 = vpop.xlane.xlu0 %4339
      %v4341 = vadd.f32 %v4072, %v4073
      %v4342 = vadd.f32 %v4341, %v4074
      %4343 = vadd.xlane.f32.xlu0 %v4342
      %v4344 = vpop.xlane.xlu0 %4343
      %v4345 = vadd.f32 %v4075, %v4076
      %v4346 = vadd.f32 %v4345, %v4077
      %4347 = vadd.xlane.f32.xlu0 %v4346
      %v4348 = vpop.xlane.xlu0 %4347
      %v4349 = vadd.f32 %v4078, %v4079
      %v4350 = vadd.f32 %v4349, %v4080
      %4351 = vadd.xlane.f32.xlu0 %v4350
      %v4352 = vpop.xlane.xlu0 %4351
      %v4353 = vadd.f32 %v4081, %v4082
      %v4354 = vadd.f32 %v4353, %v4083
      %4355 = vadd.xlane.f32.xlu0 %v4354
      %v4356 = vpop.xlane.xlu0 %4355
      %v4357 = vadd.f32 %v4084, %v4085
      %v4358 = vadd.f32 %v4357, %v4086
      %4359 = vadd.xlane.f32.xlu0 %v4358
      %v4360 = vpop.xlane.xlu0 %4359
      %v4361 = vadd.f32 %v4087, %v4088
      %v4362 = vadd.f32 %v4361, %v4089
      %4363 = vadd.xlane.f32.xlu0 %v4362
      %v4364 = vpop.xlane.xlu0 %4363
      %v4365 = vadd.f32 %v4090, %v4091
      %v4366 = vadd.f32 %v4365, %v4092
      %4367 = vadd.xlane.f32.xlu0 %v4366
      %v4368 = vpop.xlane.xlu0 %4367
      %v4369 = vadd.f32 %v4093, %v4094
      %v4370 = vadd.f32 %v4369, %v4095
      %4371 = vadd.xlane.f32.xlu0 %v4370
      %v4372 = vpop.xlane.xlu0 %4371
      %v4373 = vadd.f32 %v4096, %v4097
      %v4374 = vadd.f32 %v4373, %v4098
      %4375 = vadd.xlane.f32.xlu0 %v4374
      %v4376 = vpop.xlane.xlu0 %4375
      %v4377 = vadd.f32 %v4099, %v4100
      %v4378 = vadd.f32 %v4377, %v4101
      %4379 = vadd.xlane.f32.xlu0 %v4378
      %v4380 = vpop.xlane.xlu0 %4379
      %v4381 = vadd.f32 %v4102, %v4103
      %v4382 = vadd.f32 %v4381, %v4104
      %4383 = vadd.xlane.f32.xlu0 %v4382
      %v4384 = vpop.xlane.xlu0 %4383
      %v4385 = vadd.f32 %v4105, %v4106
      %v4386 = vadd.f32 %v4385, %v4107
      %4387 = vadd.xlane.f32.xlu0 %v4386
      %v4388 = vpop.xlane.xlu0 %4387
      %v4389 = vadd.f32 %v4108, %v4109
      %v4390 = vadd.f32 %v4389, %v4110
      %4391 = vadd.xlane.f32.xlu0 %v4390
      %v4392 = vpop.xlane.xlu0 %4391
      %v4393 = vadd.f32 %v4111, %v4112
      %v4394 = vadd.f32 %v4393, %v4113
      %4395 = vadd.xlane.f32.xlu0 %v4394
      %v4396 = vpop.xlane.xlu0 %4395
      %v4397 = vadd.f32 %v4114, %v4115
      %v4398 = vadd.f32 %v4397, %v4116
      %4399 = vadd.xlane.f32.xlu0 %v4398
      %v4400 = vpop.xlane.xlu0 %4399
      %v4401 = vadd.f32 %v4117, %v4118
      %v4402 = vadd.f32 %v4401, %v4119
      %4403 = vadd.xlane.f32.xlu0 %v4402
      %v4404 = vpop.xlane.xlu0 %4403
      %v4405 = vadd.f32 %v4120, %v4121
      %v4406 = vadd.f32 %v4405, %v4122
      %4407 = vadd.xlane.f32.xlu0 %v4406
      %v4408 = vpop.xlane.xlu0 %4407
      %v4409 = vadd.f32 %v4123, %v4124
      %v4410 = vadd.f32 %v4409, %v4125
      %4411 = vadd.xlane.f32.xlu0 %v4410
      %v4412 = vpop.xlane.xlu0 %4411
      %v4413 = vadd.f32 %v4126, %v4127
      %v4414 = vadd.f32 %v4413, %v4128
      %4415 = vadd.xlane.f32.xlu0 %v4414
      %v4416 = vpop.xlane.xlu0 %4415
      %v4417 = vadd.f32 %v4129, %v4130
      %v4418 = vadd.f32 %v4417, %v4131
      %4419 = vadd.xlane.f32.xlu0 %v4418
      %v4420 = vpop.xlane.xlu0 %4419
      %v4421 = vadd.f32 %v4132, %v4133
      %v4422 = vadd.f32 %v4421, %v4134
      %4423 = vadd.xlane.f32.xlu0 %v4422
      %v4424 = vpop.xlane.xlu0 %4423
      %v4425 = vadd.f32 %v4135, %v4136
      %v4426 = vadd.f32 %v4425, %v4137
      %4427 = vadd.xlane.f32.xlu0 %v4426
      %v4428 = vpop.xlane.xlu0 %4427
      %v4429 = vadd.f32 %v4138, %v4139
      %v4430 = vadd.f32 %v4429, %v4140
      %4431 = vadd.xlane.f32.xlu0 %v4430
      %v4432 = vpop.xlane.xlu0 %4431
      %v4433 = vadd.f32 %v4141, %v4142
      %v4434 = vadd.f32 %v4433, %v4143
      %4435 = vadd.xlane.f32.xlu0 %v4434
      %v4436 = vpop.xlane.xlu0 %4435
      %v4437 = vadd.f32 %v4144, %v4145
      %v4438 = vadd.f32 %v4437, %v4146
      %4439 = vadd.xlane.f32.xlu0 %v4438
      %v4440 = vpop.xlane.xlu0 %4439
      %v4441 = vadd.f32 %v4147, %v4148
      %v4442 = vadd.f32 %v4441, %v4149
      %4443 = vadd.xlane.f32.xlu0 %v4442
      %v4444 = vpop.xlane.xlu0 %4443
      %v4445 = vadd.f32 %v4150, %v4151
      %v4446 = vadd.f32 %v4445, %v4152
      %4447 = vadd.xlane.f32.xlu0 %v4446
      %v4448 = vpop.xlane.xlu0 %4447
      %v4449 = vadd.f32 %v4153, %v4154
      %v4450 = vadd.f32 %v4449, %v4155
      %4451 = vadd.xlane.f32.xlu0 %v4450
      %v4452 = vpop.xlane.xlu0 %4451
      %v4453 = vadd.f32 %v4156, %v4157
      %v4454 = vadd.f32 %v4453, %v4158
      %4455 = vadd.xlane.f32.xlu0 %v4454
      %v4456 = vpop.xlane.xlu0 %4455
      %v4457 = vadd.f32 %v4159, %v4160
      %v4458 = vadd.f32 %v4457, %v4161
      %4459 = vadd.xlane.f32.xlu0 %v4458
      %v4460 = vpop.xlane.xlu0 %4459
      %v4461 = vadd.f32 %v4162, %v4163
      %v4462 = vadd.f32 %v4461, %v4164
      %4463 = vadd.xlane.f32.xlu0 %v4462
      %v4464 = vpop.xlane.xlu0 %4463
      %v4465 = vadd.f32 %v4165, %v4166
      %v4466 = vadd.f32 %v4465, %v4167
      %4467 = vadd.xlane.f32.xlu0 %v4466
      %v4468 = vpop.xlane.xlu0 %4467
      %v4469 = vadd.f32 %v4168, %v4169
      %v4470 = vadd.f32 %v4469, %v4170
      %4471 = vadd.xlane.f32.xlu0 %v4470
      %v4472 = vpop.xlane.xlu0 %4471
      %v4473 = vadd.f32 %v4171, %v4172
      %v4474 = vadd.f32 %v4473, %v4173
      %4475 = vadd.xlane.f32.xlu0 %v4474
      %v4476 = vpop.xlane.xlu0 %4475
      %v4477 = vadd.f32 %v4174, %v4175
      %v4478 = vadd.f32 %v4477, %v4176
      %4479 = vadd.xlane.f32.xlu0 %v4478
      %v4480 = vpop.xlane.xlu0 %4479
      %v4481 = vadd.f32 %v4177, %v4178
      %v4482 = vadd.f32 %v4481, %v4179
      %4483 = vadd.xlane.f32.xlu0 %v4482
      %v4484 = vpop.xlane.xlu0 %4483
      %v4485 = vadd.f32 %v4180, %v4181
      %v4486 = vadd.f32 %v4485, %v4182
      %4487 = vadd.xlane.f32.xlu0 %v4486
      %v4488 = vpop.xlane.xlu0 %4487
      %v4489 = vadd.f32 %v4183, %v4184
      %v4490 = vadd.f32 %v4489, %v4185
      %4491 = vadd.xlane.f32.xlu0 %v4490
      %v4492 = vpop.xlane.xlu0 %4491
      %v4493 = vadd.f32 %v4186, %v4187
      %v4494 = vadd.f32 %v4493, %v4188
      %4495 = vadd.xlane.f32.xlu0 %v4494
      %v4496 = vpop.xlane.xlu0 %4495
      %v4497 = vadd.f32 %v4189, %v4190
      %v4498 = vadd.f32 %v4497, %v4191
      %4499 = vadd.xlane.f32.xlu0 %v4498
      %v4500 = vpop.xlane.xlu0 %4499
      %v4501 = vadd.f32 %v4192, %v4193
      %v4502 = vadd.f32 %v4501, %v4194
      %4503 = vadd.xlane.f32.xlu0 %v4502
      %v4504 = vpop.xlane.xlu0 %4503
      %v4505 = vadd.f32 %v4195, %v4196
      %v4506 = vadd.f32 %v4505, %v4197
      %4507 = vadd.xlane.f32.xlu0 %v4506
      %v4508 = vpop.xlane.xlu0 %4507
      %v4509 = vadd.f32 %v4198, %v4199
      %v4510 = vadd.f32 %v4509, %v4200
      %4511 = vadd.xlane.f32.xlu0 %v4510
      %v4512 = vpop.xlane.xlu0 %4511
      %v4513 = vadd.f32 %v4201, %v4202
      %v4514 = vadd.f32 %v4513, %v4203
      %4515 = vadd.xlane.f32.xlu0 %v4514
      %v4516 = vpop.xlane.xlu0 %4515
      %v4517 = vadd.f32 %v4204, %v4205
      %v4518 = vadd.f32 %v4517, %v4206
      %4519 = vadd.xlane.f32.xlu0 %v4518
      %v4520 = vpop.xlane.xlu0 %4519
      %v4521 = vadd.f32 %v4207, %v4208
      %v4522 = vadd.f32 %v4521, %v4209
      %4523 = vadd.xlane.f32.xlu0 %v4522
      %v4524 = vpop.xlane.xlu0 %4523
      %v4525 = vadd.f32 %v4210, %v4211
      %v4526 = vadd.f32 %v4525, %v4212
      %4527 = vadd.xlane.f32.xlu0 %v4526
      %v4528 = vpop.xlane.xlu0 %4527
      %v4529 = vadd.f32 %v4213, %v4214
      %v4530 = vadd.f32 %v4529, %v4215
      %4531 = vadd.xlane.f32.xlu0 %v4530
      %v4532 = vpop.xlane.xlu0 %4531
      %v4533 = vadd.f32 %v4216, %v4217
      %v4534 = vadd.f32 %v4533, %v4218
      %4535 = vadd.xlane.f32.xlu0 %v4534
      %v4536 = vpop.xlane.xlu0 %4535
      %v4537 = vadd.f32 %v4219, %v4220
      %v4538 = vadd.f32 %v4537, %v4221
      %4539 = vadd.xlane.f32.xlu0 %v4538
      %v4540 = vpop.xlane.xlu0 %4539
      %v4541 = vadd.f32 %v4222, %v4223
      %v4542 = vadd.f32 %v4541, %v4224
      %4543 = vadd.xlane.f32.xlu0 %v4542
      %v4544 = vpop.xlane.xlu0 %4543
      %v4545 = vadd.f32 %v4225, %v4292
      %v4546 = vadd.f32 %v4226, %v4296
      %v4547 = vadd.f32 %v4227, %v4300
      %v4548 = vadd.f32 %v4228, %v4304
      %v4549 = vadd.f32 %v4229, %v4308
      %v4550 = vadd.f32 %v4230, %v4312
      %v4551 = vadd.f32 %v4231, %v4316
      %v4552 = vadd.f32 %v4232, %v4320
      %v4553 = vadd.f32 %v4233, %v4324
      %v4554 = vadd.f32 %v4234, %v4328
      %v4555 = vadd.f32 %v4235, %v4332
      %v4556 = vadd.f32 %v4236, %v4336
      %v4557 = vadd.f32 %v4237, %v4340
      %v4558 = vadd.f32 %v4238, %v4344
      %v4559 = vadd.f32 %v4239, %v4348
      %v4560 = vadd.f32 %v4240, %v4352
      %v4561 = vadd.f32 %v4241, %v4356
      %v4562 = vadd.f32 %v4242, %v4360
      %v4563 = vadd.f32 %v4243, %v4364
      %v4564 = vadd.f32 %v4244, %v4368
      %v4565 = vadd.f32 %v4245, %v4372
      %v4566 = vadd.f32 %v4246, %v4376
      %v4567 = vadd.f32 %v4247, %v4380
      %v4568 = vadd.f32 %v4248, %v4384
      %v4569 = vadd.f32 %v4249, %v4388
      %v4570 = vadd.f32 %v4250, %v4392
      %v4571 = vadd.f32 %v4251, %v4396
      %v4572 = vadd.f32 %v4252, %v4400
      %v4573 = vadd.f32 %v4253, %v4404
      %v4574 = vadd.f32 %v4254, %v4408
      %v4575 = vadd.f32 %v4255, %v4412
      %v4576 = vadd.f32 %v4256, %v4416
      %v4577 = vadd.f32 %v4257, %v4420
      %v4578 = vadd.f32 %v4258, %v4424
      %v4579 = vadd.f32 %v4259, %v4428
      %v4580 = vadd.f32 %v4260, %v4432
      %v4581 = vadd.f32 %v4261, %v4436
      %v4582 = vadd.f32 %v4262, %v4440
      %v4583 = vadd.f32 %v4263, %v4444
      %v4584 = vadd.f32 %v4264, %v4448
      %v4585 = vadd.f32 %v4265, %v4452
      %v4586 = vadd.f32 %v4266, %v4456
      %v4587 = vadd.f32 %v4267, %v4460
      %v4588 = vadd.f32 %v4268, %v4464
      %v4589 = vadd.f32 %v4269, %v4468
      %v4590 = vadd.f32 %v4270, %v4472
      %v4591 = vadd.f32 %v4271, %v4476
      %v4592 = vadd.f32 %v4272, %v4480
      %v4593 = vadd.f32 %v4273, %v4484
      %v4594 = vadd.f32 %v4274, %v4488
      %v4595 = vadd.f32 %v4275, %v4492
      %v4596 = vadd.f32 %v4276, %v4496
      %v4597 = vadd.f32 %v4277, %v4500
      %v4598 = vadd.f32 %v4278, %v4504
      %v4599 = vadd.f32 %v4279, %v4508
      %v4600 = vadd.f32 %v4280, %v4512
      %v4601 = vadd.f32 %v4281, %v4516
      %v4602 = vadd.f32 %v4282, %v4520
      %v4603 = vadd.f32 %v4283, %v4524
      %v4604 = vadd.f32 %v4284, %v4528
      %v4605 = vadd.f32 %v4285, %v4532
      %v4606 = vadd.f32 %v4286, %v4536
      %v4607 = vadd.f32 %v4287, %v4540
      %v4608 = vadd.f32 %v4288, %v4544
      %vm4609 = vcmask 7168
      %4610 = vst.msk [vmem:[#allocation2] sm:$0xff] %vm4609, %v4545
      %4611 = vst.msk [vmem:[#allocation2 + $0x8] sm:$0xff] %vm4609, %v4546
      %4612 = vst.msk [vmem:[#allocation2 + $0x10] sm:$0xff] %vm4609, %v4547
      %4613 = vst.msk [vmem:[#allocation2 + $0x18] sm:$0xff] %vm4609, %v4548
      %4614 = vst.msk [vmem:[#allocation2 + $0x20] sm:$0xff] %vm4609, %v4549
      %4615 = vst.msk [vmem:[#allocation2 + $0x28] sm:$0xff] %vm4609, %v4550
      %4616 = vst.msk [vmem:[#allocation2 + $0x30] sm:$0xff] %vm4609, %v4551
      %4617 = vst.msk [vmem:[#allocation2 + $0x38] sm:$0xff] %vm4609, %v4552
      %4618 = vst.msk [vmem:[#allocation2 + $0x40] sm:$0xff] %vm4609, %v4553
      %4619 = vst.msk [vmem:[#allocation2 + $0x48] sm:$0xff] %vm4609, %v4554
      %4620 = vst.msk [vmem:[#allocation2 + $0x50] sm:$0xff] %vm4609, %v4555
      %4621 = vst.msk [vmem:[#allocation2 + $0x58] sm:$0xff] %vm4609, %v4556
      %4622 = vst.msk [vmem:[#allocation2 + $0x60] sm:$0xff] %vm4609, %v4557
      %4623 = vst.msk [vmem:[#allocation2 + $0x68] sm:$0xff] %vm4609, %v4558
      %4624 = vst.msk [vmem:[#allocation2 + $0x70] sm:$0xff] %vm4609, %v4559
      %4625 = vst.msk [vmem:[#allocation2 + $0x78] sm:$0xff] %vm4609, %v4560
      %4626 = vst.msk [vmem:[#allocation2 + $0x80] sm:$0xff] %vm4609, %v4561
      %4627 = vst.msk [vmem:[#allocation2 + $0x88] sm:$0xff] %vm4609, %v4562
      %4628 = vst.msk [vmem:[#allocation2 + $0x90] sm:$0xff] %vm4609, %v4563
      %4629 = vst.msk [vmem:[#allocation2 + $0x98] sm:$0xff] %vm4609, %v4564
      %4630 = vst.msk [vmem:[#allocation2 + $0xa0] sm:$0xff] %vm4609, %v4565
      %4631 = vst.msk [vmem:[#allocation2 + $0xa8] sm:$0xff] %vm4609, %v4566
      %4632 = vst.msk [vmem:[#allocation2 + $0xb0] sm:$0xff] %vm4609, %v4567
      %4633 = vst.msk [vmem:[#allocation2 + $0xb8] sm:$0xff] %vm4609, %v4568
      %4634 = vst.msk [vmem:[#allocation2 + $0xc0] sm:$0xff] %vm4609, %v4569
      %4635 = vst.msk [vmem:[#allocation2 + $0xc8] sm:$0xff] %vm4609, %v4570
      %4636 = vst.msk [vmem:[#allocation2 + $0xd0] sm:$0xff] %vm4609, %v4571
      %4637 = vst.msk [vmem:[#allocation2 + $0xd8] sm:$0xff] %vm4609, %v4572
      %4638 = vst.msk [vmem:[#allocation2 + $0xe0] sm:$0xff] %vm4609, %v4573
      %4639 = vst.msk [vmem:[#allocation2 + $0xe8] sm:$0xff] %vm4609, %v4574
      %4640 = vst.msk [vmem:[#allocation2 + $0xf0] sm:$0xff] %vm4609, %v4575
      %4641 = vst.msk [vmem:[#allocation2 + $0xf8] sm:$0xff] %vm4609, %v4576
      %4642 = vst.msk [vmem:[#allocation2 + $0x100] sm:$0xff] %vm4609, %v4577
      %4643 = vst.msk [vmem:[#allocation2 + $0x108] sm:$0xff] %vm4609, %v4578
      %4644 = vst.msk [vmem:[#allocation2 + $0x110] sm:$0xff] %vm4609, %v4579
      %4645 = vst.msk [vmem:[#allocation2 + $0x118] sm:$0xff] %vm4609, %v4580
      %4646 = vst.msk [vmem:[#allocation2 + $0x120] sm:$0xff] %vm4609, %v4581
      %4647 = vst.msk [vmem:[#allocation2 + $0x128] sm:$0xff] %vm4609, %v4582
      %4648 = vst.msk [vmem:[#allocation2 + $0x130] sm:$0xff] %vm4609, %v4583
      %4649 = vst.msk [vmem:[#allocation2 + $0x138] sm:$0xff] %vm4609, %v4584
      %4650 = vst.msk [vmem:[#allocation2 + $0x140] sm:$0xff] %vm4609, %v4585
      %4651 = vst.msk [vmem:[#allocation2 + $0x148] sm:$0xff] %vm4609, %v4586
      %4652 = vst.msk [vmem:[#allocation2 + $0x150] sm:$0xff] %vm4609, %v4587
      %4653 = vst.msk [vmem:[#allocation2 + $0x158] sm:$0xff] %vm4609, %v4588
      %4654 = vst.msk [vmem:[#allocation2 + $0x160] sm:$0xff] %vm4609, %v4589
      %4655 = vst.msk [vmem:[#allocation2 + $0x168] sm:$0xff] %vm4609, %v4590
      %4656 = vst.msk [vmem:[#allocation2 + $0x170] sm:$0xff] %vm4609, %v4591
      %4657 = vst.msk [vmem:[#allocation2 + $0x178] sm:$0xff] %vm4609, %v4592
      %4658 = vst.msk [vmem:[#allocation2 + $0x180] sm:$0xff] %vm4609, %v4593
      %4659 = vst.msk [vmem:[#allocation2 + $0x188] sm:$0xff] %vm4609, %v4594
      %4660 = vst.msk [vmem:[#allocation2 + $0x190] sm:$0xff] %vm4609, %v4595
      %4661 = vst.msk [vmem:[#allocation2 + $0x198] sm:$0xff] %vm4609, %v4596
      %4662 = vst.msk [vmem:[#allocation2 + $0x1a0] sm:$0xff] %vm4609, %v4597
      %4663 = vst.msk [vmem:[#allocation2 + $0x1a8] sm:$0xff] %vm4609, %v4598
      %4664 = vst.msk [vmem:[#allocation2 + $0x1b0] sm:$0xff] %vm4609, %v4599
      %4665 = vst.msk [vmem:[#allocation2 + $0x1b8] sm:$0xff] %vm4609, %v4600
      %4666 = vst.msk [vmem:[#allocation2 + $0x1c0] sm:$0xff] %vm4609, %v4601
      %4667 = vst.msk [vmem:[#allocation2 + $0x1c8] sm:$0xff] %vm4609, %v4602
      %4668 = vst.msk [vmem:[#allocation2 + $0x1d0] sm:$0xff] %vm4609, %v4603
      %4669 = vst.msk [vmem:[#allocation2 + $0x1d8] sm:$0xff] %vm4609, %v4604
      %4670 = vst.msk [vmem:[#allocation2 + $0x1e0] sm:$0xff] %vm4609, %v4605
      %4671 = vst.msk [vmem:[#allocation2 + $0x1e8] sm:$0xff] %vm4609, %v4606
      %4672 = vst.msk [vmem:[#allocation2 + $0x1f0] sm:$0xff] %vm4609, %v4607
      %4673 = vst.msk [vmem:[#allocation2 + $0x1f8] sm:$0xff] %vm4609, %v4608
      // Predicated region
      $region37: #{tpu_custom_call.1} parent=31 // pred_check
        %p4674 = pneg %p246
      $region38: #{tpu_custom_call.1} parent=31 // pred_check_branch
        %4676 = sbr.rel (%p4674) target = $region40
      $region39: #{tpu_custom_call.1} parent=31 // pred_region
        %v4677 = vld [vmem:[%s221] sm:$0xff]
        %v4678 = vld [vmem:[%s221 + $0x8] sm:$0xff]
        %v4679 = vld [vmem:[%s221 + $0x10] sm:$0xff]
        %v4680 = vld [vmem:[%s221 + $0x18] sm:$0xff]
        %v4681 = vld [vmem:[%s221 + $0x20] sm:$0xff]
        %v4682 = vld [vmem:[%s221 + $0x28] sm:$0xff]
        %v4683 = vld [vmem:[%s221 + $0x30] sm:$0xff]
        %v4684 = vld [vmem:[%s221 + $0x38] sm:$0xff]
        %v4685 = vld [vmem:[%s221 + $0x40] sm:$0xff]
        %v4686 = vld [vmem:[%s221 + $0x48] sm:$0xff]
        %v4687 = vld [vmem:[%s221 + $0x50] sm:$0xff]
        %v4688 = vld [vmem:[%s221 + $0x58] sm:$0xff]
        %v4689 = vld [vmem:[%s221 + $0x60] sm:$0xff]
        %v4690 = vld [vmem:[%s221 + $0x68] sm:$0xff]
        %v4691 = vld [vmem:[%s221 + $0x70] sm:$0xff]
        %v4692 = vld [vmem:[%s221 + $0x78] sm:$0xff]
        %v4693 = vld [vmem:[%s221 + $0x80] sm:$0xff]
        %v4694 = vld [vmem:[%s221 + $0x88] sm:$0xff]
        %v4695 = vld [vmem:[%s221 + $0x90] sm:$0xff]
        %v4696 = vld [vmem:[%s221 + $0x98] sm:$0xff]
        %v4697 = vld [vmem:[%s221 + $0xa0] sm:$0xff]
        %v4698 = vld [vmem:[%s221 + $0xa8] sm:$0xff]
        %v4699 = vld [vmem:[%s221 + $0xb0] sm:$0xff]
        %v4700 = vld [vmem:[%s221 + $0xb8] sm:$0xff]
        %v4701 = vld [vmem:[%s221 + $0xc0] sm:$0xff]
        %v4702 = vld [vmem:[%s221 + $0xc8] sm:$0xff]
        %v4703 = vld [vmem:[%s221 + $0xd0] sm:$0xff]
        %v4704 = vld [vmem:[%s221 + $0xd8] sm:$0xff]
        %v4705 = vld [vmem:[%s221 + $0xe0] sm:$0xff]
        %v4706 = vld [vmem:[%s221 + $0xe8] sm:$0xff]
        %v4707 = vld [vmem:[%s221 + $0xf0] sm:$0xff]
        %v4708 = vld [vmem:[%s221 + $0xf8] sm:$0xff]
        %v4709 = vld [vmem:[%s221 + $0x100] sm:$0xff]
        %v4710 = vld [vmem:[%s221 + $0x108] sm:$0xff]
        %v4711 = vld [vmem:[%s221 + $0x110] sm:$0xff]
        %v4712 = vld [vmem:[%s221 + $0x118] sm:$0xff]
        %v4713 = vld [vmem:[%s221 + $0x120] sm:$0xff]
        %v4714 = vld [vmem:[%s221 + $0x128] sm:$0xff]
        %v4715 = vld [vmem:[%s221 + $0x130] sm:$0xff]
        %v4716 = vld [vmem:[%s221 + $0x138] sm:$0xff]
        %v4717 = vld [vmem:[%s221 + $0x140] sm:$0xff]
        %v4718 = vld [vmem:[%s221 + $0x148] sm:$0xff]
        %v4719 = vld [vmem:[%s221 + $0x150] sm:$0xff]
        %v4720 = vld [vmem:[%s221 + $0x158] sm:$0xff]
        %v4721 = vld [vmem:[%s221 + $0x160] sm:$0xff]
        %v4722 = vld [vmem:[%s221 + $0x168] sm:$0xff]
        %v4723 = vld [vmem:[%s221 + $0x170] sm:$0xff]
        %v4724 = vld [vmem:[%s221 + $0x178] sm:$0xff]
        %v4725 = vld [vmem:[%s221 + $0x180] sm:$0xff]
        %v4726 = vld [vmem:[%s221 + $0x188] sm:$0xff]
        %v4727 = vld [vmem:[%s221 + $0x190] sm:$0xff]
        %v4728 = vld [vmem:[%s221 + $0x198] sm:$0xff]
        %v4729 = vld [vmem:[%s221 + $0x1a0] sm:$0xff]
        %v4730 = vld [vmem:[%s221 + $0x1a8] sm:$0xff]
        %v4731 = vld [vmem:[%s221 + $0x1b0] sm:$0xff]
        %v4732 = vld [vmem:[%s221 + $0x1b8] sm:$0xff]
        %v4733 = vld [vmem:[%s221 + $0x1c0] sm:$0xff]
        %v4734 = vld [vmem:[%s221 + $0x1c8] sm:$0xff]
        %v4735 = vld [vmem:[%s221 + $0x1d0] sm:$0xff]
        %v4736 = vld [vmem:[%s221 + $0x1d8] sm:$0xff]
        %v4737 = vld [vmem:[%s221 + $0x1e0] sm:$0xff]
        %v4738 = vld [vmem:[%s221 + $0x1e8] sm:$0xff]
        %v4739 = vld [vmem:[%s221 + $0x1f0] sm:$0xff]
        %v4740 = vld [vmem:[%s221 + $0x1f8] sm:$0xff]
        %v4741 = vmul.f32 %v4677, 0.2
        %v4742 = vmul.f32 %v4678, 0.2
        %v4743 = vmul.f32 %v4679, 0.2
        %v4744 = vmul.f32 %v4680, 0.2
        %v4745 = vmul.f32 %v4681, 0.2
        %v4746 = vmul.f32 %v4682, 0.2
        %v4747 = vmul.f32 %v4683, 0.2
        %v4748 = vmul.f32 %v4684, 0.2
        %v4749 = vmul.f32 %v4685, 0.2
        %v4750 = vmul.f32 %v4686, 0.2
        %v4751 = vmul.f32 %v4687, 0.2
        %v4752 = vmul.f32 %v4688, 0.2
        %v4753 = vmul.f32 %v4689, 0.2
        %v4754 = vmul.f32 %v4690, 0.2
        %v4755 = vmul.f32 %v4691, 0.2
        %v4756 = vmul.f32 %v4692, 0.2
        %v4757 = vmul.f32 %v4693, 0.2
        %v4758 = vmul.f32 %v4694, 0.2
        %v4759 = vmul.f32 %v4695, 0.2
        %v4760 = vmul.f32 %v4696, 0.2
        %v4761 = vmul.f32 %v4697, 0.2
        %v4762 = vmul.f32 %v4698, 0.2
        %v4763 = vmul.f32 %v4699, 0.2
        %v4764 = vmul.f32 %v4700, 0.2
        %v4765 = vmul.f32 %v4701, 0.2
        %v4766 = vmul.f32 %v4702, 0.2
        %v4767 = vmul.f32 %v4703, 0.2
        %v4768 = vmul.f32 %v4704, 0.2
        %v4769 = vmul.f32 %v4705, 0.2
        %v4770 = vmul.f32 %v4706, 0.2
        %v4771 = vmul.f32 %v4707, 0.2
        %v4772 = vmul.f32 %v4708, 0.2
        %v4773 = vmul.f32 %v4709, 0.2
        %v4774 = vmul.f32 %v4710, 0.2
        %v4775 = vmul.f32 %v4711, 0.2
        %v4776 = vmul.f32 %v4712, 0.2
        %v4777 = vmul.f32 %v4713, 0.2
        %v4778 = vmul.f32 %v4714, 0.2
        %v4779 = vmul.f32 %v4715, 0.2
        %v4780 = vmul.f32 %v4716, 0.2
        %v4781 = vmul.f32 %v4717, 0.2
        %v4782 = vmul.f32 %v4718, 0.2
        %v4783 = vmul.f32 %v4719, 0.2
        %v4784 = vmul.f32 %v4720, 0.2
        %v4785 = vmul.f32 %v4721, 0.2
        %v4786 = vmul.f32 %v4722, 0.2
        %v4787 = vmul.f32 %v4723, 0.2
        %v4788 = vmul.f32 %v4724, 0.2
        %v4789 = vmul.f32 %v4725, 0.2
        %v4790 = vmul.f32 %v4726, 0.2
        %v4791 = vmul.f32 %v4727, 0.2
        %v4792 = vmul.f32 %v4728, 0.2
        %v4793 = vmul.f32 %v4729, 0.2
        %v4794 = vmul.f32 %v4730, 0.2
        %v4795 = vmul.f32 %v4731, 0.2
        %v4796 = vmul.f32 %v4732, 0.2
        %v4797 = vmul.f32 %v4733, 0.2
        %v4798 = vmul.f32 %v4734, 0.2
        %v4799 = vmul.f32 %v4735, 0.2
        %v4800 = vmul.f32 %v4736, 0.2
        %v4801 = vmul.f32 %v4737, 0.2
        %v4802 = vmul.f32 %v4738, 0.2
        %v4803 = vmul.f32 %v4739, 0.2
        %v4804 = vmul.f32 %v4740, 0.2
        %v4805 = vsub.f32 1.0, %v4741
        %v4806 = vsub.f32 1.0, %v4742
        %v4807 = vsub.f32 1.0, %v4743
        %v4808 = vsub.f32 1.0, %v4744
        %v4809 = vsub.f32 1.0, %v4745
        %v4810 = vsub.f32 1.0, %v4746
        %v4811 = vsub.f32 1.0, %v4747
        %v4812 = vsub.f32 1.0, %v4748
        %v4813 = vsub.f32 1.0, %v4749
        %v4814 = vsub.f32 1.0, %v4750
        %v4815 = vsub.f32 1.0, %v4751
        %v4816 = vsub.f32 1.0, %v4752
        %v4817 = vsub.f32 1.0, %v4753
        %v4818 = vsub.f32 1.0, %v4754
        %v4819 = vsub.f32 1.0, %v4755
        %v4820 = vsub.f32 1.0, %v4756
        %v4821 = vsub.f32 1.0, %v4757
        %v4822 = vsub.f32 1.0, %v4758
        %v4823 = vsub.f32 1.0, %v4759
        %v4824 = vsub.f32 1.0, %v4760
        %v4825 = vsub.f32 1.0, %v4761
        %v4826 = vsub.f32 1.0, %v4762
        %v4827 = vsub.f32 1.0, %v4763
        %v4828 = vsub.f32 1.0, %v4764
        %v4829 = vsub.f32 1.0, %v4765
        %v4830 = vsub.f32 1.0, %v4766
        %v4831 = vsub.f32 1.0, %v4767
        %v4832 = vsub.f32 1.0, %v4768
        %v4833 = vsub.f32 1.0, %v4769
        %v4834 = vsub.f32 1.0, %v4770
        %v4835 = vsub.f32 1.0, %v4771
        %v4836 = vsub.f32 1.0, %v4772
        %v4837 = vsub.f32 1.0, %v4773
        %v4838 = vsub.f32 1.0, %v4774
        %v4839 = vsub.f32 1.0, %v4775
        %v4840 = vsub.f32 1.0, %v4776
        %v4841 = vsub.f32 1.0, %v4777
        %v4842 = vsub.f32 1.0, %v4778
        %v4843 = vsub.f32 1.0, %v4779
        %v4844 = vsub.f32 1.0, %v4780
        %v4845 = vsub.f32 1.0, %v4781
        %v4846 = vsub.f32 1.0, %v4782
        %v4847 = vsub.f32 1.0, %v4783
        %v4848 = vsub.f32 1.0, %v4784
        %v4849 = vsub.f32 1.0, %v4785
        %v4850 = vsub.f32 1.0, %v4786
        %v4851 = vsub.f32 1.0, %v4787
        %v4852 = vsub.f32 1.0, %v4788
        %v4853 = vsub.f32 1.0, %v4789
        %v4854 = vsub.f32 1.0, %v4790
        %v4855 = vsub.f32 1.0, %v4791
        %v4856 = vsub.f32 1.0, %v4792
        %v4857 = vsub.f32 1.0, %v4793
        %v4858 = vsub.f32 1.0, %v4794
        %v4859 = vsub.f32 1.0, %v4795
        %v4860 = vsub.f32 1.0, %v4796
        %v4861 = vsub.f32 1.0, %v4797
        %v4862 = vsub.f32 1.0, %v4798
        %v4863 = vsub.f32 1.0, %v4799
        %v4864 = vsub.f32 1.0, %v4800
        %v4865 = vsub.f32 1.0, %v4801
        %v4866 = vsub.f32 1.0, %v4802
        %v4867 = vsub.f32 1.0, %v4803
        %v4868 = vsub.f32 1.0, %v4804
        %v4869 = vmul.f32 %v4677, %v4805
        %v4870 = vmul.f32 %v4678, %v4806
        %v4871 = vmul.f32 %v4679, %v4807
        %v4872 = vmul.f32 %v4680, %v4808
        %v4873 = vmul.f32 %v4681, %v4809
        %v4874 = vmul.f32 %v4682, %v4810
        %v4875 = vmul.f32 %v4683, %v4811
        %v4876 = vmul.f32 %v4684, %v4812
        %v4877 = vmul.f32 %v4685, %v4813
        %v4878 = vmul.f32 %v4686, %v4814
        %v4879 = vmul.f32 %v4687, %v4815
        %v4880 = vmul.f32 %v4688, %v4816
        %v4881 = vmul.f32 %v4689, %v4817
        %v4882 = vmul.f32 %v4690, %v4818
        %v4883 = vmul.f32 %v4691, %v4819
        %v4884 = vmul.f32 %v4692, %v4820
        %v4885 = vmul.f32 %v4693, %v4821
        %v4886 = vmul.f32 %v4694, %v4822
        %v4887 = vmul.f32 %v4695, %v4823
        %v4888 = vmul.f32 %v4696, %v4824
        %v4889 = vmul.f32 %v4697, %v4825
        %v4890 = vmul.f32 %v4698, %v4826
        %v4891 = vmul.f32 %v4699, %v4827
        %v4892 = vmul.f32 %v4700, %v4828
        %v4893 = vmul.f32 %v4701, %v4829
        %v4894 = vmul.f32 %v4702, %v4830
        %v4895 = vmul.f32 %v4703, %v4831
        %v4896 = vmul.f32 %v4704, %v4832
        %v4897 = vmul.f32 %v4705, %v4833
        %v4898 = vmul.f32 %v4706, %v4834
        %v4899 = vmul.f32 %v4707, %v4835
        %v4900 = vmul.f32 %v4708, %v4836
        %v4901 = vmul.f32 %v4709, %v4837
        %v4902 = vmul.f32 %v4710, %v4838
        %v4903 = vmul.f32 %v4711, %v4839
        %v4904 = vmul.f32 %v4712, %v4840
        %v4905 = vmul.f32 %v4713, %v4841
        %v4906 = vmul.f32 %v4714, %v4842
        %v4907 = vmul.f32 %v4715, %v4843
        %v4908 = vmul.f32 %v4716, %v4844
        %v4909 = vmul.f32 %v4717, %v4845
        %v4910 = vmul.f32 %v4718, %v4846
        %v4911 = vmul.f32 %v4719, %v4847
        %v4912 = vmul.f32 %v4720, %v4848
        %v4913 = vmul.f32 %v4721, %v4849
        %v4914 = vmul.f32 %v4722, %v4850
        %v4915 = vmul.f32 %v4723, %v4851
        %v4916 = vmul.f32 %v4724, %v4852
        %v4917 = vmul.f32 %v4725, %v4853
        %v4918 = vmul.f32 %v4726, %v4854
        %v4919 = vmul.f32 %v4727, %v4855
        %v4920 = vmul.f32 %v4728, %v4856
        %v4921 = vmul.f32 %v4729, %v4857
        %v4922 = vmul.f32 %v4730, %v4858
        %v4923 = vmul.f32 %v4731, %v4859
        %v4924 = vmul.f32 %v4732, %v4860
        %v4925 = vmul.f32 %v4733, %v4861
        %v4926 = vmul.f32 %v4734, %v4862
        %v4927 = vmul.f32 %v4735, %v4863
        %v4928 = vmul.f32 %v4736, %v4864
        %v4929 = vmul.f32 %v4737, %v4865
        %v4930 = vmul.f32 %v4738, %v4866
        %v4931 = vmul.f32 %v4739, %v4867
        %v4932 = vmul.f32 %v4740, %v4868
        %v4933 = vsub.f32 %v4677, 1.0
        %v4934 = vsub.f32 %v4678, 1.0
        %v4935 = vsub.f32 %v4679, 1.0
        %v4936 = vsub.f32 %v4680, 1.0
        %v4937 = vsub.f32 %v4681, 1.0
        %v4938 = vsub.f32 %v4682, 1.0
        %v4939 = vsub.f32 %v4683, 1.0
        %v4940 = vsub.f32 %v4684, 1.0
        %v4941 = vsub.f32 %v4685, 1.0
        %v4942 = vsub.f32 %v4686, 1.0
        %v4943 = vsub.f32 %v4687, 1.0
        %v4944 = vsub.f32 %v4688, 1.0
        %v4945 = vsub.f32 %v4689, 1.0
        %v4946 = vsub.f32 %v4690, 1.0
        %v4947 = vsub.f32 %v4691, 1.0
        %v4948 = vsub.f32 %v4692, 1.0
        %v4949 = vsub.f32 %v4693, 1.0
        %v4950 = vsub.f32 %v4694, 1.0
        %v4951 = vsub.f32 %v4695, 1.0
        %v4952 = vsub.f32 %v4696, 1.0
        %v4953 = vsub.f32 %v4697, 1.0
        %v4954 = vsub.f32 %v4698, 1.0
        %v4955 = vsub.f32 %v4699, 1.0
        %v4956 = vsub.f32 %v4700, 1.0
        %v4957 = vsub.f32 %v4701, 1.0
        %v4958 = vsub.f32 %v4702, 1.0
        %v4959 = vsub.f32 %v4703, 1.0
        %v4960 = vsub.f32 %v4704, 1.0
        %v4961 = vsub.f32 %v4705, 1.0
        %v4962 = vsub.f32 %v4706, 1.0
        %v4963 = vsub.f32 %v4707, 1.0
        %v4964 = vsub.f32 %v4708, 1.0
        %v4965 = vsub.f32 %v4709, 1.0
        %v4966 = vsub.f32 %v4710, 1.0
        %v4967 = vsub.f32 %v4711, 1.0
        %v4968 = vsub.f32 %v4712, 1.0
        %v4969 = vsub.f32 %v4713, 1.0
        %v4970 = vsub.f32 %v4714, 1.0
        %v4971 = vsub.f32 %v4715, 1.0
        %v4972 = vsub.f32 %v4716, 1.0
        %v4973 = vsub.f32 %v4717, 1.0
        %v4974 = vsub.f32 %v4718, 1.0
        %v4975 = vsub.f32 %v4719, 1.0
        %v4976 = vsub.f32 %v4720, 1.0
        %v4977 = vsub.f32 %v4721, 1.0
        %v4978 = vsub.f32 %v4722, 1.0
        %v4979 = vsub.f32 %v4723, 1.0
        %v4980 = vsub.f32 %v4724, 1.0
        %v4981 = vsub.f32 %v4725, 1.0
        %v4982 = vsub.f32 %v4726, 1.0
        %v4983 = vsub.f32 %v4727, 1.0
        %v4984 = vsub.f32 %v4728, 1.0
        %v4985 = vsub.f32 %v4729, 1.0
        %v4986 = vsub.f32 %v4730, 1.0
        %v4987 = vsub.f32 %v4731, 1.0
        %v4988 = vsub.f32 %v4732, 1.0
        %v4989 = vsub.f32 %v4733, 1.0
        %v4990 = vsub.f32 %v4734, 1.0
        %v4991 = vsub.f32 %v4735, 1.0
        %v4992 = vsub.f32 %v4736, 1.0
        %v4993 = vsub.f32 %v4737, 1.0
        %v4994 = vsub.f32 %v4738, 1.0
        %v4995 = vsub.f32 %v4739, 1.0
        %v4996 = vsub.f32 %v4740, 1.0
        %v4997 = vmul.f32 %v4869, %v4933
        %v4998 = vmul.f32 %v4870, %v4934
        %v4999 = vmul.f32 %v4871, %v4935
        %v5000 = vmul.f32 %v4872, %v4936
        %v5001 = vmul.f32 %v4873, %v4937
        %v5002 = vmul.f32 %v4874, %v4938
        %v5003 = vmul.f32 %v4875, %v4939
        %v5004 = vmul.f32 %v4876, %v4940
        %v5005 = vmul.f32 %v4877, %v4941
        %v5006 = vmul.f32 %v4878, %v4942
        %v5007 = vmul.f32 %v4879, %v4943
        %v5008 = vmul.f32 %v4880, %v4944
        %v5009 = vmul.f32 %v4881, %v4945
        %v5010 = vmul.f32 %v4882, %v4946
        %v5011 = vmul.f32 %v4883, %v4947
        %v5012 = vmul.f32 %v4884, %v4948
        %v5013 = vmul.f32 %v4885, %v4949
        %v5014 = vmul.f32 %v4886, %v4950
        %v5015 = vmul.f32 %v4887, %v4951
        %v5016 = vmul.f32 %v4888, %v4952
        %v5017 = vmul.f32 %v4889, %v4953
        %v5018 = vmul.f32 %v4890, %v4954
        %v5019 = vmul.f32 %v4891, %v4955
        %v5020 = vmul.f32 %v4892, %v4956
        %v5021 = vmul.f32 %v4893, %v4957
        %v5022 = vmul.f32 %v4894, %v4958
        %v5023 = vmul.f32 %v4895, %v4959
        %v5024 = vmul.f32 %v4896, %v4960
        %v5025 = vmul.f32 %v4897, %v4961
        %v5026 = vmul.f32 %v4898, %v4962
        %v5027 = vmul.f32 %v4899, %v4963
        %v5028 = vmul.f32 %v4900, %v4964
        %v5029 = vmul.f32 %v4901, %v4965
        %v5030 = vmul.f32 %v4902, %v4966
        %v5031 = vmul.f32 %v4903, %v4967
        %v5032 = vmul.f32 %v4904, %v4968
        %v5033 = vmul.f32 %v4905, %v4969
        %v5034 = vmul.f32 %v4906, %v4970
        %v5035 = vmul.f32 %v4907, %v4971
        %v5036 = vmul.f32 %v4908, %v4972
        %v5037 = vmul.f32 %v4909, %v4973
        %v5038 = vmul.f32 %v4910, %v4974
        %v5039 = vmul.f32 %v4911, %v4975
        %v5040 = vmul.f32 %v4912, %v4976
        %v5041 = vmul.f32 %v4913, %v4977
        %v5042 = vmul.f32 %v4914, %v4978
        %v5043 = vmul.f32 %v4915, %v4979
        %v5044 = vmul.f32 %v4916, %v4980
        %v5045 = vmul.f32 %v4917, %v4981
        %v5046 = vmul.f32 %v4918, %v4982
        %v5047 = vmul.f32 %v4919, %v4983
        %v5048 = vmul.f32 %v4920, %v4984
        %v5049 = vmul.f32 %v4921, %v4985
        %v5050 = vmul.f32 %v4922, %v4986
        %v5051 = vmul.f32 %v4923, %v4987
        %v5052 = vmul.f32 %v4924, %v4988
        %v5053 = vmul.f32 %v4925, %v4989
        %v5054 = vmul.f32 %v4926, %v4990
        %v5055 = vmul.f32 %v4927, %v4991
        %v5056 = vmul.f32 %v4928, %v4992
        %v5057 = vmul.f32 %v4929, %v4993
        %v5058 = vmul.f32 %v4930, %v4994
        %v5059 = vmul.f32 %v4931, %v4995
        %v5060 = vmul.f32 %v4932, %v4996
        %v5061 = vadd.f32 %v4997, 0.1
        %v5062 = vadd.f32 %v4998, 0.1
        %v5063 = vadd.f32 %v4999, 0.1
        %v5064 = vadd.f32 %v5000, 0.1
        %v5065 = vadd.f32 %v5001, 0.1
        %v5066 = vadd.f32 %v5002, 0.1
        %v5067 = vadd.f32 %v5003, 0.1
        %v5068 = vadd.f32 %v5004, 0.1
        %v5069 = vadd.f32 %v5005, 0.1
        %v5070 = vadd.f32 %v5006, 0.1
        %v5071 = vadd.f32 %v5007, 0.1
        %v5072 = vadd.f32 %v5008, 0.1
        %v5073 = vadd.f32 %v5009, 0.1
        %v5074 = vadd.f32 %v5010, 0.1
        %v5075 = vadd.f32 %v5011, 0.1
        %v5076 = vadd.f32 %v5012, 0.1
        %v5077 = vadd.f32 %v5013, 0.1
        %v5078 = vadd.f32 %v5014, 0.1
        %v5079 = vadd.f32 %v5015, 0.1
        %v5080 = vadd.f32 %v5016, 0.1
        %v5081 = vadd.f32 %v5017, 0.1
        %v5082 = vadd.f32 %v5018, 0.1
        %v5083 = vadd.f32 %v5019, 0.1
        %v5084 = vadd.f32 %v5020, 0.1
        %v5085 = vadd.f32 %v5021, 0.1
        %v5086 = vadd.f32 %v5022, 0.1
        %v5087 = vadd.f32 %v5023, 0.1
        %v5088 = vadd.f32 %v5024, 0.1
        %v5089 = vadd.f32 %v5025, 0.1
        %v5090 = vadd.f32 %v5026, 0.1
        %v5091 = vadd.f32 %v5027, 0.1
        %v5092 = vadd.f32 %v5028, 0.1
        %v5093 = vadd.f32 %v5029, 0.1
        %v5094 = vadd.f32 %v5030, 0.1
        %v5095 = vadd.f32 %v5031, 0.1
        %v5096 = vadd.f32 %v5032, 0.1
        %v5097 = vadd.f32 %v5033, 0.1
        %v5098 = vadd.f32 %v5034, 0.1
        %v5099 = vadd.f32 %v5035, 0.1
        %v5100 = vadd.f32 %v5036, 0.1
        %v5101 = vadd.f32 %v5037, 0.1
        %v5102 = vadd.f32 %v5038, 0.1
        %v5103 = vadd.f32 %v5039, 0.1
        %v5104 = vadd.f32 %v5040, 0.1
        %v5105 = vadd.f32 %v5041, 0.1
        %v5106 = vadd.f32 %v5042, 0.1
        %v5107 = vadd.f32 %v5043, 0.1
        %v5108 = vadd.f32 %v5044, 0.1
        %v5109 = vadd.f32 %v5045, 0.1
        %v5110 = vadd.f32 %v5046, 0.1
        %v5111 = vadd.f32 %v5047, 0.1
        %v5112 = vadd.f32 %v5048, 0.1
        %v5113 = vadd.f32 %v5049, 0.1
        %v5114 = vadd.f32 %v5050, 0.1
        %v5115 = vadd.f32 %v5051, 0.1
        %v5116 = vadd.f32 %v5052, 0.1
        %v5117 = vadd.f32 %v5053, 0.1
        %v5118 = vadd.f32 %v5054, 0.1
        %v5119 = vadd.f32 %v5055, 0.1
        %v5120 = vadd.f32 %v5056, 0.1
        %v5121 = vadd.f32 %v5057, 0.1
        %v5122 = vadd.f32 %v5058, 0.1
        %v5123 = vadd.f32 %v5059, 0.1
        %v5124 = vadd.f32 %v5060, 0.1
        %v5125 = vld [vmem:[#allocation2] sm:$0xff]
        %v5126 = vld [vmem:[#allocation2 + $0x8] sm:$0xff]
        %v5127 = vld [vmem:[#allocation2 + $0x10] sm:$0xff]
        %v5128 = vld [vmem:[#allocation2 + $0x18] sm:$0xff]
        %v5129 = vld [vmem:[#allocation2 + $0x20] sm:$0xff]
        %v5130 = vld [vmem:[#allocation2 + $0x28] sm:$0xff]
        %v5131 = vld [vmem:[#allocation2 + $0x30] sm:$0xff]
        %v5132 = vld [vmem:[#allocation2 + $0x38] sm:$0xff]
        %v5133 = vld [vmem:[#allocation2 + $0x40] sm:$0xff]
        %v5134 = vld [vmem:[#allocation2 + $0x48] sm:$0xff]
        %v5135 = vld [vmem:[#allocation2 + $0x50] sm:$0xff]
        %v5136 = vld [vmem:[#allocation2 + $0x58] sm:$0xff]
        %v5137 = vld [vmem:[#allocation2 + $0x60] sm:$0xff]
        %v5138 = vld [vmem:[#allocation2 + $0x68] sm:$0xff]
        %v5139 = vld [vmem:[#allocation2 + $0x70] sm:$0xff]
        %v5140 = vld [vmem:[#allocation2 + $0x78] sm:$0xff]
        %v5141 = vld [vmem:[#allocation2 + $0x80] sm:$0xff]
        %v5142 = vld [vmem:[#allocation2 + $0x88] sm:$0xff]
        %v5143 = vld [vmem:[#allocation2 + $0x90] sm:$0xff]
        %v5144 = vld [vmem:[#allocation2 + $0x98] sm:$0xff]
        %v5145 = vld [vmem:[#allocation2 + $0xa0] sm:$0xff]
        %v5146 = vld [vmem:[#allocation2 + $0xa8] sm:$0xff]
        %v5147 = vld [vmem:[#allocation2 + $0xb0] sm:$0xff]
        %v5148 = vld [vmem:[#allocation2 + $0xb8] sm:$0xff]
        %v5149 = vld [vmem:[#allocation2 + $0xc0] sm:$0xff]
        %v5150 = vld [vmem:[#allocation2 + $0xc8] sm:$0xff]
        %v5151 = vld [vmem:[#allocation2 + $0xd0] sm:$0xff]
        %v5152 = vld [vmem:[#allocation2 + $0xd8] sm:$0xff]
        %v5153 = vld [vmem:[#allocation2 + $0xe0] sm:$0xff]
        %v5154 = vld [vmem:[#allocation2 + $0xe8] sm:$0xff]
        %v5155 = vld [vmem:[#allocation2 + $0xf0] sm:$0xff]
        %v5156 = vld [vmem:[#allocation2 + $0xf8] sm:$0xff]
        %v5157 = vld [vmem:[#allocation2 + $0x100] sm:$0xff]
        %v5158 = vld [vmem:[#allocation2 + $0x108] sm:$0xff]
        %v5159 = vld [vmem:[#allocation2 + $0x110] sm:$0xff]
        %v5160 = vld [vmem:[#allocation2 + $0x118] sm:$0xff]
        %v5161 = vld [vmem:[#allocation2 + $0x120] sm:$0xff]
        %v5162 = vld [vmem:[#allocation2 + $0x128] sm:$0xff]
        %v5163 = vld [vmem:[#allocation2 + $0x130] sm:$0xff]
        %v5164 = vld [vmem:[#allocation2 + $0x138] sm:$0xff]
        %v5165 = vld [vmem:[#allocation2 + $0x140] sm:$0xff]
        %v5166 = vld [vmem:[#allocation2 + $0x148] sm:$0xff]
        %v5167 = vld [vmem:[#allocation2 + $0x150] sm:$0xff]
        %v5168 = vld [vmem:[#allocation2 + $0x158] sm:$0xff]
        %v5169 = vld [vmem:[#allocation2 + $0x160] sm:$0xff]
        %v5170 = vld [vmem:[#allocation2 + $0x168] sm:$0xff]
        %v5171 = vld [vmem:[#allocation2 + $0x170] sm:$0xff]
        %v5172 = vld [vmem:[#allocation2 + $0x178] sm:$0xff]
        %v5173 = vld [vmem:[#allocation2 + $0x180] sm:$0xff]
        %v5174 = vld [vmem:[#allocation2 + $0x188] sm:$0xff]
        %v5175 = vld [vmem:[#allocation2 + $0x190] sm:$0xff]
        %v5176 = vld [vmem:[#allocation2 + $0x198] sm:$0xff]
        %v5177 = vld [vmem:[#allocation2 + $0x1a0] sm:$0xff]
        %v5178 = vld [vmem:[#allocation2 + $0x1a8] sm:$0xff]
        %v5179 = vld [vmem:[#allocation2 + $0x1b0] sm:$0xff]
        %v5180 = vld [vmem:[#allocation2 + $0x1b8] sm:$0xff]
        %v5181 = vld [vmem:[#allocation2 + $0x1c0] sm:$0xff]
        %v5182 = vld [vmem:[#allocation2 + $0x1c8] sm:$0xff]
        %v5183 = vld [vmem:[#allocation2 + $0x1d0] sm:$0xff]
        %v5184 = vld [vmem:[#allocation2 + $0x1d8] sm:$0xff]
        %v5185 = vld [vmem:[#allocation2 + $0x1e0] sm:$0xff]
        %v5186 = vld [vmem:[#allocation2 + $0x1e8] sm:$0xff]
        %v5187 = vld [vmem:[#allocation2 + $0x1f0] sm:$0xff]
        %v5188 = vld [vmem:[#allocation2 + $0x1f8] sm:$0xff]
        %v5189 = vmul.f32 %v4677, %v5125
        %v5190 = vmul.f32 %v4678, %v5126
        %v5191 = vmul.f32 %v4679, %v5127
        %v5192 = vmul.f32 %v4680, %v5128
        %v5193 = vmul.f32 %v4681, %v5129
        %v5194 = vmul.f32 %v4682, %v5130
        %v5195 = vmul.f32 %v4683, %v5131
        %v5196 = vmul.f32 %v4684, %v5132
        %v5197 = vmul.f32 %v4685, %v5133
        %v5198 = vmul.f32 %v4686, %v5134
        %v5199 = vmul.f32 %v4687, %v5135
        %v5200 = vmul.f32 %v4688, %v5136
        %v5201 = vmul.f32 %v4689, %v5137
        %v5202 = vmul.f32 %v4690, %v5138
        %v5203 = vmul.f32 %v4691, %v5139
        %v5204 = vmul.f32 %v4692, %v5140
        %v5205 = vmul.f32 %v4693, %v5141
        %v5206 = vmul.f32 %v4694, %v5142
        %v5207 = vmul.f32 %v4695, %v5143
        %v5208 = vmul.f32 %v4696, %v5144
        %v5209 = vmul.f32 %v4697, %v5145
        %v5210 = vmul.f32 %v4698, %v5146
        %v5211 = vmul.f32 %v4699, %v5147
        %v5212 = vmul.f32 %v4700, %v5148
        %v5213 = vmul.f32 %v4701, %v5149
        %v5214 = vmul.f32 %v4702, %v5150
        %v5215 = vmul.f32 %v4703, %v5151
        %v5216 = vmul.f32 %v4704, %v5152
        %v5217 = vmul.f32 %v4705, %v5153
        %v5218 = vmul.f32 %v4706, %v5154
        %v5219 = vmul.f32 %v4707, %v5155
        %v5220 = vmul.f32 %v4708, %v5156
        %v5221 = vmul.f32 %v4709, %v5157
        %v5222 = vmul.f32 %v4710, %v5158
        %v5223 = vmul.f32 %v4711, %v5159
        %v5224 = vmul.f32 %v4712, %v5160
        %v5225 = vmul.f32 %v4713, %v5161
        %v5226 = vmul.f32 %v4714, %v5162
        %v5227 = vmul.f32 %v4715, %v5163
        %v5228 = vmul.f32 %v4716, %v5164
        %v5229 = vmul.f32 %v4717, %v5165
        %v5230 = vmul.f32 %v4718, %v5166
        %v5231 = vmul.f32 %v4719, %v5167
        %v5232 = vmul.f32 %v4720, %v5168
        %v5233 = vmul.f32 %v4721, %v5169
        %v5234 = vmul.f32 %v4722, %v5170
        %v5235 = vmul.f32 %v4723, %v5171
        %v5236 = vmul.f32 %v4724, %v5172
        %v5237 = vmul.f32 %v4725, %v5173
        %v5238 = vmul.f32 %v4726, %v5174
        %v5239 = vmul.f32 %v4727, %v5175
        %v5240 = vmul.f32 %v4728, %v5176
        %v5241 = vmul.f32 %v4729, %v5177
        %v5242 = vmul.f32 %v4730, %v5178
        %v5243 = vmul.f32 %v4731, %v5179
        %v5244 = vmul.f32 %v4732, %v5180
        %v5245 = vmul.f32 %v4733, %v5181
        %v5246 = vmul.f32 %v4734, %v5182
        %v5247 = vmul.f32 %v4735, %v5183
        %v5248 = vmul.f32 %v4736, %v5184
        %v5249 = vmul.f32 %v4737, %v5185
        %v5250 = vmul.f32 %v4738, %v5186
        %v5251 = vmul.f32 %v4739, %v5187
        %v5252 = vmul.f32 %v4740, %v5188
        %v5253 = vadd.f32 %v5061, %v5189
        %v5254 = vadd.f32 %v5062, %v5190
        %v5255 = vadd.f32 %v5063, %v5191
        %v5256 = vadd.f32 %v5064, %v5192
        %v5257 = vadd.f32 %v5065, %v5193
        %v5258 = vadd.f32 %v5066, %v5194
        %v5259 = vadd.f32 %v5067, %v5195
        %v5260 = vadd.f32 %v5068, %v5196
        %v5261 = vadd.f32 %v5069, %v5197
        %v5262 = vadd.f32 %v5070, %v5198
        %v5263 = vadd.f32 %v5071, %v5199
        %v5264 = vadd.f32 %v5072, %v5200
        %v5265 = vadd.f32 %v5073, %v5201
        %v5266 = vadd.f32 %v5074, %v5202
        %v5267 = vadd.f32 %v5075, %v5203
        %v5268 = vadd.f32 %v5076, %v5204
        %v5269 = vadd.f32 %v5077, %v5205
        %v5270 = vadd.f32 %v5078, %v5206
        %v5271 = vadd.f32 %v5079, %v5207
        %v5272 = vadd.f32 %v5080, %v5208
        %v5273 = vadd.f32 %v5081, %v5209
        %v5274 = vadd.f32 %v5082, %v5210
        %v5275 = vadd.f32 %v5083, %v5211
        %v5276 = vadd.f32 %v5084, %v5212
        %v5277 = vadd.f32 %v5085, %v5213
        %v5278 = vadd.f32 %v5086, %v5214
        %v5279 = vadd.f32 %v5087, %v5215
        %v5280 = vadd.f32 %v5088, %v5216
        %v5281 = vadd.f32 %v5089, %v5217
        %v5282 = vadd.f32 %v5090, %v5218
        %v5283 = vadd.f32 %v5091, %v5219
        %v5284 = vadd.f32 %v5092, %v5220
        %v5285 = vadd.f32 %v5093, %v5221
        %v5286 = vadd.f32 %v5094, %v5222
        %v5287 = vadd.f32 %v5095, %v5223
        %v5288 = vadd.f32 %v5096, %v5224
        %v5289 = vadd.f32 %v5097, %v5225
        %v5290 = vadd.f32 %v5098, %v5226
        %v5291 = vadd.f32 %v5099, %v5227
        %v5292 = vadd.f32 %v5100, %v5228
        %v5293 = vadd.f32 %v5101, %v5229
        %v5294 = vadd.f32 %v5102, %v5230
        %v5295 = vadd.f32 %v5103, %v5231
        %v5296 = vadd.f32 %v5104, %v5232
        %v5297 = vadd.f32 %v5105, %v5233
        %v5298 = vadd.f32 %v5106, %v5234
        %v5299 = vadd.f32 %v5107, %v5235
        %v5300 = vadd.f32 %v5108, %v5236
        %v5301 = vadd.f32 %v5109, %v5237
        %v5302 = vadd.f32 %v5110, %v5238
        %v5303 = vadd.f32 %v5111, %v5239
        %v5304 = vadd.f32 %v5112, %v5240
        %v5305 = vadd.f32 %v5113, %v5241
        %v5306 = vadd.f32 %v5114, %v5242
        %v5307 = vadd.f32 %v5115, %v5243
        %v5308 = vadd.f32 %v5116, %v5244
        %v5309 = vadd.f32 %v5117, %v5245
        %v5310 = vadd.f32 %v5118, %v5246
        %v5311 = vadd.f32 %v5119, %v5247
        %v5312 = vadd.f32 %v5120, %v5248
        %v5313 = vadd.f32 %v5121, %v5249
        %v5314 = vadd.f32 %v5122, %v5250
        %v5315 = vadd.f32 %v5123, %v5251
        %v5316 = vadd.f32 %v5124, %v5252
        %5317 = vst.msk [vmem:[%s244] sm:$0xff] %vm4609, %v5253
        %5318 = vst.msk [vmem:[%s244 + $0x8] sm:$0xff] %vm4609, %v5254
        %5319 = vst.msk [vmem:[%s244 + $0x10] sm:$0xff] %vm4609, %v5255
        %5320 = vst.msk [vmem:[%s244 + $0x18] sm:$0xff] %vm4609, %v5256
        %5321 = vst.msk [vmem:[%s244 + $0x20] sm:$0xff] %vm4609, %v5257
        %5322 = vst.msk [vmem:[%s244 + $0x28] sm:$0xff] %vm4609, %v5258
        %5323 = vst.msk [vmem:[%s244 + $0x30] sm:$0xff] %vm4609, %v5259
        %5324 = vst.msk [vmem:[%s244 + $0x38] sm:$0xff] %vm4609, %v5260
        %5325 = vst.msk [vmem:[%s244 + $0x40] sm:$0xff] %vm4609, %v5261
        %5326 = vst.msk [vmem:[%s244 + $0x48] sm:$0xff] %vm4609, %v5262
        %5327 = vst.msk [vmem:[%s244 + $0x50] sm:$0xff] %vm4609, %v5263
        %5328 = vst.msk [vmem:[%s244 + $0x58] sm:$0xff] %vm4609, %v5264
        %5329 = vst.msk [vmem:[%s244 + $0x60] sm:$0xff] %vm4609, %v5265
        %5330 = vst.msk [vmem:[%s244 + $0x68] sm:$0xff] %vm4609, %v5266
        %5331 = vst.msk [vmem:[%s244 + $0x70] sm:$0xff] %vm4609, %v5267
        %5332 = vst.msk [vmem:[%s244 + $0x78] sm:$0xff] %vm4609, %v5268
        %5333 = vst.msk [vmem:[%s244 + $0x80] sm:$0xff] %vm4609, %v5269
        %5334 = vst.msk [vmem:[%s244 + $0x88] sm:$0xff] %vm4609, %v5270
        %5335 = vst.msk [vmem:[%s244 + $0x90] sm:$0xff] %vm4609, %v5271
        %5336 = vst.msk [vmem:[%s244 + $0x98] sm:$0xff] %vm4609, %v5272
        %5337 = vst.msk [vmem:[%s244 + $0xa0] sm:$0xff] %vm4609, %v5273
        %5338 = vst.msk [vmem:[%s244 + $0xa8] sm:$0xff] %vm4609, %v5274
        %5339 = vst.msk [vmem:[%s244 + $0xb0] sm:$0xff] %vm4609, %v5275
        %5340 = vst.msk [vmem:[%s244 + $0xb8] sm:$0xff] %vm4609, %v5276
        %5341 = vst.msk [vmem:[%s244 + $0xc0] sm:$0xff] %vm4609, %v5277
        %5342 = vst.msk [vmem:[%s244 + $0xc8] sm:$0xff] %vm4609, %v5278
        %5343 = vst.msk [vmem:[%s244 + $0xd0] sm:$0xff] %vm4609, %v5279
        %5344 = vst.msk [vmem:[%s244 + $0xd8] sm:$0xff] %vm4609, %v5280
        %5345 = vst.msk [vmem:[%s244 + $0xe0] sm:$0xff] %vm4609, %v5281
        %5346 = vst.msk [vmem:[%s244 + $0xe8] sm:$0xff] %vm4609, %v5282
        %5347 = vst.msk [vmem:[%s244 + $0xf0] sm:$0xff] %vm4609, %v5283
        %5348 = vst.msk [vmem:[%s244 + $0xf8] sm:$0xff] %vm4609, %v5284
        %5349 = vst.msk [vmem:[%s244 + $0x100] sm:$0xff] %vm4609, %v5285
        %5350 = vst.msk [vmem:[%s244 + $0x108] sm:$0xff] %vm4609, %v5286
        %5351 = vst.msk [vmem:[%s244 + $0x110] sm:$0xff] %vm4609, %v5287
        %5352 = vst.msk [vmem:[%s244 + $0x118] sm:$0xff] %vm4609, %v5288
        %5353 = vst.msk [vmem:[%s244 + $0x120] sm:$0xff] %vm4609, %v5289
        %5354 = vst.msk [vmem:[%s244 + $0x128] sm:$0xff] %vm4609, %v5290
        %5355 = vst.msk [vmem:[%s244 + $0x130] sm:$0xff] %vm4609, %v5291
        %5356 = vst.msk [vmem:[%s244 + $0x138] sm:$0xff] %vm4609, %v5292
        %5357 = vst.msk [vmem:[%s244 + $0x140] sm:$0xff] %vm4609, %v5293
        %5358 = vst.msk [vmem:[%s244 + $0x148] sm:$0xff] %vm4609, %v5294
        %5359 = vst.msk [vmem:[%s244 + $0x150] sm:$0xff] %vm4609, %v5295
        %5360 = vst.msk [vmem:[%s244 + $0x158] sm:$0xff] %vm4609, %v5296
        %5361 = vst.msk [vmem:[%s244 + $0x160] sm:$0xff] %vm4609, %v5297
        %5362 = vst.msk [vmem:[%s244 + $0x168] sm:$0xff] %vm4609, %v5298
        %5363 = vst.msk [vmem:[%s244 + $0x170] sm:$0xff] %vm4609, %v5299
        %5364 = vst.msk [vmem:[%s244 + $0x178] sm:$0xff] %vm4609, %v5300
        %5365 = vst.msk [vmem:[%s244 + $0x180] sm:$0xff] %vm4609, %v5301
        %5366 = vst.msk [vmem:[%s244 + $0x188] sm:$0xff] %vm4609, %v5302
        %5367 = vst.msk [vmem:[%s244 + $0x190] sm:$0xff] %vm4609, %v5303
        %5368 = vst.msk [vmem:[%s244 + $0x198] sm:$0xff] %vm4609, %v5304
        %5369 = vst.msk [vmem:[%s244 + $0x1a0] sm:$0xff] %vm4609, %v5305
        %5370 = vst.msk [vmem:[%s244 + $0x1a8] sm:$0xff] %vm4609, %v5306
        %5371 = vst.msk [vmem:[%s244 + $0x1b0] sm:$0xff] %vm4609, %v5307
        %5372 = vst.msk [vmem:[%s244 + $0x1b8] sm:$0xff] %vm4609, %v5308
        %5373 = vst.msk [vmem:[%s244 + $0x1c0] sm:$0xff] %vm4609, %v5309
        %5374 = vst.msk [vmem:[%s244 + $0x1c8] sm:$0xff] %vm4609, %v5310
        %5375 = vst.msk [vmem:[%s244 + $0x1d0] sm:$0xff] %vm4609, %v5311
        %5376 = vst.msk [vmem:[%s244 + $0x1d8] sm:$0xff] %vm4609, %v5312
        %5377 = vst.msk [vmem:[%s244 + $0x1e0] sm:$0xff] %vm4609, %v5313
        %5378 = vst.msk [vmem:[%s244 + $0x1e8] sm:$0xff] %vm4609, %v5314
        %5379 = vst.msk [vmem:[%s244 + $0x1f0] sm:$0xff] %vm4609, %v5315
        %5380 = vst.msk [vmem:[%s244 + $0x1f8] sm:$0xff] %vm4609, %v5316
      $region40: #{tpu_custom_call.1} parent=31 // pred_fallthru
        _
      %s5381 = smul.u32 64, %s18
      %p5382 = scmp.lt.s32.totalorder %s5381, 319
      %s5383 = scalar_select %p5382, %s5381, 319
      %s5384 = smul.addr %s5383, 8
      %s5385 = scalar_lea.vmem %s3, %s5384
      // Predicated region
      $region41: #{tpu_custom_call.1} parent=31 // pred_check
        %p5386 = pneg %p124
      $region42: #{tpu_custom_call.1} parent=31 // pred_check_branch
        %5388 = sbr.rel (%p5386) target = $region44
      $region43: #{tpu_custom_call.1} parent=31 // pred_region
        %s5389 = smul.u32 64, %s18
      $region44: #{tpu_custom_call.1} parent=31 // pred_fallthru
        _
    $region32: #{tpu_custom_call.1} parent=5 // pred_fallthru
      _
    %p5390 = scmp.le.s32.totalorder 2, %s9
    // Predicated region
    $region45: #{tpu_custom_call.1} parent=5 // pred_check
      %p5391 = pneg %p5390
    $region46: #{tpu_custom_call.1} parent=5 // pred_check_branch
      %5393 = sbr.rel (%p5391) target = $region48
    $region47: #{tpu_custom_call.1} parent=5 // pred_region
      %s5394 = ssub.s32 %s9, 2
      // Predicated region
      $region49: #{tpu_custom_call.1} parent=47 // pred_check
        %p5395 = pneg %p130
      $region50: #{tpu_custom_call.1} parent=47 // pred_check_branch
        %5397 = sbr.rel (%p5395) target = $region52
      $region51: #{tpu_custom_call.1} parent=47 // pred_region
        %s5398 = smul.u32 64, %s20
        %p5399 = scmp.lt.s32.totalorder %s5398, 319
        %s5400 = scalar_select %p5399, %s5398, 319
        %s5401 = smul.addr %s5400, 8
        %s5402 = scalar_lea.vmem %s3, %s5401
      $region52: #{tpu_custom_call.1} parent=47 // pred_fallthru
        _
    $region48: #{tpu_custom_call.1} parent=5 // pred_fallthru
      _
  $region6: #{tpu_custom_call.1} parent=0 // loop_footer
    %s13 = sadd.s32 1, %s9
  $region7: #{tpu_custom_call.1} parent=0 // loop_footer_branch
    %8 = sbr.rel target = $region3
  $region8: #{tpu_custom_call.1} parent=0 // loop_exit
    _

</llo_original>
